<compile_context>
chip_gen: v6e
topology: v6e:2x2x1
jax: 0.10.0
libtpu: 0.0.40
codegen_flags: <defaults>
</compile_context>

<pallas_src>
import math

import jax
import jax.numpy as jnp
from jax.experimental import pallas as pl
from jax.experimental.pallas import tpu as pltpu

# ---- small, module-consistent configuration (embed_dim % num_heads == 0, mlp_ratio=4) ----
EMBED_DIM = 128
NUM_HEADS = 4
HEAD_DIM = EMBED_DIM // NUM_HEADS
MLP_HIDDEN = int(EMBED_DIM * 4.0)
DEPTH = 2
SEQ = 8
BATCH = 2
SCALE = HEAD_DIM ** -0.5          # qk_scale=None -> head_dim ** -0.5
LN_EPS = 1e-5

PARAMS_PER_BLOCK = 11             # ln1(w,b), qkv_w, proj(w,b), ln2(w,b), fc1(w,b), fc2(w,b)
_MATMUL_W_IDX = (2, 3, 7, 9)      # which per-block params are MXU weights (stored bf16)


# --------------------------- in-kernel math helpers (all f32) ---------------------------
def _layer_norm(x, w, b):
    # PyTorch nn.LayerNorm over last dim, biased variance, eps inside rsqrt.
    mu = jnp.mean(x, axis=-1, keepdims=True)
    var = jnp.mean(jnp.square(x - mu), axis=-1, keepdims=True)
    return (x - mu) * jax.lax.rsqrt(var + LN_EPS) * w + b


def _erf(x):
    # Abramowitz & Stegun 7.1.26 rational approximation (max abs err ~1.5e-7; exact at fp32).
    p = 0.3275911
    a1, a2, a3, a4, a5 = 0.254829592, -0.284496736, 1.421413741, -1.453152027, 1.061405429
    ax = jnp.abs(x)
    t = 1.0 / (1.0 + p * ax)
    poly = ((((a5 * t + a4) * t + a3) * t + a2) * t + a1) * t
    y = 1.0 - poly * jnp.exp(-ax * ax)
    return jnp.where(x >= 0.0, y, -y)


def _gelu(x):
    # Exact (erf-based) GELU, matching torch.nn.GELU default.
    return 0.5 * x * (1.0 + _erf(x * 0.7071067811865476))


# --------------------------- fused Pallas kernel ---------------------------
def decoder_kernel(*refs):
    """refs = [x, (11 params per block) * n_blocks, final_norm_w, final_norm_b, out]."""
    x_ref, o_ref = refs[0], refs[-1]
    prm = refs[1:-1]
    n_blocks = (len(prm) - 2) // PARAMS_PER_BLOCK

    B, N, D = x_ref.shape
    T = B * N
    H, Dh = NUM_HEADS, HEAD_DIM

    # Residual stream: batch folded into rows, kept in f32, resident for the whole call.
    x = x_ref[...].reshape(T, D)

    for blk in range(n_blocks):
        p = prm[blk * PARAMS_PER_BLOCK:(blk + 1) * PARAMS_PER_BLOCK]
        ln1w, ln1b = p[0][...], p[1][...]
        qkvw = p[2][...]                      # (D, 3D)  bf16
        projw, projb = p[3][...], p[4][...]   # (D, D) bf16, (1, D) f32
        ln2w, ln2b = p[5][...], p[6][...]
        fc1w, fc1b = p[7][...], p[8][...]     # (D, 4D) bf16, (1, 4D) f32
        fc2w, fc2b = p[9][...], p[10][...]    # (4D, D) bf16, (1, D) f32

        # ------------------ attention branch ------------------
        h = _layer_norm(x, ln1w, ln1b).astype(jnp.bfloat16)            # (T, D)
        # qkv (no bias); weight slices are 128-lane aligned.
        q = jnp.dot(h, qkvw[:, :D], preferred_element_type=jnp.float32)
        k = jnp.dot(h, qkvw[:, D:2 * D], preferred_element_type=jnp.float32)
        v = jnp.dot(h, qkvw[:, 2 * D:], preferred_element_type=jnp.float32)
        q = q.astype(jnp.bfloat16).reshape(B, N, D)
        k = k.astype(jnp.bfloat16).reshape(B, N, D)
        v = v.astype(jnp.bfloat16).reshape(B, N, D)

        attn = jnp.zeros((T, D), jnp.float32)
        for hh in range(H):                                            # static unroll (4)
            sl = slice(hh * Dh, (hh + 1) * Dh)
            qh, kh, vh = q[:, :, sl], k[:, :, sl], v[:, :, sl]         # (B, N, Dh)
            # scores batched over the batch axis; MXU absorbs the K "transpose".
            s = jnp.einsum('bqd,bkd->bqk', qh, kh,
                           preferred_element_type=jnp.float32) * SCALE  # (B, N, N) f32
            s = s - jnp.max(s, axis=-1, keepdims=True)
            e = jnp.exp(s)
            pr = e * pl.reciprocal(jnp.sum(e, axis=-1, keepdims=True), approx=True)
            ctx = jnp.einsum('bqk,bkd->bqd', pr.astype(jnp.bfloat16), vh,
                             preferred_element_type=jnp.float32)        # (B, N, Dh)
            # Accumulate projection per head block == concat(heads) @ projw, without concat.
            attn = attn + jnp.dot(ctx.reshape(T, Dh).astype(jnp.bfloat16),
                                  projw[sl, :], preferred_element_type=jnp.float32)
        x = x + attn + projb            # drop_path / dropout = identity in eval

        # ------------------ MLP branch ------------------
        h2 = _layer_norm(x, ln2w, ln2b).astype(jnp.bfloat16)
        m = jnp.dot(h2, fc1w, preferred_element_type=jnp.float32) + fc1b
        m = _gelu(m)                                                    # f32 elementwise
        m = jnp.dot(m.astype(jnp.bfloat16), fc2w, preferred_element_type=jnp.float32) + fc2b
        x = x + m

    # ------------------ final LayerNorm (head = Identity) ------------------
    nw, nb = prm[-2][...], prm[-1][...]
    o_ref[...] = _layer_norm(x, nw, nb).reshape(B, N, D)


# --------------------------- wrapper ---------------------------
def _flatten_params(block_params, final_params):
    flat = []
    for p in block_params:
        for i, a in enumerate(p):
            flat.append(a.astype(jnp.bfloat16) if i in _MATMUL_W_IDX else a.astype(jnp.float32))
    flat.extend(a.astype(jnp.float32) for a in final_params)
    return tuple(flat)


@jax.jit
def _decoder_fused(x, flat_params):
    # No grid: a single program; every operand (x + all weights, ~1 MiB) lives in VMEM.
    return pl.pallas_call(
        decoder_kernel,
        out_shape=jax.ShapeDtypeStruct(x.shape, jnp.float32),
        compiler_params=pltpu.CompilerParams(vmem_limit_bytes=32 * 1024 * 1024),
    )(x, *flat_params)


def transformer_decoder_2(x, block_params, final_params, return_token_num=None):
    # return_token_num accepted for signature fidelity; the reference forward ignores it
    # (it normalizes x[:, :], i.e. every token).
    del return_token_num
    return _decoder_fused(x, _flatten_params(block_params, final_params))


# --------------------------- pure-JAX fp32 reference (for validation) ---------------------------
def _reference_forward(x, block_params, final_params):
    B, N, D = x.shape

    def ln(v, w, b):
        mu = jnp.mean(v, axis=-1, keepdims=True)
        var = jnp.mean(jnp.square(v - mu), axis=-1, keepdims=True)
        return (v - mu) * jax.lax.rsqrt(var + LN_EPS) * w.reshape(-1) + b.reshape(-1)

    for (ln1w, ln1b, qkvw, projw, projb,
         ln2w, ln2b, fc1w, fc1b, fc2w, fc2b) in block_params:
        h = ln(x, ln1w, ln1b)
        qkv = h @ qkvw
        q, k, v = qkv[..., :D], qkv[..., D:2 * D], qkv[..., 2 * D:]
        q = q.reshape(B, N, NUM_HEADS, HEAD_DIM).transpose(0, 2, 1, 3)
        k = k.reshape(B, N, NUM_HEADS, HEAD_DIM).transpose(0, 2, 1, 3)
        v = v.reshape(B, N, NUM_HEADS, HEAD_DIM).transpose(0, 2, 1, 3)
        s = jnp.einsum('bhqd,bhkd->bhqk', q, k) * SCALE
        p = jax.nn.softmax(s, axis=-1)
        ctx = jnp.einsum('bhqk,bhkd->bhqd', p, v).transpose(0, 2, 1, 3).reshape(B, N, D)
        x = x + ctx @ projw + projb.reshape(-1)
        h2 = ln(x, ln2w, ln2b)
        m = jax.nn.gelu(h2 @ fc1w + fc1b.reshape(-1), approximate=False)
        x = x + m @ fc2w + fc2b.reshape(-1)
    return ln(x, final_params[0], final_params[1])


# --------------------------- deterministic parameter init ---------------------------
def _xavier_uniform(key, fan_in, fan_out):
    limit = math.sqrt(6.0 / (fan_in + fan_out))
    return jax.random.uniform(key, (fan_in, fan_out), jnp.float32, -limit, limit)


def init_params(key):
    block_params = []
    for _ in range(DEPTH):
        key, k_qkv, k_proj, k_fc1, k_fc2 = jax.random.split(key, 5)
        block_params.append([
            jnp.ones((1, EMBED_DIM), jnp.float32),                 # ln1 weight
            jnp.zeros((1, EMBED_DIM), jnp.float32),                # ln1 bias
            _xavier_uniform(k_qkv, EMBED_DIM, 3 * EMBED_DIM),      # qkv weight (no bias)
            _xavier_uniform(k_proj, EMBED_DIM, EMBED_DIM),         # proj weight
            jnp.zeros((1, EMBED_DIM), jnp.float32),                # proj bias
            jnp.ones((1, EMBED_DIM), jnp.float32),                 # ln2 weight
            jnp.zeros((1, EMBED_DIM), jnp.float32),                # ln2 bias
            _xavier_uniform(k_fc1, EMBED_DIM, MLP_HIDDEN),         # mlp fc1 weight
            jnp.zeros((1, MLP_HIDDEN), jnp.float32),               # mlp fc1 bias
            _xavier_uniform(k_fc2, MLP_HIDDEN, EMBED_DIM),         # mlp fc2 weight
            jnp.zeros((1, EMBED_DIM), jnp.float32),                # mlp fc2 bias
        ])
    final_params = [jnp.ones((1, EMBED_DIM), jnp.float32),         # final norm weight
                    jnp.zeros((1, EMBED_DIM), jnp.float32)]        # final norm bias
    return block_params, final_params


if __name__ == "__main__":
    key = jax.random.PRNGKey(0)
    kx, kp = jax.random.split(key)
    x = jax.random.normal(kx, (BATCH, SEQ, EMBED_DIM), jnp.float32)
    block_params, final_params = init_params(kp)

    out = transformer_decoder_2(x, block_params, final_params, return_token_num=SEQ)
    out = jax.block_until_ready(out)

    assert out.shape == (BATCH, SEQ, EMBED_DIM), out.shape
    assert bool(jnp.all(jnp.isfinite(out)))

    # bf16 MXU operands (f32 accumulation) vs. fp32 reference -> small, bounded drift.
    ref = _reference_forward(x, block_params, final_params)
    max_err = float(jnp.max(jnp.abs(out - ref)))
    assert max_err < 0.15, f"max abs err vs fp32 reference: {max_err}"
    print("KERNEL_OK")
</pallas_src>

<mosaic_0001>
module attributes {stable_mosaic.version = 11 : i64} {
  func.func @decoder_kernel(%arg0: memref<2x8x128xf32, #tpu.memory_space<vmem>>, %arg1: memref<1x128xf32, #tpu.memory_space<vmem>>, %arg2: memref<1x128xf32, #tpu.memory_space<vmem>>, %arg3: memref<128x384xbf16, #tpu.memory_space<vmem>>, %arg4: memref<128x128xbf16, #tpu.memory_space<vmem>>, %arg5: memref<1x128xf32, #tpu.memory_space<vmem>>, %arg6: memref<1x128xf32, #tpu.memory_space<vmem>>, %arg7: memref<1x128xf32, #tpu.memory_space<vmem>>, %arg8: memref<128x512xbf16, #tpu.memory_space<vmem>>, %arg9: memref<1x512xf32, #tpu.memory_space<vmem>>, %arg10: memref<512x128xbf16, #tpu.memory_space<vmem>>, %arg11: memref<1x128xf32, #tpu.memory_space<vmem>>, %arg12: memref<1x128xf32, #tpu.memory_space<vmem>>, %arg13: memref<1x128xf32, #tpu.memory_space<vmem>>, %arg14: memref<128x384xbf16, #tpu.memory_space<vmem>>, %arg15: memref<128x128xbf16, #tpu.memory_space<vmem>>, %arg16: memref<1x128xf32, #tpu.memory_space<vmem>>, %arg17: memref<1x128xf32, #tpu.memory_space<vmem>>, %arg18: memref<1x128xf32, #tpu.memory_space<vmem>>, %arg19: memref<128x512xbf16, #tpu.memory_space<vmem>>, %arg20: memref<1x512xf32, #tpu.memory_space<vmem>>, %arg21: memref<512x128xbf16, #tpu.memory_space<vmem>>, %arg22: memref<1x128xf32, #tpu.memory_space<vmem>>, %arg23: memref<1x128xf32, #tpu.memory_space<vmem>>, %arg24: memref<1x128xf32, #tpu.memory_space<vmem>>, %arg25: memref<2x8x128xf32, #tpu.memory_space<vmem>>) attributes {dimension_semantics = [], scalar_prefetch = 0 : i64, scratch_operands = 0 : i64, tpu.core_type = #tpu.core_type<tc>} {
    %c0 = arith.constant 0 : index
    %c0_0 = arith.constant 0 : index
    %c0_1 = arith.constant 0 : index
    %0 = vector.load %arg0[%c0, %c0_0, %c0_1] : memref<2x8x128xf32, #tpu.memory_space<vmem>>, vector<2x8x128xf32>
    %1 = vector.shape_cast %0 : vector<2x8x128xf32> to vector<16x128xf32>
    %c0_2 = arith.constant 0 : index
    %c0_3 = arith.constant 0 : index
    %2 = vector.load %arg1[%c0_2, %c0_3] : memref<1x128xf32, #tpu.memory_space<vmem>>, vector<1x128xf32>
    %c0_4 = arith.constant 0 : index
    %c0_5 = arith.constant 0 : index
    %3 = vector.load %arg2[%c0_4, %c0_5] : memref<1x128xf32, #tpu.memory_space<vmem>>, vector<1x128xf32>
    %c0_6 = arith.constant 0 : index
    %c0_7 = arith.constant 0 : index
    %4 = vector.load %arg3[%c0_6, %c0_7] : memref<128x384xbf16, #tpu.memory_space<vmem>>, vector<128x384xbf16>
    %c0_8 = arith.constant 0 : index
    %c0_9 = arith.constant 0 : index
    %5 = vector.load %arg4[%c0_8, %c0_9] : memref<128x128xbf16, #tpu.memory_space<vmem>>, vector<128x128xbf16>
    %c0_10 = arith.constant 0 : index
    %c0_11 = arith.constant 0 : index
    %6 = vector.load %arg5[%c0_10, %c0_11] : memref<1x128xf32, #tpu.memory_space<vmem>>, vector<1x128xf32>
    %c0_12 = arith.constant 0 : index
    %c0_13 = arith.constant 0 : index
    %7 = vector.load %arg6[%c0_12, %c0_13] : memref<1x128xf32, #tpu.memory_space<vmem>>, vector<1x128xf32>
    %c0_14 = arith.constant 0 : index
    %c0_15 = arith.constant 0 : index
    %8 = vector.load %arg7[%c0_14, %c0_15] : memref<1x128xf32, #tpu.memory_space<vmem>>, vector<1x128xf32>
    %c0_16 = arith.constant 0 : index
    %c0_17 = arith.constant 0 : index
    %9 = vector.load %arg8[%c0_16, %c0_17] : memref<128x512xbf16, #tpu.memory_space<vmem>>, vector<128x512xbf16>
    %c0_18 = arith.constant 0 : index
    %c0_19 = arith.constant 0 : index
    %10 = vector.load %arg9[%c0_18, %c0_19] : memref<1x512xf32, #tpu.memory_space<vmem>>, vector<1x512xf32>
    %c0_20 = arith.constant 0 : index
    %c0_21 = arith.constant 0 : index
    %11 = vector.load %arg10[%c0_20, %c0_21] : memref<512x128xbf16, #tpu.memory_space<vmem>>, vector<512x128xbf16>
    %c0_22 = arith.constant 0 : index
    %c0_23 = arith.constant 0 : index
    %12 = vector.load %arg11[%c0_22, %c0_23] : memref<1x128xf32, #tpu.memory_space<vmem>>, vector<1x128xf32>
    %cst = arith.constant dense<0.000000e+00> : vector<16xf32>
    %13 = vector.multi_reduction <add>, %1, %cst [1] : vector<16x128xf32> to vector<16xf32>
    %14 = vector.shape_cast %13 : vector<16xf32> to vector<16x1xf32>
    %cst_24 = arith.constant 1.280000e+02 : f32
    %15 = vector.broadcast %cst_24 : f32 to vector<16x1xf32>
    %16 = arith.divf %14, %15 : vector<16x1xf32>
    %17 = vector.broadcast %16 : vector<16x1xf32> to vector<16x128xf32>
    %18 = arith.subf %1, %17 : vector<16x128xf32>
    %19 = arith.mulf %18, %18 : vector<16x128xf32>
    %cst_25 = arith.constant dense<0.000000e+00> : vector<16xf32>
    %20 = vector.multi_reduction <add>, %19, %cst_25 [1] : vector<16x128xf32> to vector<16xf32>
    %21 = vector.shape_cast %20 : vector<16xf32> to vector<16x1xf32>
    %cst_26 = arith.constant 1.280000e+02 : f32
    %22 = vector.broadcast %cst_26 : f32 to vector<16x1xf32>
    %23 = arith.divf %21, %22 : vector<16x1xf32>
    %24 = vector.broadcast %16 : vector<16x1xf32> to vector<16x128xf32>
    %25 = arith.subf %1, %24 : vector<16x128xf32>
    %cst_27 = arith.constant 9.99999974E-6 : f32
    %26 = vector.broadcast %cst_27 : f32 to vector<16x1xf32>
    %27 = arith.addf %23, %26 : vector<16x1xf32>
    %28 = math.rsqrt %27 : vector<16x1xf32>
    %29 = vector.broadcast %28 : vector<16x1xf32> to vector<16x128xf32>
    %30 = arith.mulf %25, %29 : vector<16x128xf32>
    %31 = vector.broadcast %2 : vector<1x128xf32> to vector<16x128xf32>
    %32 = arith.mulf %30, %31 : vector<16x128xf32>
    %33 = vector.broadcast %3 : vector<1x128xf32> to vector<16x128xf32>
    %34 = arith.addf %32, %33 : vector<16x128xf32>
    %35 = arith.truncf %34 : vector<16x128xf32> to vector<16x128xbf16>
    %36 = vector.extract_strided_slice %4 {offsets = [0, 0], sizes = [128, 128], strides = [1, 1]} : vector<128x384xbf16> to vector<128x128xbf16>
    %cst_28 = arith.constant dense<0.000000e+00> : vector<16x128xf32>
    %37 = tpu.matmul %35, %36, %cst_28 {dimension_numbers = #tpu.dot_dimension_numbers<[1], [0], [0], [1], [0, 0, 1, 1], [], []>} : vector<16x128xbf16>, vector<128x128xbf16>, vector<16x128xf32> -> vector<16x128xf32>
    %38 = vector.extract_strided_slice %4 {offsets = [0, 128], sizes = [128, 128], strides = [1, 1]} : vector<128x384xbf16> to vector<128x128xbf16>
    %cst_29 = arith.constant dense<0.000000e+00> : vector<16x128xf32>
    %39 = tpu.matmul %35, %38, %cst_29 {dimension_numbers = #tpu.dot_dimension_numbers<[1], [0], [0], [1], [0, 0, 1, 1], [], []>} : vector<16x128xbf16>, vector<128x128xbf16>, vector<16x128xf32> -> vector<16x128xf32>
    %40 = vector.extract_strided_slice %4 {offsets = [0, 256], sizes = [128, 128], strides = [1, 1]} : vector<128x384xbf16> to vector<128x128xbf16>
    %cst_30 = arith.constant dense<0.000000e+00> : vector<16x128xf32>
    %41 = tpu.matmul %35, %40, %cst_30 {dimension_numbers = #tpu.dot_dimension_numbers<[1], [0], [0], [1], [0, 0, 1, 1], [], []>} : vector<16x128xbf16>, vector<128x128xbf16>, vector<16x128xf32> -> vector<16x128xf32>
    %42 = arith.truncf %37 : vector<16x128xf32> to vector<16x128xbf16>
    %43 = vector.shape_cast %42 : vector<16x128xbf16> to vector<2x8x128xbf16>
    %44 = arith.truncf %39 : vector<16x128xf32> to vector<16x128xbf16>
    %45 = vector.shape_cast %44 : vector<16x128xbf16> to vector<2x8x128xbf16>
    %46 = arith.truncf %41 : vector<16x128xf32> to vector<16x128xbf16>
    %47 = vector.shape_cast %46 : vector<16x128xbf16> to vector<2x8x128xbf16>
    %cst_31 = arith.constant 0.000000e+00 : f32
    %48 = vector.broadcast %cst_31 : f32 to vector<16x128xf32>
    %49 = vector.extract_strided_slice %43 {offsets = [0, 0, 0], sizes = [2, 8, 32], strides = [1, 1, 1]} : vector<2x8x128xbf16> to vector<2x8x32xbf16>
    %50 = vector.extract_strided_slice %45 {offsets = [0, 0, 0], sizes = [2, 8, 32], strides = [1, 1, 1]} : vector<2x8x128xbf16> to vector<2x8x32xbf16>
    %51 = vector.extract_strided_slice %47 {offsets = [0, 0, 0], sizes = [2, 8, 32], strides = [1, 1, 1]} : vector<2x8x128xbf16> to vector<2x8x32xbf16>
    "tpu.trace_start"() <{level = 10 : i32, message = "bqd,bkd->bqk"}> : () -> ()
    %cst_32 = arith.constant dense<0.000000e+00> : vector<2x8x8xf32>
    %52 = tpu.matmul %49, %50, %cst_32 {dimension_numbers = #tpu.dot_dimension_numbers<[2], [2], [1], [1], [0, 0, 0, 1, 1, 1], [0], [0]>} : vector<2x8x32xbf16>, vector<2x8x32xbf16>, vector<2x8x8xf32> -> vector<2x8x8xf32>
    "tpu.trace_stop"() : () -> ()
    %cst_33 = arith.constant 0.176776692 : f32
    %53 = vector.broadcast %cst_33 : f32 to vector<2x8x8xf32>
    %54 = arith.mulf %52, %53 : vector<2x8x8xf32>
    %cst_34 = arith.constant dense<0xFF800000> : vector<2x8xf32>
    %55 = vector.multi_reduction <maximumf>, %54, %cst_34 [2] : vector<2x8x8xf32> to vector<2x8xf32>
    %56 = vector.shape_cast %55 : vector<2x8xf32> to vector<2x8x1xf32>
    %57 = vector.broadcast %56 : vector<2x8x1xf32> to vector<2x8x8xf32>
    %58 = arith.subf %54, %57 : vector<2x8x8xf32>
    %59 = math.exp %58 : vector<2x8x8xf32>
    %cst_35 = arith.constant dense<0.000000e+00> : vector<2x8xf32>
    %60 = vector.multi_reduction <add>, %59, %cst_35 [2] : vector<2x8x8xf32> to vector<2x8xf32>
    %61 = vector.shape_cast %60 : vector<2x8xf32> to vector<2x8x1xf32>
    %62 = tpu.reciprocal %61 {approx = true} : vector<2x8x1xf32> -> vector<2x8x1xf32>
    %63 = vector.broadcast %62 : vector<2x8x1xf32> to vector<2x8x8xf32>
    %64 = arith.mulf %59, %63 : vector<2x8x8xf32>
    %65 = arith.truncf %64 : vector<2x8x8xf32> to vector<2x8x8xbf16>
    "tpu.trace_start"() <{level = 10 : i32, message = "bqk,bkd->bqd"}> : () -> ()
    %cst_36 = arith.constant dense<0.000000e+00> : vector<2x8x32xf32>
    %66 = tpu.matmul %65, %51, %cst_36 {dimension_numbers = #tpu.dot_dimension_numbers<[2], [1], [1], [2], [0, 0, 0, 1, 1, 2], [0], [0]>} : vector<2x8x8xbf16>, vector<2x8x32xbf16>, vector<2x8x32xf32> -> vector<2x8x32xf32>
    "tpu.trace_stop"() : () -> ()
    %67 = vector.shape_cast %66 : vector<2x8x32xf32> to vector<16x32xf32>
    %68 = arith.truncf %67 : vector<16x32xf32> to vector<16x32xbf16>
    %69 = vector.extract_strided_slice %5 {offsets = [0, 0], sizes = [32, 128], strides = [1, 1]} : vector<128x128xbf16> to vector<32x128xbf16>
    %cst_37 = arith.constant dense<0.000000e+00> : vector<16x128xf32>
    %70 = tpu.matmul %68, %69, %cst_37 {dimension_numbers = #tpu.dot_dimension_numbers<[1], [0], [0], [1], [0, 0, 1, 1], [], []>} : vector<16x32xbf16>, vector<32x128xbf16>, vector<16x128xf32> -> vector<16x128xf32>
    %71 = arith.addf %48, %70 : vector<16x128xf32>
    %72 = vector.extract_strided_slice %43 {offsets = [0, 0, 32], sizes = [2, 8, 32], strides = [1, 1, 1]} : vector<2x8x128xbf16> to vector<2x8x32xbf16>
    %73 = vector.extract_strided_slice %45 {offsets = [0, 0, 32], sizes = [2, 8, 32], strides = [1, 1, 1]} : vector<2x8x128xbf16> to vector<2x8x32xbf16>
    %74 = vector.extract_strided_slice %47 {offsets = [0, 0, 32], sizes = [2, 8, 32], strides = [1, 1, 1]} : vector<2x8x128xbf16> to vector<2x8x32xbf16>
    "tpu.trace_start"() <{level = 10 : i32, message = "bqd,bkd->bqk"}> : () -> ()
    %cst_38 = arith.constant dense<0.000000e+00> : vector<2x8x8xf32>
    %75 = tpu.matmul %72, %73, %cst_38 {dimension_numbers = #tpu.dot_dimension_numbers<[2], [2], [1], [1], [0, 0, 0, 1, 1, 1], [0], [0]>} : vector<2x8x32xbf16>, vector<2x8x32xbf16>, vector<2x8x8xf32> -> vector<2x8x8xf32>
    "tpu.trace_stop"() : () -> ()
    %cst_39 = arith.constant 0.176776692 : f32
    %76 = vector.broadcast %cst_39 : f32 to vector<2x8x8xf32>
    %77 = arith.mulf %75, %76 : vector<2x8x8xf32>
    %cst_40 = arith.constant dense<0xFF800000> : vector<2x8xf32>
    %78 = vector.multi_reduction <maximumf>, %77, %cst_40 [2] : vector<2x8x8xf32> to vector<2x8xf32>
    %79 = vector.shape_cast %78 : vector<2x8xf32> to vector<2x8x1xf32>
    %80 = vector.broadcast %79 : vector<2x8x1xf32> to vector<2x8x8xf32>
    %81 = arith.subf %77, %80 : vector<2x8x8xf32>
    %82 = math.exp %81 : vector<2x8x8xf32>
    %cst_41 = arith.constant dense<0.000000e+00> : vector<2x8xf32>
    %83 = vector.multi_reduction <add>, %82, %cst_41 [2] : vector<2x8x8xf32> to vector<2x8xf32>
    %84 = vector.shape_cast %83 : vector<2x8xf32> to vector<2x8x1xf32>
    %85 = tpu.reciprocal %84 {approx = true} : vector<2x8x1xf32> -> vector<2x8x1xf32>
    %86 = vector.broadcast %85 : vector<2x8x1xf32> to vector<2x8x8xf32>
    %87 = arith.mulf %82, %86 : vector<2x8x8xf32>
    %88 = arith.truncf %87 : vector<2x8x8xf32> to vector<2x8x8xbf16>
    "tpu.trace_start"() <{level = 10 : i32, message = "bqk,bkd->bqd"}> : () -> ()
    %cst_42 = arith.constant dense<0.000000e+00> : vector<2x8x32xf32>
    %89 = tpu.matmul %88, %74, %cst_42 {dimension_numbers = #tpu.dot_dimension_numbers<[2], [1], [1], [2], [0, 0, 0, 1, 1, 2], [0], [0]>} : vector<2x8x8xbf16>, vector<2x8x32xbf16>, vector<2x8x32xf32> -> vector<2x8x32xf32>
    "tpu.trace_stop"() : () -> ()
    %90 = vector.shape_cast %89 : vector<2x8x32xf32> to vector<16x32xf32>
    %91 = arith.truncf %90 : vector<16x32xf32> to vector<16x32xbf16>
    %92 = vector.extract_strided_slice %5 {offsets = [32, 0], sizes = [32, 128], strides = [1, 1]} : vector<128x128xbf16> to vector<32x128xbf16>
    %cst_43 = arith.constant dense<0.000000e+00> : vector<16x128xf32>
    %93 = tpu.matmul %91, %92, %cst_43 {dimension_numbers = #tpu.dot_dimension_numbers<[1], [0], [0], [1], [0, 0, 1, 1], [], []>} : vector<16x32xbf16>, vector<32x128xbf16>, vector<16x128xf32> -> vector<16x128xf32>
    %94 = arith.addf %71, %93 : vector<16x128xf32>
    %95 = vector.extract_strided_slice %43 {offsets = [0, 0, 64], sizes = [2, 8, 32], strides = [1, 1, 1]} : vector<2x8x128xbf16> to vector<2x8x32xbf16>
    %96 = vector.extract_strided_slice %45 {offsets = [0, 0, 64], sizes = [2, 8, 32], strides = [1, 1, 1]} : vector<2x8x128xbf16> to vector<2x8x32xbf16>
    %97 = vector.extract_strided_slice %47 {offsets = [0, 0, 64], sizes = [2, 8, 32], strides = [1, 1, 1]} : vector<2x8x128xbf16> to vector<2x8x32xbf16>
    "tpu.trace_start"() <{level = 10 : i32, message = "bqd,bkd->bqk"}> : () -> ()
    %cst_44 = arith.constant dense<0.000000e+00> : vector<2x8x8xf32>
    %98 = tpu.matmul %95, %96, %cst_44 {dimension_numbers = #tpu.dot_dimension_numbers<[2], [2], [1], [1], [0, 0, 0, 1, 1, 1], [0], [0]>} : vector<2x8x32xbf16>, vector<2x8x32xbf16>, vector<2x8x8xf32> -> vector<2x8x8xf32>
    "tpu.trace_stop"() : () -> ()
    %cst_45 = arith.constant 0.176776692 : f32
    %99 = vector.broadcast %cst_45 : f32 to vector<2x8x8xf32>
    %100 = arith.mulf %98, %99 : vector<2x8x8xf32>
    %cst_46 = arith.constant dense<0xFF800000> : vector<2x8xf32>
    %101 = vector.multi_reduction <maximumf>, %100, %cst_46 [2] : vector<2x8x8xf32> to vector<2x8xf32>
    %102 = vector.shape_cast %101 : vector<2x8xf32> to vector<2x8x1xf32>
    %103 = vector.broadcast %102 : vector<2x8x1xf32> to vector<2x8x8xf32>
    %104 = arith.subf %100, %103 : vector<2x8x8xf32>
    %105 = math.exp %104 : vector<2x8x8xf32>
    %cst_47 = arith.constant dense<0.000000e+00> : vector<2x8xf32>
    %106 = vector.multi_reduction <add>, %105, %cst_47 [2] : vector<2x8x8xf32> to vector<2x8xf32>
    %107 = vector.shape_cast %106 : vector<2x8xf32> to vector<2x8x1xf32>
    %108 = tpu.reciprocal %107 {approx = true} : vector<2x8x1xf32> -> vector<2x8x1xf32>
    %109 = vector.broadcast %108 : vector<2x8x1xf32> to vector<2x8x8xf32>
    %110 = arith.mulf %105, %109 : vector<2x8x8xf32>
    %111 = arith.truncf %110 : vector<2x8x8xf32> to vector<2x8x8xbf16>
    "tpu.trace_start"() <{level = 10 : i32, message = "bqk,bkd->bqd"}> : () -> ()
    %cst_48 = arith.constant dense<0.000000e+00> : vector<2x8x32xf32>
    %112 = tpu.matmul %111, %97, %cst_48 {dimension_numbers = #tpu.dot_dimension_numbers<[2], [1], [1], [2], [0, 0, 0, 1, 1, 2], [0], [0]>} : vector<2x8x8xbf16>, vector<2x8x32xbf16>, vector<2x8x32xf32> -> vector<2x8x32xf32>
    "tpu.trace_stop"() : () -> ()
    %113 = vector.shape_cast %112 : vector<2x8x32xf32> to vector<16x32xf32>
    %114 = arith.truncf %113 : vector<16x32xf32> to vector<16x32xbf16>
    %115 = vector.extract_strided_slice %5 {offsets = [64, 0], sizes = [32, 128], strides = [1, 1]} : vector<128x128xbf16> to vector<32x128xbf16>
    %cst_49 = arith.constant dense<0.000000e+00> : vector<16x128xf32>
    %116 = tpu.matmul %114, %115, %cst_49 {dimension_numbers = #tpu.dot_dimension_numbers<[1], [0], [0], [1], [0, 0, 1, 1], [], []>} : vector<16x32xbf16>, vector<32x128xbf16>, vector<16x128xf32> -> vector<16x128xf32>
    %117 = arith.addf %94, %116 : vector<16x128xf32>
    %118 = vector.extract_strided_slice %43 {offsets = [0, 0, 96], sizes = [2, 8, 32], strides = [1, 1, 1]} : vector<2x8x128xbf16> to vector<2x8x32xbf16>
    %119 = vector.extract_strided_slice %45 {offsets = [0, 0, 96], sizes = [2, 8, 32], strides = [1, 1, 1]} : vector<2x8x128xbf16> to vector<2x8x32xbf16>
    %120 = vector.extract_strided_slice %47 {offsets = [0, 0, 96], sizes = [2, 8, 32], strides = [1, 1, 1]} : vector<2x8x128xbf16> to vector<2x8x32xbf16>
    "tpu.trace_start"() <{level = 10 : i32, message = "bqd,bkd->bqk"}> : () -> ()
    %cst_50 = arith.constant dense<0.000000e+00> : vector<2x8x8xf32>
    %121 = tpu.matmul %118, %119, %cst_50 {dimension_numbers = #tpu.dot_dimension_numbers<[2], [2], [1], [1], [0, 0, 0, 1, 1, 1], [0], [0]>} : vector<2x8x32xbf16>, vector<2x8x32xbf16>, vector<2x8x8xf32> -> vector<2x8x8xf32>
    "tpu.trace_stop"() : () -> ()
    %cst_51 = arith.constant 0.176776692 : f32
    %122 = vector.broadcast %cst_51 : f32 to vector<2x8x8xf32>
    %123 = arith.mulf %121, %122 : vector<2x8x8xf32>
    %cst_52 = arith.constant dense<0xFF800000> : vector<2x8xf32>
    %124 = vector.multi_reduction <maximumf>, %123, %cst_52 [2] : vector<2x8x8xf32> to vector<2x8xf32>
    %125 = vector.shape_cast %124 : vector<2x8xf32> to vector<2x8x1xf32>
    %126 = vector.broadcast %125 : vector<2x8x1xf32> to vector<2x8x8xf32>
    %127 = arith.subf %123, %126 : vector<2x8x8xf32>
    %128 = math.exp %127 : vector<2x8x8xf32>
    %cst_53 = arith.constant dense<0.000000e+00> : vector<2x8xf32>
    %129 = vector.multi_reduction <add>, %128, %cst_53 [2] : vector<2x8x8xf32> to vector<2x8xf32>
    %130 = vector.shape_cast %129 : vector<2x8xf32> to vector<2x8x1xf32>
    %131 = tpu.reciprocal %130 {approx = true} : vector<2x8x1xf32> -> vector<2x8x1xf32>
    %132 = vector.broadcast %131 : vector<2x8x1xf32> to vector<2x8x8xf32>
    %133 = arith.mulf %128, %132 : vector<2x8x8xf32>
    %134 = arith.truncf %133 : vector<2x8x8xf32> to vector<2x8x8xbf16>
    "tpu.trace_start"() <{level = 10 : i32, message = "bqk,bkd->bqd"}> : () -> ()
    %cst_54 = arith.constant dense<0.000000e+00> : vector<2x8x32xf32>
    %135 = tpu.matmul %134, %120, %cst_54 {dimension_numbers = #tpu.dot_dimension_numbers<[2], [1], [1], [2], [0, 0, 0, 1, 1, 2], [0], [0]>} : vector<2x8x8xbf16>, vector<2x8x32xbf16>, vector<2x8x32xf32> -> vector<2x8x32xf32>
    "tpu.trace_stop"() : () -> ()
    %136 = vector.shape_cast %135 : vector<2x8x32xf32> to vector<16x32xf32>
    %137 = arith.truncf %136 : vector<16x32xf32> to vector<16x32xbf16>
    %138 = vector.extract_strided_slice %5 {offsets = [96, 0], sizes = [32, 128], strides = [1, 1]} : vector<128x128xbf16> to vector<32x128xbf16>
    %cst_55 = arith.constant dense<0.000000e+00> : vector<16x128xf32>
    %139 = tpu.matmul %137, %138, %cst_55 {dimension_numbers = #tpu.dot_dimension_numbers<[1], [0], [0], [1], [0, 0, 1, 1], [], []>} : vector<16x32xbf16>, vector<32x128xbf16>, vector<16x128xf32> -> vector<16x128xf32>
    %140 = arith.addf %117, %139 : vector<16x128xf32>
    %141 = arith.addf %1, %140 : vector<16x128xf32>
    %142 = vector.broadcast %6 : vector<1x128xf32> to vector<16x128xf32>
    %143 = arith.addf %141, %142 : vector<16x128xf32>
    %cst_56 = arith.constant dense<0.000000e+00> : vector<16xf32>
    %144 = vector.multi_reduction <add>, %143, %cst_56 [1] : vector<16x128xf32> to vector<16xf32>
    %145 = vector.shape_cast %144 : vector<16xf32> to vector<16x1xf32>
    %cst_57 = arith.constant 1.280000e+02 : f32
    %146 = vector.broadcast %cst_57 : f32 to vector<16x1xf32>
    %147 = arith.divf %145, %146 : vector<16x1xf32>
    %148 = vector.broadcast %147 : vector<16x1xf32> to vector<16x128xf32>
    %149 = arith.subf %143, %148 : vector<16x128xf32>
    %150 = arith.mulf %149, %149 : vector<16x128xf32>
    %cst_58 = arith.constant dense<0.000000e+00> : vector<16xf32>
    %151 = vector.multi_reduction <add>, %150, %cst_58 [1] : vector<16x128xf32> to vector<16xf32>
    %152 = vector.shape_cast %151 : vector<16xf32> to vector<16x1xf32>
    %cst_59 = arith.constant 1.280000e+02 : f32
    %153 = vector.broadcast %cst_59 : f32 to vector<16x1xf32>
    %154 = arith.divf %152, %153 : vector<16x1xf32>
    %155 = vector.broadcast %147 : vector<16x1xf32> to vector<16x128xf32>
    %156 = arith.subf %143, %155 : vector<16x128xf32>
    %cst_60 = arith.constant 9.99999974E-6 : f32
    %157 = vector.broadcast %cst_60 : f32 to vector<16x1xf32>
    %158 = arith.addf %154, %157 : vector<16x1xf32>
    %159 = math.rsqrt %158 : vector<16x1xf32>
    %160 = vector.broadcast %159 : vector<16x1xf32> to vector<16x128xf32>
    %161 = arith.mulf %156, %160 : vector<16x128xf32>
    %162 = vector.broadcast %7 : vector<1x128xf32> to vector<16x128xf32>
    %163 = arith.mulf %161, %162 : vector<16x128xf32>
    %164 = vector.broadcast %8 : vector<1x128xf32> to vector<16x128xf32>
    %165 = arith.addf %163, %164 : vector<16x128xf32>
    %166 = arith.truncf %165 : vector<16x128xf32> to vector<16x128xbf16>
    %cst_61 = arith.constant dense<0.000000e+00> : vector<16x512xf32>
    %167 = tpu.matmul %166, %9, %cst_61 {dimension_numbers = #tpu.dot_dimension_numbers<[1], [0], [0], [1], [0, 0, 1, 1], [], []>} : vector<16x128xbf16>, vector<128x512xbf16>, vector<16x512xf32> -> vector<16x512xf32>
    %168 = vector.broadcast %10 : vector<1x512xf32> to vector<16x512xf32>
    %169 = arith.addf %167, %168 : vector<16x512xf32>
    %cst_62 = arith.constant 5.000000e-01 : f32
    %170 = vector.broadcast %cst_62 : f32 to vector<16x512xf32>
    %171 = arith.mulf %170, %169 : vector<16x512xf32>
    %cst_63 = arith.constant 0.707106769 : f32
    %172 = vector.broadcast %cst_63 : f32 to vector<16x512xf32>
    %173 = arith.mulf %169, %172 : vector<16x512xf32>
    %174 = math.absf %173 : vector<16x512xf32>
    %cst_64 = arith.constant 0.327591091 : f32
    %175 = vector.broadcast %cst_64 : f32 to vector<16x512xf32>
    %176 = arith.mulf %175, %174 : vector<16x512xf32>
    %cst_65 = arith.constant 1.000000e+00 : f32
    %177 = vector.broadcast %cst_65 : f32 to vector<16x512xf32>
    %178 = arith.addf %177, %176 : vector<16x512xf32>
    %cst_66 = arith.constant 1.000000e+00 : f32
    %179 = vector.broadcast %cst_66 : f32 to vector<16x512xf32>
    %180 = arith.divf %179, %178 : vector<16x512xf32>
    %cst_67 = arith.constant 1.06140542 : f32
    %181 = vector.broadcast %cst_67 : f32 to vector<16x512xf32>
    %182 = arith.mulf %181, %180 : vector<16x512xf32>
    %cst_68 = arith.constant -1.45315206 : f32
    %183 = vector.broadcast %cst_68 : f32 to vector<16x512xf32>
    %184 = arith.addf %182, %183 : vector<16x512xf32>
    %185 = arith.mulf %184, %180 : vector<16x512xf32>
    %cst_69 = arith.constant 1.42141378 : f32
    %186 = vector.broadcast %cst_69 : f32 to vector<16x512xf32>
    %187 = arith.addf %185, %186 : vector<16x512xf32>
    %188 = arith.mulf %187, %180 : vector<16x512xf32>
    %cst_70 = arith.constant -0.284496725 : f32
    %189 = vector.broadcast %cst_70 : f32 to vector<16x512xf32>
    %190 = arith.addf %188, %189 : vector<16x512xf32>
    %191 = arith.mulf %190, %180 : vector<16x512xf32>
    %cst_71 = arith.constant 0.254829586 : f32
    %192 = vector.broadcast %cst_71 : f32 to vector<16x512xf32>
    %193 = arith.addf %191, %192 : vector<16x512xf32>
    %194 = arith.mulf %193, %180 : vector<16x512xf32>
    %cst_72 = arith.constant 0.000000e+00 : f32
    %195 = vector.broadcast %cst_72 : f32 to vector<16x512xf32>
    %196 = arith.subf %195, %174 : vector<16x512xf32>
    %197 = arith.mulf %196, %174 : vector<16x512xf32>
    %198 = math.exp %197 : vector<16x512xf32>
    %199 = arith.mulf %194, %198 : vector<16x512xf32>
    %cst_73 = arith.constant 1.000000e+00 : f32
    %200 = vector.broadcast %cst_73 : f32 to vector<16x512xf32>
    %201 = arith.subf %200, %199 : vector<16x512xf32>
    %cst_74 = arith.constant 0.000000e+00 : f32
    %202 = vector.broadcast %cst_74 : f32 to vector<16x512xf32>
    %203 = arith.cmpf oge, %173, %202 : vector<16x512xf32>
    %cst_75 = arith.constant 0.000000e+00 : f32
    %204 = vector.broadcast %cst_75 : f32 to vector<16x512xf32>
    %205 = arith.subf %204, %201 : vector<16x512xf32>
    %206 = arith.select %203, %201, %205 : vector<16x512xi1>, vector<16x512xf32>
    %cst_76 = arith.constant 1.000000e+00 : f32
    %207 = vector.broadcast %cst_76 : f32 to vector<16x512xf32>
    %208 = arith.addf %207, %206 : vector<16x512xf32>
    %209 = arith.mulf %171, %208 : vector<16x512xf32>
    %210 = arith.truncf %209 : vector<16x512xf32> to vector<16x512xbf16>
    %cst_77 = arith.constant dense<0.000000e+00> : vector<16x128xf32>
    %211 = tpu.matmul %210, %11, %cst_77 {dimension_numbers = #tpu.dot_dimension_numbers<[1], [0], [0], [1], [0, 0, 1, 1], [], []>} : vector<16x512xbf16>, vector<512x128xbf16>, vector<16x128xf32> -> vector<16x128xf32>
    %212 = vector.broadcast %12 : vector<1x128xf32> to vector<16x128xf32>
    %213 = arith.addf %211, %212 : vector<16x128xf32>
    %214 = arith.addf %143, %213 : vector<16x128xf32>
    %c0_78 = arith.constant 0 : index
    %c0_79 = arith.constant 0 : index
    %215 = vector.load %arg12[%c0_78, %c0_79] : memref<1x128xf32, #tpu.memory_space<vmem>>, vector<1x128xf32>
    %c0_80 = arith.constant 0 : index
    %c0_81 = arith.constant 0 : index
    %216 = vector.load %arg13[%c0_80, %c0_81] : memref<1x128xf32, #tpu.memory_space<vmem>>, vector<1x128xf32>
    %c0_82 = arith.constant 0 : index
    %c0_83 = arith.constant 0 : index
    %217 = vector.load %arg14[%c0_82, %c0_83] : memref<128x384xbf16, #tpu.memory_space<vmem>>, vector<128x384xbf16>
    %c0_84 = arith.constant 0 : index
    %c0_85 = arith.constant 0 : index
    %218 = vector.load %arg15[%c0_84, %c0_85] : memref<128x128xbf16, #tpu.memory_space<vmem>>, vector<128x128xbf16>
    %c0_86 = arith.constant 0 : index
    %c0_87 = arith.constant 0 : index
    %219 = vector.load %arg16[%c0_86, %c0_87] : memref<1x128xf32, #tpu.memory_space<vmem>>, vector<1x128xf32>
    %c0_88 = arith.constant 0 : index
    %c0_89 = arith.constant 0 : index
    %220 = vector.load %arg17[%c0_88, %c0_89] : memref<1x128xf32, #tpu.memory_space<vmem>>, vector<1x128xf32>
    %c0_90 = arith.constant 0 : index
    %c0_91 = arith.constant 0 : index
    %221 = vector.load %arg18[%c0_90, %c0_91] : memref<1x128xf32, #tpu.memory_space<vmem>>, vector<1x128xf32>
    %c0_92 = arith.constant 0 : index
    %c0_93 = arith.constant 0 : index
    %222 = vector.load %arg19[%c0_92, %c0_93] : memref<128x512xbf16, #tpu.memory_space<vmem>>, vector<128x512xbf16>
    %c0_94 = arith.constant 0 : index
    %c0_95 = arith.constant 0 : index
    %223 = vector.load %arg20[%c0_94, %c0_95] : memref<1x512xf32, #tpu.memory_space<vmem>>, vector<1x512xf32>
    %c0_96 = arith.constant 0 : index
    %c0_97 = arith.constant 0 : index
    %224 = vector.load %arg21[%c0_96, %c0_97] : memref<512x128xbf16, #tpu.memory_space<vmem>>, vector<512x128xbf16>
    %c0_98 = arith.constant 0 : index
    %c0_99 = arith.constant 0 : index
    %225 = vector.load %arg22[%c0_98, %c0_99] : memref<1x128xf32, #tpu.memory_space<vmem>>, vector<1x128xf32>
    %cst_100 = arith.constant dense<0.000000e+00> : vector<16xf32>
    %226 = vector.multi_reduction <add>, %214, %cst_100 [1] : vector<16x128xf32> to vector<16xf32>
    %227 = vector.shape_cast %226 : vector<16xf32> to vector<16x1xf32>
    %cst_101 = arith.constant 1.280000e+02 : f32
    %228 = vector.broadcast %cst_101 : f32 to vector<16x1xf32>
    %229 = arith.divf %227, %228 : vector<16x1xf32>
    %230 = vector.broadcast %229 : vector<16x1xf32> to vector<16x128xf32>
    %231 = arith.subf %214, %230 : vector<16x128xf32>
    %232 = arith.mulf %231, %231 : vector<16x128xf32>
    %cst_102 = arith.constant dense<0.000000e+00> : vector<16xf32>
    %233 = vector.multi_reduction <add>, %232, %cst_102 [1] : vector<16x128xf32> to vector<16xf32>
    %234 = vector.shape_cast %233 : vector<16xf32> to vector<16x1xf32>
    %cst_103 = arith.constant 1.280000e+02 : f32
    %235 = vector.broadcast %cst_103 : f32 to vector<16x1xf32>
    %236 = arith.divf %234, %235 : vector<16x1xf32>
    %237 = vector.broadcast %229 : vector<16x1xf32> to vector<16x128xf32>
    %238 = arith.subf %214, %237 : vector<16x128xf32>
    %cst_104 = arith.constant 9.99999974E-6 : f32
    %239 = vector.broadcast %cst_104 : f32 to vector<16x1xf32>
    %240 = arith.addf %236, %239 : vector<16x1xf32>
    %241 = math.rsqrt %240 : vector<16x1xf32>
    %242 = vector.broadcast %241 : vector<16x1xf32> to vector<16x128xf32>
    %243 = arith.mulf %238, %242 : vector<16x128xf32>
    %244 = vector.broadcast %215 : vector<1x128xf32> to vector<16x128xf32>
    %245 = arith.mulf %243, %244 : vector<16x128xf32>
    %246 = vector.broadcast %216 : vector<1x128xf32> to vector<16x128xf32>
    %247 = arith.addf %245, %246 : vector<16x128xf32>
    %248 = arith.truncf %247 : vector<16x128xf32> to vector<16x128xbf16>
    %249 = vector.extract_strided_slice %217 {offsets = [0, 0], sizes = [128, 128], strides = [1, 1]} : vector<128x384xbf16> to vector<128x128xbf16>
    %cst_105 = arith.constant dense<0.000000e+00> : vector<16x128xf32>
    %250 = tpu.matmul %248, %249, %cst_105 {dimension_numbers = #tpu.dot_dimension_numbers<[1], [0], [0], [1], [0, 0, 1, 1], [], []>} : vector<16x128xbf16>, vector<128x128xbf16>, vector<16x128xf32> -> vector<16x128xf32>
    %251 = vector.extract_strided_slice %217 {offsets = [0, 128], sizes = [128, 128], strides = [1, 1]} : vector<128x384xbf16> to vector<128x128xbf16>
    %cst_106 = arith.constant dense<0.000000e+00> : vector<16x128xf32>
    %252 = tpu.matmul %248, %251, %cst_106 {dimension_numbers = #tpu.dot_dimension_numbers<[1], [0], [0], [1], [0, 0, 1, 1], [], []>} : vector<16x128xbf16>, vector<128x128xbf16>, vector<16x128xf32> -> vector<16x128xf32>
    %253 = vector.extract_strided_slice %217 {offsets = [0, 256], sizes = [128, 128], strides = [1, 1]} : vector<128x384xbf16> to vector<128x128xbf16>
    %cst_107 = arith.constant dense<0.000000e+00> : vector<16x128xf32>
    %254 = tpu.matmul %248, %253, %cst_107 {dimension_numbers = #tpu.dot_dimension_numbers<[1], [0], [0], [1], [0, 0, 1, 1], [], []>} : vector<16x128xbf16>, vector<128x128xbf16>, vector<16x128xf32> -> vector<16x128xf32>
    %255 = arith.truncf %250 : vector<16x128xf32> to vector<16x128xbf16>
    %256 = vector.shape_cast %255 : vector<16x128xbf16> to vector<2x8x128xbf16>
    %257 = arith.truncf %252 : vector<16x128xf32> to vector<16x128xbf16>
    %258 = vector.shape_cast %257 : vector<16x128xbf16> to vector<2x8x128xbf16>
    %259 = arith.truncf %254 : vector<16x128xf32> to vector<16x128xbf16>
    %260 = vector.shape_cast %259 : vector<16x128xbf16> to vector<2x8x128xbf16>
    %cst_108 = arith.constant 0.000000e+00 : f32
    %261 = vector.broadcast %cst_108 : f32 to vector<16x128xf32>
    %262 = vector.extract_strided_slice %256 {offsets = [0, 0, 0], sizes = [2, 8, 32], strides = [1, 1, 1]} : vector<2x8x128xbf16> to vector<2x8x32xbf16>
    %263 = vector.extract_strided_slice %258 {offsets = [0, 0, 0], sizes = [2, 8, 32], strides = [1, 1, 1]} : vector<2x8x128xbf16> to vector<2x8x32xbf16>
    %264 = vector.extract_strided_slice %260 {offsets = [0, 0, 0], sizes = [2, 8, 32], strides = [1, 1, 1]} : vector<2x8x128xbf16> to vector<2x8x32xbf16>
    "tpu.trace_start"() <{level = 10 : i32, message = "bqd,bkd->bqk"}> : () -> ()
    %cst_109 = arith.constant dense<0.000000e+00> : vector<2x8x8xf32>
    %265 = tpu.matmul %262, %263, %cst_109 {dimension_numbers = #tpu.dot_dimension_numbers<[2], [2], [1], [1], [0, 0, 0, 1, 1, 1], [0], [0]>} : vector<2x8x32xbf16>, vector<2x8x32xbf16>, vector<2x8x8xf32> -> vector<2x8x8xf32>
    "tpu.trace_stop"() : () -> ()
    %cst_110 = arith.constant 0.176776692 : f32
    %266 = vector.broadcast %cst_110 : f32 to vector<2x8x8xf32>
    %267 = arith.mulf %265, %266 : vector<2x8x8xf32>
    %cst_111 = arith.constant dense<0xFF800000> : vector<2x8xf32>
    %268 = vector.multi_reduction <maximumf>, %267, %cst_111 [2] : vector<2x8x8xf32> to vector<2x8xf32>
    %269 = vector.shape_cast %268 : vector<2x8xf32> to vector<2x8x1xf32>
    %270 = vector.broadcast %269 : vector<2x8x1xf32> to vector<2x8x8xf32>
    %271 = arith.subf %267, %270 : vector<2x8x8xf32>
    %272 = math.exp %271 : vector<2x8x8xf32>
    %cst_112 = arith.constant dense<0.000000e+00> : vector<2x8xf32>
    %273 = vector.multi_reduction <add>, %272, %cst_112 [2] : vector<2x8x8xf32> to vector<2x8xf32>
    %274 = vector.shape_cast %273 : vector<2x8xf32> to vector<2x8x1xf32>
    %275 = tpu.reciprocal %274 {approx = true} : vector<2x8x1xf32> -> vector<2x8x1xf32>
    %276 = vector.broadcast %275 : vector<2x8x1xf32> to vector<2x8x8xf32>
    %277 = arith.mulf %272, %276 : vector<2x8x8xf32>
    %278 = arith.truncf %277 : vector<2x8x8xf32> to vector<2x8x8xbf16>
    "tpu.trace_start"() <{level = 10 : i32, message = "bqk,bkd->bqd"}> : () -> ()
    %cst_113 = arith.constant dense<0.000000e+00> : vector<2x8x32xf32>
    %279 = tpu.matmul %278, %264, %cst_113 {dimension_numbers = #tpu.dot_dimension_numbers<[2], [1], [1], [2], [0, 0, 0, 1, 1, 2], [0], [0]>} : vector<2x8x8xbf16>, vector<2x8x32xbf16>, vector<2x8x32xf32> -> vector<2x8x32xf32>
    "tpu.trace_stop"() : () -> ()
    %280 = vector.shape_cast %279 : vector<2x8x32xf32> to vector<16x32xf32>
    %281 = arith.truncf %280 : vector<16x32xf32> to vector<16x32xbf16>
    %282 = vector.extract_strided_slice %218 {offsets = [0, 0], sizes = [32, 128], strides = [1, 1]} : vector<128x128xbf16> to vector<32x128xbf16>
    %cst_114 = arith.constant dense<0.000000e+00> : vector<16x128xf32>
    %283 = tpu.matmul %281, %282, %cst_114 {dimension_numbers = #tpu.dot_dimension_numbers<[1], [0], [0], [1], [0, 0, 1, 1], [], []>} : vector<16x32xbf16>, vector<32x128xbf16>, vector<16x128xf32> -> vector<16x128xf32>
    %284 = arith.addf %261, %283 : vector<16x128xf32>
    %285 = vector.extract_strided_slice %256 {offsets = [0, 0, 32], sizes = [2, 8, 32], strides = [1, 1, 1]} : vector<2x8x128xbf16> to vector<2x8x32xbf16>
    %286 = vector.extract_strided_slice %258 {offsets = [0, 0, 32], sizes = [2, 8, 32], strides = [1, 1, 1]} : vector<2x8x128xbf16> to vector<2x8x32xbf16>
    %287 = vector.extract_strided_slice %260 {offsets = [0, 0, 32], sizes = [2, 8, 32], strides = [1, 1, 1]} : vector<2x8x128xbf16> to vector<2x8x32xbf16>
    "tpu.trace_start"() <{level = 10 : i32, message = "bqd,bkd->bqk"}> : () -> ()
    %cst_115 = arith.constant dense<0.000000e+00> : vector<2x8x8xf32>
    %288 = tpu.matmul %285, %286, %cst_115 {dimension_numbers = #tpu.dot_dimension_numbers<[2], [2], [1], [1], [0, 0, 0, 1, 1, 1], [0], [0]>} : vector<2x8x32xbf16>, vector<2x8x32xbf16>, vector<2x8x8xf32> -> vector<2x8x8xf32>
    "tpu.trace_stop"() : () -> ()
    %cst_116 = arith.constant 0.176776692 : f32
    %289 = vector.broadcast %cst_116 : f32 to vector<2x8x8xf32>
    %290 = arith.mulf %288, %289 : vector<2x8x8xf32>
    %cst_117 = arith.constant dense<0xFF800000> : vector<2x8xf32>
    %291 = vector.multi_reduction <maximumf>, %290, %cst_117 [2] : vector<2x8x8xf32> to vector<2x8xf32>
    %292 = vector.shape_cast %291 : vector<2x8xf32> to vector<2x8x1xf32>
    %293 = vector.broadcast %292 : vector<2x8x1xf32> to vector<2x8x8xf32>
    %294 = arith.subf %290, %293 : vector<2x8x8xf32>
    %295 = math.exp %294 : vector<2x8x8xf32>
    %cst_118 = arith.constant dense<0.000000e+00> : vector<2x8xf32>
    %296 = vector.multi_reduction <add>, %295, %cst_118 [2] : vector<2x8x8xf32> to vector<2x8xf32>
    %297 = vector.shape_cast %296 : vector<2x8xf32> to vector<2x8x1xf32>
    %298 = tpu.reciprocal %297 {approx = true} : vector<2x8x1xf32> -> vector<2x8x1xf32>
    %299 = vector.broadcast %298 : vector<2x8x1xf32> to vector<2x8x8xf32>
    %300 = arith.mulf %295, %299 : vector<2x8x8xf32>
    %301 = arith.truncf %300 : vector<2x8x8xf32> to vector<2x8x8xbf16>
    "tpu.trace_start"() <{level = 10 : i32, message = "bqk,bkd->bqd"}> : () -> ()
    %cst_119 = arith.constant dense<0.000000e+00> : vector<2x8x32xf32>
    %302 = tpu.matmul %301, %287, %cst_119 {dimension_numbers = #tpu.dot_dimension_numbers<[2], [1], [1], [2], [0, 0, 0, 1, 1, 2], [0], [0]>} : vector<2x8x8xbf16>, vector<2x8x32xbf16>, vector<2x8x32xf32> -> vector<2x8x32xf32>
    "tpu.trace_stop"() : () -> ()
    %303 = vector.shape_cast %302 : vector<2x8x32xf32> to vector<16x32xf32>
    %304 = arith.truncf %303 : vector<16x32xf32> to vector<16x32xbf16>
    %305 = vector.extract_strided_slice %218 {offsets = [32, 0], sizes = [32, 128], strides = [1, 1]} : vector<128x128xbf16> to vector<32x128xbf16>
    %cst_120 = arith.constant dense<0.000000e+00> : vector<16x128xf32>
    %306 = tpu.matmul %304, %305, %cst_120 {dimension_numbers = #tpu.dot_dimension_numbers<[1], [0], [0], [1], [0, 0, 1, 1], [], []>} : vector<16x32xbf16>, vector<32x128xbf16>, vector<16x128xf32> -> vector<16x128xf32>
    %307 = arith.addf %284, %306 : vector<16x128xf32>
    %308 = vector.extract_strided_slice %256 {offsets = [0, 0, 64], sizes = [2, 8, 32], strides = [1, 1, 1]} : vector<2x8x128xbf16> to vector<2x8x32xbf16>
    %309 = vector.extract_strided_slice %258 {offsets = [0, 0, 64], sizes = [2, 8, 32], strides = [1, 1, 1]} : vector<2x8x128xbf16> to vector<2x8x32xbf16>
    %310 = vector.extract_strided_slice %260 {offsets = [0, 0, 64], sizes = [2, 8, 32], strides = [1, 1, 1]} : vector<2x8x128xbf16> to vector<2x8x32xbf16>
    "tpu.trace_start"() <{level = 10 : i32, message = "bqd,bkd->bqk"}> : () -> ()
    %cst_121 = arith.constant dense<0.000000e+00> : vector<2x8x8xf32>
    %311 = tpu.matmul %308, %309, %cst_121 {dimension_numbers = #tpu.dot_dimension_numbers<[2], [2], [1], [1], [0, 0, 0, 1, 1, 1], [0], [0]>} : vector<2x8x32xbf16>, vector<2x8x32xbf16>, vector<2x8x8xf32> -> vector<2x8x8xf32>
    "tpu.trace_stop"() : () -> ()
    %cst_122 = arith.constant 0.176776692 : f32
    %312 = vector.broadcast %cst_122 : f32 to vector<2x8x8xf32>
    %313 = arith.mulf %311, %312 : vector<2x8x8xf32>
    %cst_123 = arith.constant dense<0xFF800000> : vector<2x8xf32>
    %314 = vector.multi_reduction <maximumf>, %313, %cst_123 [2] : vector<2x8x8xf32> to vector<2x8xf32>
    %315 = vector.shape_cast %314 : vector<2x8xf32> to vector<2x8x1xf32>
    %316 = vector.broadcast %315 : vector<2x8x1xf32> to vector<2x8x8xf32>
    %317 = arith.subf %313, %316 : vector<2x8x8xf32>
    %318 = math.exp %317 : vector<2x8x8xf32>
    %cst_124 = arith.constant dense<0.000000e+00> : vector<2x8xf32>
    %319 = vector.multi_reduction <add>, %318, %cst_124 [2] : vector<2x8x8xf32> to vector<2x8xf32>
    %320 = vector.shape_cast %319 : vector<2x8xf32> to vector<2x8x1xf32>
    %321 = tpu.reciprocal %320 {approx = true} : vector<2x8x1xf32> -> vector<2x8x1xf32>
    %322 = vector.broadcast %321 : vector<2x8x1xf32> to vector<2x8x8xf32>
    %323 = arith.mulf %318, %322 : vector<2x8x8xf32>
    %324 = arith.truncf %323 : vector<2x8x8xf32> to vector<2x8x8xbf16>
    "tpu.trace_start"() <{level = 10 : i32, message = "bqk,bkd->bqd"}> : () -> ()
    %cst_125 = arith.constant dense<0.000000e+00> : vector<2x8x32xf32>
    %325 = tpu.matmul %324, %310, %cst_125 {dimension_numbers = #tpu.dot_dimension_numbers<[2], [1], [1], [2], [0, 0, 0, 1, 1, 2], [0], [0]>} : vector<2x8x8xbf16>, vector<2x8x32xbf16>, vector<2x8x32xf32> -> vector<2x8x32xf32>
    "tpu.trace_stop"() : () -> ()
    %326 = vector.shape_cast %325 : vector<2x8x32xf32> to vector<16x32xf32>
    %327 = arith.truncf %326 : vector<16x32xf32> to vector<16x32xbf16>
    %328 = vector.extract_strided_slice %218 {offsets = [64, 0], sizes = [32, 128], strides = [1, 1]} : vector<128x128xbf16> to vector<32x128xbf16>
    %cst_126 = arith.constant dense<0.000000e+00> : vector<16x128xf32>
    %329 = tpu.matmul %327, %328, %cst_126 {dimension_numbers = #tpu.dot_dimension_numbers<[1], [0], [0], [1], [0, 0, 1, 1], [], []>} : vector<16x32xbf16>, vector<32x128xbf16>, vector<16x128xf32> -> vector<16x128xf32>
    %330 = arith.addf %307, %329 : vector<16x128xf32>
    %331 = vector.extract_strided_slice %256 {offsets = [0, 0, 96], sizes = [2, 8, 32], strides = [1, 1, 1]} : vector<2x8x128xbf16> to vector<2x8x32xbf16>
    %332 = vector.extract_strided_slice %258 {offsets = [0, 0, 96], sizes = [2, 8, 32], strides = [1, 1, 1]} : vector<2x8x128xbf16> to vector<2x8x32xbf16>
    %333 = vector.extract_strided_slice %260 {offsets = [0, 0, 96], sizes = [2, 8, 32], strides = [1, 1, 1]} : vector<2x8x128xbf16> to vector<2x8x32xbf16>
    "tpu.trace_start"() <{level = 10 : i32, message = "bqd,bkd->bqk"}> : () -> ()
    %cst_127 = arith.constant dense<0.000000e+00> : vector<2x8x8xf32>
    %334 = tpu.matmul %331, %332, %cst_127 {dimension_numbers = #tpu.dot_dimension_numbers<[2], [2], [1], [1], [0, 0, 0, 1, 1, 1], [0], [0]>} : vector<2x8x32xbf16>, vector<2x8x32xbf16>, vector<2x8x8xf32> -> vector<2x8x8xf32>
    "tpu.trace_stop"() : () -> ()
    %cst_128 = arith.constant 0.176776692 : f32
    %335 = vector.broadcast %cst_128 : f32 to vector<2x8x8xf32>
    %336 = arith.mulf %334, %335 : vector<2x8x8xf32>
    %cst_129 = arith.constant dense<0xFF800000> : vector<2x8xf32>
    %337 = vector.multi_reduction <maximumf>, %336, %cst_129 [2] : vector<2x8x8xf32> to vector<2x8xf32>
    %338 = vector.shape_cast %337 : vector<2x8xf32> to vector<2x8x1xf32>
    %339 = vector.broadcast %338 : vector<2x8x1xf32> to vector<2x8x8xf32>
    %340 = arith.subf %336, %339 : vector<2x8x8xf32>
    %341 = math.exp %340 : vector<2x8x8xf32>
    %cst_130 = arith.constant dense<0.000000e+00> : vector<2x8xf32>
    %342 = vector.multi_reduction <add>, %341, %cst_130 [2] : vector<2x8x8xf32> to vector<2x8xf32>
    %343 = vector.shape_cast %342 : vector<2x8xf32> to vector<2x8x1xf32>
    %344 = tpu.reciprocal %343 {approx = true} : vector<2x8x1xf32> -> vector<2x8x1xf32>
    %345 = vector.broadcast %344 : vector<2x8x1xf32> to vector<2x8x8xf32>
    %346 = arith.mulf %341, %345 : vector<2x8x8xf32>
    %347 = arith.truncf %346 : vector<2x8x8xf32> to vector<2x8x8xbf16>
    "tpu.trace_start"() <{level = 10 : i32, message = "bqk,bkd->bqd"}> : () -> ()
    %cst_131 = arith.constant dense<0.000000e+00> : vector<2x8x32xf32>
    %348 = tpu.matmul %347, %333, %cst_131 {dimension_numbers = #tpu.dot_dimension_numbers<[2], [1], [1], [2], [0, 0, 0, 1, 1, 2], [0], [0]>} : vector<2x8x8xbf16>, vector<2x8x32xbf16>, vector<2x8x32xf32> -> vector<2x8x32xf32>
    "tpu.trace_stop"() : () -> ()
    %349 = vector.shape_cast %348 : vector<2x8x32xf32> to vector<16x32xf32>
    %350 = arith.truncf %349 : vector<16x32xf32> to vector<16x32xbf16>
    %351 = vector.extract_strided_slice %218 {offsets = [96, 0], sizes = [32, 128], strides = [1, 1]} : vector<128x128xbf16> to vector<32x128xbf16>
    %cst_132 = arith.constant dense<0.000000e+00> : vector<16x128xf32>
    %352 = tpu.matmul %350, %351, %cst_132 {dimension_numbers = #tpu.dot_dimension_numbers<[1], [0], [0], [1], [0, 0, 1, 1], [], []>} : vector<16x32xbf16>, vector<32x128xbf16>, vector<16x128xf32> -> vector<16x128xf32>
    %353 = arith.addf %330, %352 : vector<16x128xf32>
    %354 = arith.addf %214, %353 : vector<16x128xf32>
    %355 = vector.broadcast %219 : vector<1x128xf32> to vector<16x128xf32>
    %356 = arith.addf %354, %355 : vector<16x128xf32>
    %cst_133 = arith.constant dense<0.000000e+00> : vector<16xf32>
    %357 = vector.multi_reduction <add>, %356, %cst_133 [1] : vector<16x128xf32> to vector<16xf32>
    %358 = vector.shape_cast %357 : vector<16xf32> to vector<16x1xf32>
    %cst_134 = arith.constant 1.280000e+02 : f32
    %359 = vector.broadcast %cst_134 : f32 to vector<16x1xf32>
    %360 = arith.divf %358, %359 : vector<16x1xf32>
    %361 = vector.broadcast %360 : vector<16x1xf32> to vector<16x128xf32>
    %362 = arith.subf %356, %361 : vector<16x128xf32>
    %363 = arith.mulf %362, %362 : vector<16x128xf32>
    %cst_135 = arith.constant dense<0.000000e+00> : vector<16xf32>
    %364 = vector.multi_reduction <add>, %363, %cst_135 [1] : vector<16x128xf32> to vector<16xf32>
    %365 = vector.shape_cast %364 : vector<16xf32> to vector<16x1xf32>
    %cst_136 = arith.constant 1.280000e+02 : f32
    %366 = vector.broadcast %cst_136 : f32 to vector<16x1xf32>
    %367 = arith.divf %365, %366 : vector<16x1xf32>
    %368 = vector.broadcast %360 : vector<16x1xf32> to vector<16x128xf32>
    %369 = arith.subf %356, %368 : vector<16x128xf32>
    %cst_137 = arith.constant 9.99999974E-6 : f32
    %370 = vector.broadcast %cst_137 : f32 to vector<16x1xf32>
    %371 = arith.addf %367, %370 : vector<16x1xf32>
    %372 = math.rsqrt %371 : vector<16x1xf32>
    %373 = vector.broadcast %372 : vector<16x1xf32> to vector<16x128xf32>
    %374 = arith.mulf %369, %373 : vector<16x128xf32>
    %375 = vector.broadcast %220 : vector<1x128xf32> to vector<16x128xf32>
    %376 = arith.mulf %374, %375 : vector<16x128xf32>
    %377 = vector.broadcast %221 : vector<1x128xf32> to vector<16x128xf32>
    %378 = arith.addf %376, %377 : vector<16x128xf32>
    %379 = arith.truncf %378 : vector<16x128xf32> to vector<16x128xbf16>
    %cst_138 = arith.constant dense<0.000000e+00> : vector<16x512xf32>
    %380 = tpu.matmul %379, %222, %cst_138 {dimension_numbers = #tpu.dot_dimension_numbers<[1], [0], [0], [1], [0, 0, 1, 1], [], []>} : vector<16x128xbf16>, vector<128x512xbf16>, vector<16x512xf32> -> vector<16x512xf32>
    %381 = vector.broadcast %223 : vector<1x512xf32> to vector<16x512xf32>
    %382 = arith.addf %380, %381 : vector<16x512xf32>
    %cst_139 = arith.constant 5.000000e-01 : f32
    %383 = vector.broadcast %cst_139 : f32 to vector<16x512xf32>
    %384 = arith.mulf %383, %382 : vector<16x512xf32>
    %cst_140 = arith.constant 0.707106769 : f32
    %385 = vector.broadcast %cst_140 : f32 to vector<16x512xf32>
    %386 = arith.mulf %382, %385 : vector<16x512xf32>
    %387 = math.absf %386 : vector<16x512xf32>
    %cst_141 = arith.constant 0.327591091 : f32
    %388 = vector.broadcast %cst_141 : f32 to vector<16x512xf32>
    %389 = arith.mulf %388, %387 : vector<16x512xf32>
    %cst_142 = arith.constant 1.000000e+00 : f32
    %390 = vector.broadcast %cst_142 : f32 to vector<16x512xf32>
    %391 = arith.addf %390, %389 : vector<16x512xf32>
    %cst_143 = arith.constant 1.000000e+00 : f32
    %392 = vector.broadcast %cst_143 : f32 to vector<16x512xf32>
    %393 = arith.divf %392, %391 : vector<16x512xf32>
    %cst_144 = arith.constant 1.06140542 : f32
    %394 = vector.broadcast %cst_144 : f32 to vector<16x512xf32>
    %395 = arith.mulf %394, %393 : vector<16x512xf32>
    %cst_145 = arith.constant -1.45315206 : f32
    %396 = vector.broadcast %cst_145 : f32 to vector<16x512xf32>
    %397 = arith.addf %395, %396 : vector<16x512xf32>
    %398 = arith.mulf %397, %393 : vector<16x512xf32>
    %cst_146 = arith.constant 1.42141378 : f32
    %399 = vector.broadcast %cst_146 : f32 to vector<16x512xf32>
    %400 = arith.addf %398, %399 : vector<16x512xf32>
    %401 = arith.mulf %400, %393 : vector<16x512xf32>
    %cst_147 = arith.constant -0.284496725 : f32
    %402 = vector.broadcast %cst_147 : f32 to vector<16x512xf32>
    %403 = arith.addf %401, %402 : vector<16x512xf32>
    %404 = arith.mulf %403, %393 : vector<16x512xf32>
    %cst_148 = arith.constant 0.254829586 : f32
    %405 = vector.broadcast %cst_148 : f32 to vector<16x512xf32>
    %406 = arith.addf %404, %405 : vector<16x512xf32>
    %407 = arith.mulf %406, %393 : vector<16x512xf32>
    %cst_149 = arith.constant 0.000000e+00 : f32
    %408 = vector.broadcast %cst_149 : f32 to vector<16x512xf32>
    %409 = arith.subf %408, %387 : vector<16x512xf32>
    %410 = arith.mulf %409, %387 : vector<16x512xf32>
    %411 = math.exp %410 : vector<16x512xf32>
    %412 = arith.mulf %407, %411 : vector<16x512xf32>
    %cst_150 = arith.constant 1.000000e+00 : f32
    %413 = vector.broadcast %cst_150 : f32 to vector<16x512xf32>
    %414 = arith.subf %413, %412 : vector<16x512xf32>
    %cst_151 = arith.constant 0.000000e+00 : f32
    %415 = vector.broadcast %cst_151 : f32 to vector<16x512xf32>
    %416 = arith.cmpf oge, %386, %415 : vector<16x512xf32>
    %cst_152 = arith.constant 0.000000e+00 : f32
    %417 = vector.broadcast %cst_152 : f32 to vector<16x512xf32>
    %418 = arith.subf %417, %414 : vector<16x512xf32>
    %419 = arith.select %416, %414, %418 : vector<16x512xi1>, vector<16x512xf32>
    %cst_153 = arith.constant 1.000000e+00 : f32
    %420 = vector.broadcast %cst_153 : f32 to vector<16x512xf32>
    %421 = arith.addf %420, %419 : vector<16x512xf32>
    %422 = arith.mulf %384, %421 : vector<16x512xf32>
    %423 = arith.truncf %422 : vector<16x512xf32> to vector<16x512xbf16>
    %cst_154 = arith.constant dense<0.000000e+00> : vector<16x128xf32>
    %424 = tpu.matmul %423, %224, %cst_154 {dimension_numbers = #tpu.dot_dimension_numbers<[1], [0], [0], [1], [0, 0, 1, 1], [], []>} : vector<16x512xbf16>, vector<512x128xbf16>, vector<16x128xf32> -> vector<16x128xf32>
    %425 = vector.broadcast %225 : vector<1x128xf32> to vector<16x128xf32>
    %426 = arith.addf %424, %425 : vector<16x128xf32>
    %427 = arith.addf %356, %426 : vector<16x128xf32>
    %c0_155 = arith.constant 0 : index
    %c0_156 = arith.constant 0 : index
    %428 = vector.load %arg23[%c0_155, %c0_156] : memref<1x128xf32, #tpu.memory_space<vmem>>, vector<1x128xf32>
    %c0_157 = arith.constant 0 : index
    %c0_158 = arith.constant 0 : index
    %429 = vector.load %arg24[%c0_157, %c0_158] : memref<1x128xf32, #tpu.memory_space<vmem>>, vector<1x128xf32>
    %cst_159 = arith.constant dense<0.000000e+00> : vector<16xf32>
    %430 = vector.multi_reduction <add>, %427, %cst_159 [1] : vector<16x128xf32> to vector<16xf32>
    %431 = vector.shape_cast %430 : vector<16xf32> to vector<16x1xf32>
    %cst_160 = arith.constant 1.280000e+02 : f32
    %432 = vector.broadcast %cst_160 : f32 to vector<16x1xf32>
    %433 = arith.divf %431, %432 : vector<16x1xf32>
    %434 = vector.broadcast %433 : vector<16x1xf32> to vector<16x128xf32>
    %435 = arith.subf %427, %434 : vector<16x128xf32>
    %436 = arith.mulf %435, %435 : vector<16x128xf32>
    %cst_161 = arith.constant dense<0.000000e+00> : vector<16xf32>
    %437 = vector.multi_reduction <add>, %436, %cst_161 [1] : vector<16x128xf32> to vector<16xf32>
    %438 = vector.shape_cast %437 : vector<16xf32> to vector<16x1xf32>
    %cst_162 = arith.constant 1.280000e+02 : f32
    %439 = vector.broadcast %cst_162 : f32 to vector<16x1xf32>
    %440 = arith.divf %438, %439 : vector<16x1xf32>
    %441 = vector.broadcast %433 : vector<16x1xf32> to vector<16x128xf32>
    %442 = arith.subf %427, %441 : vector<16x128xf32>
    %cst_163 = arith.constant 9.99999974E-6 : f32
    %443 = vector.broadcast %cst_163 : f32 to vector<16x1xf32>
    %444 = arith.addf %440, %443 : vector<16x1xf32>
    %445 = math.rsqrt %444 : vector<16x1xf32>
    %446 = vector.broadcast %445 : vector<16x1xf32> to vector<16x128xf32>
    %447 = arith.mulf %442, %446 : vector<16x128xf32>
    %448 = vector.broadcast %428 : vector<1x128xf32> to vector<16x128xf32>
    %449 = arith.mulf %447, %448 : vector<16x128xf32>
    %450 = vector.broadcast %429 : vector<1x128xf32> to vector<16x128xf32>
    %451 = arith.addf %449, %450 : vector<16x128xf32>
    %452 = vector.shape_cast %451 : vector<16x128xf32> to vector<2x8x128xf32>
    %c0_164 = arith.constant 0 : index
    %c0_165 = arith.constant 0 : index
    %c0_166 = arith.constant 0 : index
    %453 = vector.load %arg25[%c0_164, %c0_165, %c0_166] : memref<2x8x128xf32, #tpu.memory_space<vmem>>, vector<2x8x128xf32>
    tpu.vector_store %arg25[%c0_164, %c0_165, %c0_166], %452 {strides = array<i32>} : memref<2x8x128xf32, #tpu.memory_space<vmem>>, vector<2x8x128xf32>,
    return
  }
}

</mosaic_0001>

<llo_original>
// kernel: _decoder_fused.1
$region0: #{_decoder_fused.1}
  #allocation0 [shape = 'u32[]', space=smem, size = 0x4, offset = 0x4, fixed_abs, tag = 'smem constant byte address 0x4 - core index']
  #allocation1 [shape = 'u32[144,128]{1,0:T(1,128)}', space=vmem, size = 0x12000, scoped, tag = 'internal scratch']
  %s0 = inlined_call_operand.hbm [shape: f32[2,8,128], index: 0, kind: input, shape index: {}]
  %s1 = inlined_call_operand.vmem [shape: f32[1,128], index: 1, kind: input, shape index: {}]
  %s2 = inlined_call_operand.hbm [shape: f32[1,128], index: 2, kind: input, shape index: {}]
  %s3 = inlined_call_operand.hbm [shape: bf16[128,384], index: 3, kind: input, shape index: {}]
  %s4 = inlined_call_operand.hbm [shape: bf16[128,128], index: 4, kind: input, shape index: {}]
  %s5 = inlined_call_operand.hbm [shape: f32[1,128], index: 5, kind: input, shape index: {}]
  %s6 = inlined_call_operand.vmem [shape: f32[1,128], index: 6, kind: input, shape index: {}]
  %s7 = inlined_call_operand.vmem [shape: f32[1,128], index: 7, kind: input, shape index: {}]
  %s8 = inlined_call_operand.hbm [shape: bf16[128,512], index: 8, kind: input, shape index: {}]
  %s9 = inlined_call_operand.vmem [shape: f32[1,512], index: 9, kind: input, shape index: {}]
  %s10 = inlined_call_operand.hbm [shape: bf16[512,128], index: 10, kind: input, shape index: {}]
  %s11 = inlined_call_operand.vmem [shape: f32[1,128], index: 11, kind: input, shape index: {}]
  %s12 = inlined_call_operand.vmem [shape: f32[1,128], index: 12, kind: input, shape index: {}]
  %s13 = inlined_call_operand.vmem [shape: f32[1,128], index: 13, kind: input, shape index: {}]
  %s14 = inlined_call_operand.hbm [shape: bf16[128,384], index: 14, kind: input, shape index: {}]
  %s15 = inlined_call_operand.hbm [shape: bf16[128,128], index: 15, kind: input, shape index: {}]
  %s16 = inlined_call_operand.vmem [shape: f32[1,128], index: 16, kind: input, shape index: {}]
  %s17 = inlined_call_operand.vmem [shape: f32[1,128], index: 17, kind: input, shape index: {}]
  %s18 = inlined_call_operand.vmem [shape: f32[1,128], index: 18, kind: input, shape index: {}]
  %s19 = inlined_call_operand.hbm [shape: bf16[128,512], index: 19, kind: input, shape index: {}]
  %s20 = inlined_call_operand.vmem [shape: f32[1,512], index: 20, kind: input, shape index: {}]
  %s21 = inlined_call_operand.hbm [shape: bf16[512,128], index: 21, kind: input, shape index: {}]
  %s22 = inlined_call_operand.vmem [shape: f32[1,128], index: 22, kind: input, shape index: {}]
  %s23 = inlined_call_operand.vmem [shape: f32[1,128], index: 23, kind: input, shape index: {}]
  %s24 = inlined_call_operand.vmem [shape: f32[1,128], index: 24, kind: input, shape index: {}]
  %s25 = inlined_call_operand.hbm [shape: f32[2,8,128], index: 25, kind: output, shape index: {}]
  %s26 = sld [smem:[#allocation0]]
  $region154: #{_decoder_fused.1} parent=0
    _
  %s28 = ssub.s32 1, %s26
  %s29 = scalar_select 0, %s28, %s26
  $region1: #{_decoder_fused.1} parent=0
    #allocation2 [shape = 'u8[8192]{0}', space=vmem, size = 0x2000, scoped, tag = 'input window, operand 0, single buffered']
    #allocation3 [shape = 's32[1]{0}', space=sflag, size = 0x4, scoped, tag = 'scoped memory for _decoder_fused.1']
    #allocation4 [shape = 's32[1]{0}', space=sflag, size = 0x4, scoped, tag = 'scoped memory for _decoder_fused.1']
    #allocation5 [shape = 'u8[512]{0}', space=vmem, size = 0x400, scoped, tag = 'input window, operand 2, single buffered']
    #allocation6 [shape = 's32[1]{0}', space=sflag, size = 0x4, scoped, tag = 'scoped memory for _decoder_fused.1']
    #allocation7 [shape = 'u8[98304]{0}', space=vmem, size = 0x18000, scoped, tag = 'input window, operand 3, single buffered']
    #allocation8 [shape = 'u8[32768]{0}', space=vmem, size = 0x8000, scoped, tag = 'input window, operand 4, single buffered']
    #allocation9 [shape = 's32[1]{0}', space=sflag, size = 0x4, scoped, tag = 'scoped memory for _decoder_fused.1']
    #allocation10 [shape = 'u8[512]{0}', space=vmem, size = 0x400, scoped, tag = 'input window, operand 5, single buffered']
    #allocation11 [shape = 'u8[131072]{0}', space=vmem, size = 0x20000, scoped, tag = 'input window, operand 8, single buffered']
    #allocation12 [shape = 's32[1]{0}', space=sflag, size = 0x4, scoped, tag = 'scoped memory for _decoder_fused.1']
    #allocation13 [shape = 'u8[131072]{0}', space=vmem, size = 0x20000, scoped, tag = 'input window, operand 10, single buffered']
    #allocation14 [shape = 'u8[98304]{0}', space=vmem, size = 0x18000, scoped, tag = 'input window, operand 14, single buffered']
    #allocation15 [shape = 's32[1]{0}', space=sflag, size = 0x4, scoped, tag = 'scoped memory for _decoder_fused.1']
    #allocation16 [shape = 'u8[32768]{0}', space=vmem, size = 0x8000, scoped, tag = 'input window, operand 15, single buffered']
    #allocation17 [shape = 'u8[131072]{0}', space=vmem, size = 0x20000, scoped, tag = 'input window, operand 19, single buffered']
    #allocation18 [shape = 's32[1]{0}', space=sflag, size = 0x4, scoped, tag = 'scoped memory for _decoder_fused.1']
    #allocation19 [shape = 'u8[131072]{0}', space=vmem, size = 0x20000, scoped, tag = 'input window, operand 21, single buffered']
    #allocation20 [shape = 'u8[8192]{0}', space=vmem, size = 0x2000, scoped, tag = 'output window, operand 0, single buffered']
    %30 = vsyncpa [#allocation3], 0
    %31 = vsyncpa [#allocation6], 0
    %32 = vsyncpa [#allocation9], 0
    %33 = vsyncpa [#allocation12], 0
    %34 = vsyncpa [#allocation15], 0
    %35 = vsyncpa [#allocation18], 0
    %36 = vsyncpa [#allocation4], 0
    // Predicated region
    $region2: #{_decoder_fused.1} parent=1 // pred_check
      _
    $region3: #{_decoder_fused.1} parent=1 // pred_check_branch
      %38 = sbr.rel (0) target = $region5
    $region4: #{_decoder_fused.1} parent=1 // pred_region
      %s40 = ssub.s32 256, 256
      %41 = vsyncadd [#allocation3], %s40
      %s42 = sshll.u32 [#allocation2], 4
      %s43 = int_to_ptr.vmem [resolvable:$true] %s42
      %48 = dma.hbm_to_vmem [thread:$0]  %s0, 256, %s43, [#allocation3], 128, 128, 8
    $region5: #{_decoder_fused.1} parent=1 // pred_fallthru
      _
    // Predicated region
    $region6: #{_decoder_fused.1} parent=1 // pred_check
      _
    $region7: #{_decoder_fused.1} parent=1 // pred_check_branch
      %50 = sbr.rel (0) target = $region9
    $region8: #{_decoder_fused.1} parent=1 // pred_region
      _
    $region9: #{_decoder_fused.1} parent=1 // pred_fallthru
      _
    // Predicated region
    $region10: #{_decoder_fused.1} parent=1 // pred_check
      _
    $region11: #{_decoder_fused.1} parent=1 // pred_check_branch
      %52 = sbr.rel (0) target = $region13
    $region12: #{_decoder_fused.1} parent=1 // pred_region
      %s54 = ssub.s32 16, 16
      %55 = vsyncadd [#allocation6], %s54
      %s57 = sshll.u32 [#allocation5], 4
      %s58 = int_to_ptr.vmem [resolvable:$true] %s57
      %60 = dma.hbm_to_vmem [thread:$0]  %s2, 16, %s58, [#allocation6]
    $region13: #{_decoder_fused.1} parent=1 // pred_fallthru
      _
    // Predicated region
    $region14: #{_decoder_fused.1} parent=1 // pred_check
      _
    $region15: #{_decoder_fused.1} parent=1 // pred_check_branch
      %62 = sbr.rel (0) target = $region17
    $region16: #{_decoder_fused.1} parent=1 // pred_region
      %s64 = ssub.s32 3072, 3072
      %65 = vsyncadd [#allocation6], %s64
      %s66 = sshll.u32 [#allocation7], 4
      %s67 = int_to_ptr.vmem [resolvable:$true] %s66
      %72 = dma.hbm_to_vmem [thread:$0]  %s3, 3072, %s67, [#allocation6], 192, 192, 12
    $region17: #{_decoder_fused.1} parent=1 // pred_fallthru
      _
    // Predicated region
    $region18: #{_decoder_fused.1} parent=1 // pred_check
      _
    $region19: #{_decoder_fused.1} parent=1 // pred_check_branch
      %74 = sbr.rel (0) target = $region21
    $region20: #{_decoder_fused.1} parent=1 // pred_region
      %s76 = ssub.s32 1024, 1024
      %77 = vsyncadd [#allocation9], %s76
      %s78 = sshll.u32 [#allocation8], 4
      %s79 = int_to_ptr.vmem [resolvable:$true] %s78
      %84 = dma.hbm_to_vmem [thread:$0]  %s4, 1024, %s79, [#allocation9], 64, 64, 4
    $region21: #{_decoder_fused.1} parent=1 // pred_fallthru
      _
    // Predicated region
    $region22: #{_decoder_fused.1} parent=1 // pred_check
      _
    $region23: #{_decoder_fused.1} parent=1 // pred_check_branch
      %86 = sbr.rel (0) target = $region25
    $region24: #{_decoder_fused.1} parent=1 // pred_region
      %s88 = ssub.s32 16, 16
      %89 = vsyncadd [#allocation9], %s88
      %s91 = sshll.u32 [#allocation10], 4
      %s92 = int_to_ptr.vmem [resolvable:$true] %s91
      %94 = dma.hbm_to_vmem [thread:$0]  %s5, 16, %s92, [#allocation9]
    $region25: #{_decoder_fused.1} parent=1 // pred_fallthru
      _
    // Predicated region
    $region26: #{_decoder_fused.1} parent=1 // pred_check
      _
    $region27: #{_decoder_fused.1} parent=1 // pred_check_branch
      %96 = sbr.rel (0) target = $region29
    $region28: #{_decoder_fused.1} parent=1 // pred_region
      _
    $region29: #{_decoder_fused.1} parent=1 // pred_fallthru
      _
    // Predicated region
    $region30: #{_decoder_fused.1} parent=1 // pred_check
      _
    $region31: #{_decoder_fused.1} parent=1 // pred_check_branch
      %98 = sbr.rel (0) target = $region33
    $region32: #{_decoder_fused.1} parent=1 // pred_region
      _
    $region33: #{_decoder_fused.1} parent=1 // pred_fallthru
      _
    // Predicated region
    $region34: #{_decoder_fused.1} parent=1 // pred_check
      _
    $region35: #{_decoder_fused.1} parent=1 // pred_check_branch
      %100 = sbr.rel (0) target = $region37
    $region36: #{_decoder_fused.1} parent=1 // pred_region
      %s102 = ssub.s32 4096, 4096
      %103 = vsyncadd [#allocation12], %s102
      %s104 = sshll.u32 [#allocation11], 4
      %s105 = int_to_ptr.vmem [resolvable:$true] %s104
      %110 = dma.hbm_to_vmem [thread:$0]  %s8, 4096, %s105, [#allocation12], 256, 256, 16
    $region37: #{_decoder_fused.1} parent=1 // pred_fallthru
      _
    // Predicated region
    $region38: #{_decoder_fused.1} parent=1 // pred_check
      _
    $region39: #{_decoder_fused.1} parent=1 // pred_check_branch
      %112 = sbr.rel (0) target = $region41
    $region40: #{_decoder_fused.1} parent=1 // pred_region
      _
    $region41: #{_decoder_fused.1} parent=1 // pred_fallthru
      _
    // Predicated region
    $region42: #{_decoder_fused.1} parent=1 // pred_check
      _
    $region43: #{_decoder_fused.1} parent=1 // pred_check_branch
      %114 = sbr.rel (0) target = $region45
    $region44: #{_decoder_fused.1} parent=1 // pred_region
      %s116 = ssub.s32 4096, 4096
      %117 = vsyncadd [#allocation12], %s116
      %s118 = sshll.u32 [#allocation13], 4
      %s119 = int_to_ptr.vmem [resolvable:$true] %s118
      %124 = dma.hbm_to_vmem [thread:$0]  %s10, 4096, %s119, [#allocation12], 64, 64, 4
    $region45: #{_decoder_fused.1} parent=1 // pred_fallthru
      _
    // Predicated region
    $region46: #{_decoder_fused.1} parent=1 // pred_check
      _
    $region47: #{_decoder_fused.1} parent=1 // pred_check_branch
      %126 = sbr.rel (0) target = $region49
    $region48: #{_decoder_fused.1} parent=1 // pred_region
      _
    $region49: #{_decoder_fused.1} parent=1 // pred_fallthru
      _
    // Predicated region
    $region50: #{_decoder_fused.1} parent=1 // pred_check
      _
    $region51: #{_decoder_fused.1} parent=1 // pred_check_branch
      %128 = sbr.rel (0) target = $region53
    $region52: #{_decoder_fused.1} parent=1 // pred_region
      _
    $region53: #{_decoder_fused.1} parent=1 // pred_fallthru
      _
    // Predicated region
    $region54: #{_decoder_fused.1} parent=1 // pred_check
      _
    $region55: #{_decoder_fused.1} parent=1 // pred_check_branch
      %130 = sbr.rel (0) target = $region57
    $region56: #{_decoder_fused.1} parent=1 // pred_region
      _
    $region57: #{_decoder_fused.1} parent=1 // pred_fallthru
      _
    // Predicated region
    $region58: #{_decoder_fused.1} parent=1 // pred_check
      _
    $region59: #{_decoder_fused.1} parent=1 // pred_check_branch
      %132 = sbr.rel (0) target = $region61
    $region60: #{_decoder_fused.1} parent=1 // pred_region
      %s134 = ssub.s32 3072, 3072
      %135 = vsyncadd [#allocation15], %s134
      %s136 = sshll.u32 [#allocation14], 4
      %s137 = int_to_ptr.vmem [resolvable:$true] %s136
      %142 = dma.hbm_to_vmem [thread:$0]  %s14, 3072, %s137, [#allocation15], 192, 192, 12
    $region61: #{_decoder_fused.1} parent=1 // pred_fallthru
      _
    // Predicated region
    $region62: #{_decoder_fused.1} parent=1 // pred_check
      _
    $region63: #{_decoder_fused.1} parent=1 // pred_check_branch
      %144 = sbr.rel (0) target = $region65
    $region64: #{_decoder_fused.1} parent=1 // pred_region
      %s146 = ssub.s32 1024, 1024
      %147 = vsyncadd [#allocation15], %s146
      %s148 = sshll.u32 [#allocation16], 4
      %s149 = int_to_ptr.vmem [resolvable:$true] %s148
      %154 = dma.hbm_to_vmem [thread:$0]  %s15, 1024, %s149, [#allocation15], 64, 64, 4
    $region65: #{_decoder_fused.1} parent=1 // pred_fallthru
      _
    // Predicated region
    $region66: #{_decoder_fused.1} parent=1 // pred_check
      _
    $region67: #{_decoder_fused.1} parent=1 // pred_check_branch
      %156 = sbr.rel (0) target = $region69
    $region68: #{_decoder_fused.1} parent=1 // pred_region
      _
    $region69: #{_decoder_fused.1} parent=1 // pred_fallthru
      _
    // Predicated region
    $region70: #{_decoder_fused.1} parent=1 // pred_check
      _
    $region71: #{_decoder_fused.1} parent=1 // pred_check_branch
      %158 = sbr.rel (0) target = $region73
    $region72: #{_decoder_fused.1} parent=1 // pred_region
      _
    $region73: #{_decoder_fused.1} parent=1 // pred_fallthru
      _
    // Predicated region
    $region74: #{_decoder_fused.1} parent=1 // pred_check
      _
    $region75: #{_decoder_fused.1} parent=1 // pred_check_branch
      %160 = sbr.rel (0) target = $region77
    $region76: #{_decoder_fused.1} parent=1 // pred_region
      _
    $region77: #{_decoder_fused.1} parent=1 // pred_fallthru
      _
    // Predicated region
    $region78: #{_decoder_fused.1} parent=1 // pred_check
      _
    $region79: #{_decoder_fused.1} parent=1 // pred_check_branch
      %162 = sbr.rel (0) target = $region81
    $region80: #{_decoder_fused.1} parent=1 // pred_region
      %s164 = ssub.s32 4096, 4096
      %165 = vsyncadd [#allocation18], %s164
      %s166 = sshll.u32 [#allocation17], 4
      %s167 = int_to_ptr.vmem [resolvable:$true] %s166
      %172 = dma.hbm_to_vmem [thread:$0]  %s19, 4096, %s167, [#allocation18], 256, 256, 16
    $region81: #{_decoder_fused.1} parent=1 // pred_fallthru
      _
    // Predicated region
    $region82: #{_decoder_fused.1} parent=1 // pred_check
      _
    $region83: #{_decoder_fused.1} parent=1 // pred_check_branch
      %174 = sbr.rel (0) target = $region85
    $region84: #{_decoder_fused.1} parent=1 // pred_region
      _
    $region85: #{_decoder_fused.1} parent=1 // pred_fallthru
      _
    // Predicated region
    $region86: #{_decoder_fused.1} parent=1 // pred_check
      _
    $region87: #{_decoder_fused.1} parent=1 // pred_check_branch
      %176 = sbr.rel (0) target = $region89
    $region88: #{_decoder_fused.1} parent=1 // pred_region
      %s178 = ssub.s32 4096, 4096
      %179 = vsyncadd [#allocation18], %s178
      %s180 = sshll.u32 [#allocation19], 4
      %s181 = int_to_ptr.vmem [resolvable:$true] %s180
      %186 = dma.hbm_to_vmem [thread:$0]  %s21, 4096, %s181, [#allocation18], 64, 64, 4
    $region89: #{_decoder_fused.1} parent=1 // pred_fallthru
      _
    // Predicated region
    $region90: #{_decoder_fused.1} parent=1 // pred_check
      _
    $region91: #{_decoder_fused.1} parent=1 // pred_check_branch
      %188 = sbr.rel (0) target = $region93
    $region92: #{_decoder_fused.1} parent=1 // pred_region
      _
    $region93: #{_decoder_fused.1} parent=1 // pred_fallthru
      _
    // Predicated region
    $region94: #{_decoder_fused.1} parent=1 // pred_check
      _
    $region95: #{_decoder_fused.1} parent=1 // pred_check_branch
      %190 = sbr.rel (0) target = $region97
    $region96: #{_decoder_fused.1} parent=1 // pred_region
      _
    $region97: #{_decoder_fused.1} parent=1 // pred_fallthru
      _
    // Predicated region
    $region98: #{_decoder_fused.1} parent=1 // pred_check
      _
    $region99: #{_decoder_fused.1} parent=1 // pred_check_branch
      %192 = sbr.rel (0) target = $region101
    $region100: #{_decoder_fused.1} parent=1 // pred_region
      _
    $region101: #{_decoder_fused.1} parent=1 // pred_fallthru
      _
    // Predicated region
    $region102: #{_decoder_fused.1} parent=1 // pred_check
      _
    $region103: #{_decoder_fused.1} parent=1 // pred_check_branch
      %194 = sbr.rel (0) target = $region105
    $region104: #{_decoder_fused.1} parent=1 // pred_region
      %195 = dma.done [#allocation3], 256
    $region105: #{_decoder_fused.1} parent=1 // pred_fallthru
      _
    // Predicated region
    $region106: #{_decoder_fused.1} parent=1 // pred_check
      _
    $region107: #{_decoder_fused.1} parent=1 // pred_check_branch
      %197 = sbr.rel (0) target = $region109
    $region108: #{_decoder_fused.1} parent=1 // pred_region
      %198 = dma.done [#allocation6], 16
    $region109: #{_decoder_fused.1} parent=1 // pred_fallthru
      _
    // Predicated region
    $region110: #{_decoder_fused.1} parent=1 // pred_check
      _
    $region111: #{_decoder_fused.1} parent=1 // pred_check_branch
      %200 = sbr.rel (0) target = $region113
    $region112: #{_decoder_fused.1} parent=1 // pred_region
      %201 = dma.done [#allocation6], 3072
    $region113: #{_decoder_fused.1} parent=1 // pred_fallthru
      _
    // Predicated region
    $region114: #{_decoder_fused.1} parent=1 // pred_check
      _
    $region115: #{_decoder_fused.1} parent=1 // pred_check_branch
      %203 = sbr.rel (0) target = $region117
    $region116: #{_decoder_fused.1} parent=1 // pred_region
      %204 = dma.done [#allocation9], 1024
    $region117: #{_decoder_fused.1} parent=1 // pred_fallthru
      _
    // Predicated region
    $region118: #{_decoder_fused.1} parent=1 // pred_check
      _
    $region119: #{_decoder_fused.1} parent=1 // pred_check_branch
      %206 = sbr.rel (0) target = $region121
    $region120: #{_decoder_fused.1} parent=1 // pred_region
      %207 = dma.done [#allocation9], 16
    $region121: #{_decoder_fused.1} parent=1 // pred_fallthru
      _
    // Predicated region
    $region122: #{_decoder_fused.1} parent=1 // pred_check
      _
    $region123: #{_decoder_fused.1} parent=1 // pred_check_branch
      %209 = sbr.rel (0) target = $region125
    $region124: #{_decoder_fused.1} parent=1 // pred_region
      %210 = dma.done [#allocation12], 4096
    $region125: #{_decoder_fused.1} parent=1 // pred_fallthru
      _
    // Predicated region
    $region126: #{_decoder_fused.1} parent=1 // pred_check
      _
    $region127: #{_decoder_fused.1} parent=1 // pred_check_branch
      %212 = sbr.rel (0) target = $region129
    $region128: #{_decoder_fused.1} parent=1 // pred_region
      %213 = dma.done [#allocation12], 4096
    $region129: #{_decoder_fused.1} parent=1 // pred_fallthru
      _
    // Predicated region
    $region130: #{_decoder_fused.1} parent=1 // pred_check
      _
    $region131: #{_decoder_fused.1} parent=1 // pred_check_branch
      %215 = sbr.rel (0) target = $region133
    $region132: #{_decoder_fused.1} parent=1 // pred_region
      %216 = dma.done [#allocation15], 3072
    $region133: #{_decoder_fused.1} parent=1 // pred_fallthru
      _
    // Predicated region
    $region134: #{_decoder_fused.1} parent=1 // pred_check
      _
    $region135: #{_decoder_fused.1} parent=1 // pred_check_branch
      %218 = sbr.rel (0) target = $region137
    $region136: #{_decoder_fused.1} parent=1 // pred_region
      %219 = dma.done [#allocation15], 1024
    $region137: #{_decoder_fused.1} parent=1 // pred_fallthru
      _
    // Predicated region
    $region138: #{_decoder_fused.1} parent=1 // pred_check
      _
    $region139: #{_decoder_fused.1} parent=1 // pred_check_branch
      %221 = sbr.rel (0) target = $region141
    $region140: #{_decoder_fused.1} parent=1 // pred_region
      %222 = dma.done [#allocation18], 4096
    $region141: #{_decoder_fused.1} parent=1 // pred_fallthru
      _
    // Predicated region
    $region142: #{_decoder_fused.1} parent=1 // pred_check
      _
    $region143: #{_decoder_fused.1} parent=1 // pred_check_branch
      %224 = sbr.rel (0) target = $region145
    $region144: #{_decoder_fused.1} parent=1 // pred_region
      %225 = dma.done [#allocation18], 4096
    $region145: #{_decoder_fused.1} parent=1 // pred_fallthru
      _
    %v227 = vld [vmem:[#allocation2] sm:$0xff]
    %v228 = vld [vmem:[#allocation2 + $0x8] sm:$0xff]
    %v229 = vld [vmem:[%s1] sm:$0x1]
    %v230 = vld [vmem:[#allocation5] sm:$0x1]
    %v231 = vld [vmem:[#allocation7] sm:$0xff]
    %v232 = vld [vmem:[#allocation7 + $0x8] sm:$0xf]
    %v233 = vld [vmem:[#allocation7 + $0xc] sm:$0xff]
    %v234 = vld [vmem:[#allocation7 + $0x14] sm:$0xf]
    %v235 = vld [vmem:[#allocation7 + $0x18] sm:$0xff]
    %v236 = vld [vmem:[#allocation7 + $0x20] sm:$0xf]
    %v237 = vld [vmem:[#allocation7 + $0x24] sm:$0xff]
    %v238 = vld [vmem:[#allocation7 + $0x2c] sm:$0xf]
    %v239 = vld [vmem:[#allocation7 + $0x30] sm:$0xff]
    %v240 = vld [vmem:[#allocation7 + $0x38] sm:$0xf]
    %v241 = vld [vmem:[#allocation7 + $0x3c] sm:$0xff]
    %v242 = vld [vmem:[#allocation7 + $0x44] sm:$0xf]
    %v243 = vld [vmem:[#allocation7 + $0x48] sm:$0xff]
    %v244 = vld [vmem:[#allocation7 + $0x50] sm:$0xf]
    %v245 = vld [vmem:[#allocation7 + $0x54] sm:$0xff]
    %v246 = vld [vmem:[#allocation7 + $0x5c] sm:$0xf]
    %v247 = vld [vmem:[#allocation7 + $0x60] sm:$0xff]
    %v248 = vld [vmem:[#allocation7 + $0x68] sm:$0xf]
    %v249 = vld [vmem:[#allocation7 + $0x6c] sm:$0xff]
    %v250 = vld [vmem:[#allocation7 + $0x74] sm:$0xf]
    %v251 = vld [vmem:[#allocation7 + $0x78] sm:$0xff]
    %v252 = vld [vmem:[#allocation7 + $0x80] sm:$0xf]
    %v253 = vld [vmem:[#allocation7 + $0x84] sm:$0xff]
    %v254 = vld [vmem:[#allocation7 + $0x8c] sm:$0xf]
    %v255 = vld [vmem:[#allocation7 + $0x90] sm:$0xff]
    %v256 = vld [vmem:[#allocation7 + $0x98] sm:$0xf]
    %v257 = vld [vmem:[#allocation7 + $0x9c] sm:$0xff]
    %v258 = vld [vmem:[#allocation7 + $0xa4] sm:$0xf]
    %v259 = vld [vmem:[#allocation7 + $0xa8] sm:$0xff]
    %v260 = vld [vmem:[#allocation7 + $0xb0] sm:$0xf]
    %v261 = vld [vmem:[#allocation7 + $0xb4] sm:$0xff]
    %v262 = vld [vmem:[#allocation7 + $0xbc] sm:$0xf]
    %v263 = vld [vmem:[#allocation8] sm:$0xf]
    %v264 = vld [vmem:[#allocation8 + $0x4] sm:$0xf]
    %v265 = vld [vmem:[#allocation8 + $0x8] sm:$0xf]
    %v266 = vld [vmem:[#allocation8 + $0xc] sm:$0xf]
    %v267 = vld [vmem:[#allocation8 + $0x10] sm:$0xf]
    %v268 = vld [vmem:[#allocation8 + $0x14] sm:$0xf]
    %v269 = vld [vmem:[#allocation8 + $0x18] sm:$0xf]
    %v270 = vld [vmem:[#allocation8 + $0x1c] sm:$0xf]
    %v271 = vld [vmem:[#allocation8 + $0x20] sm:$0xf]
    %v272 = vld [vmem:[#allocation8 + $0x24] sm:$0xf]
    %v273 = vld [vmem:[#allocation8 + $0x28] sm:$0xf]
    %v274 = vld [vmem:[#allocation8 + $0x2c] sm:$0xf]
    %v275 = vld [vmem:[#allocation8 + $0x30] sm:$0xf]
    %v276 = vld [vmem:[#allocation8 + $0x34] sm:$0xf]
    %v277 = vld [vmem:[#allocation8 + $0x38] sm:$0xf]
    %v278 = vld [vmem:[#allocation8 + $0x3c] sm:$0xf]
    %v279 = vld [vmem:[#allocation10] sm:$0x1]
    %v280 = vld [vmem:[%s6] sm:$0x1]
    %v281 = vld [vmem:[%s7] sm:$0x1]
    %v282 = vld [vmem:[#allocation11] sm:$0xff]
    %v283 = vld [vmem:[#allocation11 + $0x8] sm:$0xff]
    %v284 = vld [vmem:[#allocation11 + $0x10] sm:$0xff]
    %v285 = vld [vmem:[#allocation11 + $0x18] sm:$0xff]
    %v286 = vld [vmem:[#allocation11 + $0x20] sm:$0xff]
    %v287 = vld [vmem:[#allocation11 + $0x28] sm:$0xff]
    %v288 = vld [vmem:[#allocation11 + $0x30] sm:$0xff]
    %v289 = vld [vmem:[#allocation11 + $0x38] sm:$0xff]
    %v290 = vld [vmem:[#allocation11 + $0x40] sm:$0xff]
    %v291 = vld [vmem:[#allocation11 + $0x48] sm:$0xff]
    %v292 = vld [vmem:[#allocation11 + $0x50] sm:$0xff]
    %v293 = vld [vmem:[#allocation11 + $0x58] sm:$0xff]
    %v294 = vld [vmem:[#allocation11 + $0x60] sm:$0xff]
    %v295 = vld [vmem:[#allocation11 + $0x68] sm:$0xff]
    %v296 = vld [vmem:[#allocation11 + $0x70] sm:$0xff]
    %v297 = vld [vmem:[#allocation11 + $0x78] sm:$0xff]
    %v298 = vld [vmem:[#allocation11 + $0x80] sm:$0xff]
    %v299 = vld [vmem:[#allocation11 + $0x88] sm:$0xff]
    %v300 = vld [vmem:[#allocation11 + $0x90] sm:$0xff]
    %v301 = vld [vmem:[#allocation11 + $0x98] sm:$0xff]
    %v302 = vld [vmem:[#allocation11 + $0xa0] sm:$0xff]
    %v303 = vld [vmem:[#allocation11 + $0xa8] sm:$0xff]
    %v304 = vld [vmem:[#allocation11 + $0xb0] sm:$0xff]
    %v305 = vld [vmem:[#allocation11 + $0xb8] sm:$0xff]
    %v306 = vld [vmem:[#allocation11 + $0xc0] sm:$0xff]
    %v307 = vld [vmem:[#allocation11 + $0xc8] sm:$0xff]
    %v308 = vld [vmem:[#allocation11 + $0xd0] sm:$0xff]
    %v309 = vld [vmem:[#allocation11 + $0xd8] sm:$0xff]
    %v310 = vld [vmem:[#allocation11 + $0xe0] sm:$0xff]
    %v311 = vld [vmem:[#allocation11 + $0xe8] sm:$0xff]
    %v312 = vld [vmem:[#allocation11 + $0xf0] sm:$0xff]
    %v313 = vld [vmem:[#allocation11 + $0xf8] sm:$0xff]
    %v314 = vld [vmem:[%s9] sm:$0xf]
    %v315 = vld [vmem:[#allocation13] sm:$0xf]
    %v316 = vld [vmem:[#allocation13 + $0x4] sm:$0xf]
    %v317 = vld [vmem:[#allocation13 + $0x8] sm:$0xf]
    %v318 = vld [vmem:[#allocation13 + $0xc] sm:$0xf]
    %v319 = vld [vmem:[#allocation13 + $0x10] sm:$0xf]
    %v320 = vld [vmem:[#allocation13 + $0x14] sm:$0xf]
    %v321 = vld [vmem:[#allocation13 + $0x18] sm:$0xf]
    %v322 = vld [vmem:[#allocation13 + $0x1c] sm:$0xf]
    %v323 = vld [vmem:[#allocation13 + $0x20] sm:$0xf]
    %v324 = vld [vmem:[#allocation13 + $0x24] sm:$0xf]
    %v325 = vld [vmem:[#allocation13 + $0x28] sm:$0xf]
    %v326 = vld [vmem:[#allocation13 + $0x2c] sm:$0xf]
    %v327 = vld [vmem:[#allocation13 + $0x30] sm:$0xf]
    %v328 = vld [vmem:[#allocation13 + $0x34] sm:$0xf]
    %v329 = vld [vmem:[#allocation13 + $0x38] sm:$0xf]
    %v330 = vld [vmem:[#allocation13 + $0x3c] sm:$0xf]
    %v331 = vld [vmem:[#allocation13 + $0x40] sm:$0xf]
    %v332 = vld [vmem:[#allocation13 + $0x44] sm:$0xf]
    %v333 = vld [vmem:[#allocation13 + $0x48] sm:$0xf]
    %v334 = vld [vmem:[#allocation13 + $0x4c] sm:$0xf]
    %v335 = vld [vmem:[#allocation13 + $0x50] sm:$0xf]
    %v336 = vld [vmem:[#allocation13 + $0x54] sm:$0xf]
    %v337 = vld [vmem:[#allocation13 + $0x58] sm:$0xf]
    %v338 = vld [vmem:[#allocation13 + $0x5c] sm:$0xf]
    %v339 = vld [vmem:[#allocation13 + $0x60] sm:$0xf]
    %v340 = vld [vmem:[#allocation13 + $0x64] sm:$0xf]
    %v341 = vld [vmem:[#allocation13 + $0x68] sm:$0xf]
    %v342 = vld [vmem:[#allocation13 + $0x6c] sm:$0xf]
    %v343 = vld [vmem:[#allocation13 + $0x70] sm:$0xf]
    %v344 = vld [vmem:[#allocation13 + $0x74] sm:$0xf]
    %v345 = vld [vmem:[#allocation13 + $0x78] sm:$0xf]
    %v346 = vld [vmem:[#allocation13 + $0x7c] sm:$0xf]
    %v347 = vld [vmem:[#allocation13 + $0x80] sm:$0xf]
    %v348 = vld [vmem:[#allocation13 + $0x84] sm:$0xf]
    %v349 = vld [vmem:[#allocation13 + $0x88] sm:$0xf]
    %v350 = vld [vmem:[#allocation13 + $0x8c] sm:$0xf]
    %v351 = vld [vmem:[#allocation13 + $0x90] sm:$0xf]
    %v352 = vld [vmem:[#allocation13 + $0x94] sm:$0xf]
    %v353 = vld [vmem:[#allocation13 + $0x98] sm:$0xf]
    %v354 = vld [vmem:[#allocation13 + $0x9c] sm:$0xf]
    %v355 = vld [vmem:[#allocation13 + $0xa0] sm:$0xf]
    %v356 = vld [vmem:[#allocation13 + $0xa4] sm:$0xf]
    %v357 = vld [vmem:[#allocation13 + $0xa8] sm:$0xf]
    %v358 = vld [vmem:[#allocation13 + $0xac] sm:$0xf]
    %v359 = vld [vmem:[#allocation13 + $0xb0] sm:$0xf]
    %v360 = vld [vmem:[#allocation13 + $0xb4] sm:$0xf]
    %v361 = vld [vmem:[#allocation13 + $0xb8] sm:$0xf]
    %v362 = vld [vmem:[#allocation13 + $0xbc] sm:$0xf]
    %v363 = vld [vmem:[#allocation13 + $0xc0] sm:$0xf]
    %v364 = vld [vmem:[#allocation13 + $0xc4] sm:$0xf]
    %v365 = vld [vmem:[#allocation13 + $0xc8] sm:$0xf]
    %v366 = vld [vmem:[#allocation13 + $0xcc] sm:$0xf]
    %v367 = vld [vmem:[#allocation13 + $0xd0] sm:$0xf]
    %v368 = vld [vmem:[#allocation13 + $0xd4] sm:$0xf]
    %v369 = vld [vmem:[#allocation13 + $0xd8] sm:$0xf]
    %v370 = vld [vmem:[#allocation13 + $0xdc] sm:$0xf]
    %v371 = vld [vmem:[#allocation13 + $0xe0] sm:$0xf]
    %v372 = vld [vmem:[#allocation13 + $0xe4] sm:$0xf]
    %v373 = vld [vmem:[#allocation13 + $0xe8] sm:$0xf]
    %v374 = vld [vmem:[#allocation13 + $0xec] sm:$0xf]
    %v375 = vld [vmem:[#allocation13 + $0xf0] sm:$0xf]
    %v376 = vld [vmem:[#allocation13 + $0xf4] sm:$0xf]
    %v377 = vld [vmem:[#allocation13 + $0xf8] sm:$0xf]
    %v378 = vld [vmem:[#allocation13 + $0xfc] sm:$0xf]
    %v379 = vld [vmem:[%s11] sm:$0x1]
    %380 = vadd.xlane.f32.xlu0 %v227
    %v381 = vpop.xlane.xlu0 %380
    %382 = vadd.xlane.f32.xlu0 %v228
    %v383 = vpop.xlane.xlu0 %382
    %v384 = vrcp.pop 128.0
    %v385 = vmul.f32 %v381, %v384
    %v386 = vmul.f32 %v383, %v384
    %v387 = vsub.f32 %v227, %v385
    %v388 = vsub.f32 %v228, %v386
    %v389 = vmul.f32 %v387, %v387
    %v390 = vmul.f32 %v388, %v388
    %391 = vadd.xlane.f32.xlu0 %v389
    %v392 = vpop.xlane.xlu0 %391
    %393 = vadd.xlane.f32.xlu0 %v390
    %v394 = vpop.xlane.xlu0 %393
    %v395 = vmul.f32 %v392, %v384
    %v396 = vmul.f32 %v394, %v384
    %v397 = vadd.f32 %v395, 1e-05
    %v398 = vadd.f32 %v396, 1e-05
    %v399 = vrsqrt.pop %v397
    %v400 = vrsqrt.pop %v398
    %v401 = vmul.f32 %v387, %v399
    %v402 = vmul.f32 %v388, %v400
    %v404 = vlaneseq
    %v405 = vshrl.u32 %v404, 7
    %v406 = vsub.s32 0, %v405
    %v407 = vrot.slane %v229, %v406
    %v409 = vmul.f32 %v401, %v407
    %v410 = vmul.f32 %v402, %v407
    %v412 = vlaneseq
    %v413 = vshrl.u32 %v412, 7
    %v414 = vsub.s32 0, %v413
    %v415 = vrot.slane %v230, %v414
    %v417 = vadd.f32 %v409, %v415
    %v418 = vadd.f32 %v410, %v415
    %v419 = vpack.c.bf16 %v418, %v417
    %v436 = vunpack.c.l.b16 %v231
    %v437 = vunpack.c.l.b16 %v233
    %v438 = vunpack.c.l.b16 %v235
    %v439 = vunpack.c.l.b16 %v237
    %v440 = vunpack.c.l.b16 %v239
    %v441 = vunpack.c.l.b16 %v241
    %v442 = vunpack.c.l.b16 %v243
    %v443 = vunpack.c.l.b16 %v245
    %v444 = vunpack.c.l.b16 %v247
    %v445 = vunpack.c.l.b16 %v249
    %v446 = vunpack.c.l.b16 %v251
    %v447 = vunpack.c.l.b16 %v253
    %v448 = vunpack.c.l.b16 %v255
    %v449 = vunpack.c.l.b16 %v257
    %v450 = vunpack.c.l.b16 %v259
    %v451 = vunpack.c.l.b16 %v261
    %v452 = vpack.c.b16 %v437, %v436
    %v453 = vpack.c.b16 %v439, %v438
    %v454 = vpack.c.b16 %v441, %v440
    %v455 = vpack.c.b16 %v443, %v442
    %v456 = vpack.c.b16 %v445, %v444
    %v457 = vpack.c.b16 %v447, %v446
    %v458 = vpack.c.b16 %v449, %v448
    %v459 = vpack.c.b16 %v451, %v450
    %468 = vmatprep.subr.bf16.mxu0 0
    %469 = vmatpush1.bf16.msra.mxu0 %v459
    %470 = vmatprep.subr.bf16.mxu0 0
    %471 = vmatpush1.bf16.msra.mxu0 %v458
    %472 = vmatprep.subr.bf16.mxu0 0
    %473 = vmatpush1.bf16.msra.mxu0 %v457
    %474 = vmatprep.subr.bf16.mxu0 0
    %475 = vmatpush1.bf16.msra.mxu0 %v456
    %476 = vmatprep.subr.bf16.mxu0 0
    %477 = vmatpush1.bf16.msra.mxu0 %v455
    %478 = vmatprep.subr.bf16.mxu0 0
    %479 = vmatpush1.bf16.msra.mxu0 %v454
    %480 = vmatprep.subr.bf16.mxu0 0
    %481 = vmatpush1.bf16.msra.mxu0 %v453
    %482 = vmatprep.subr.bf16.mxu0 0
    %483 = vmatpush1.bf16.msra.mxu0 %v452
    %484 = vmatprep.subr.bf16.mxu0 0
    %485 = vmatpush2.bf16.msra.mxu0 0
    %486 = vmatprep.subr.bf16.mxu0 0
    %487 = vmatpush2.bf16.msra.mxu0 0
    %488 = vmatprep.subr.bf16.mxu0 0
    %489 = vmatpush2.bf16.msra.mxu0 0
    %490 = vmatprep.subr.bf16.mxu0 0
    %491 = vmatpush2.bf16.msra.mxu0 0
    %492 = vmatprep.subr.bf16.mxu0 0
    %493 = vmatpush2.bf16.msra.mxu0 0
    %494 = vmatprep.subr.bf16.mxu0 0
    %495 = vmatpush2.bf16.msra.mxu0 0
    %496 = vmatprep.subr.bf16.mxu0 0
    %497 = vmatpush2.bf16.msra.mxu0 0
    %498 = vmatprep.subr.bf16.mxu0 0
    %499 = vmatpush2.bf16.msra.mxu0 0
    %500 = vmatprep.mubr.bf16.mxu0 0
    %501 = vmatmul.mubr.bf16.gmra.mxu0 %v419
    %v502 = vpop.f32.mrf.mxu0
    %v503 = vadd.f32 0.0, %v502
    %v504 = vpop.f32.mrf.mxu0
    %v505 = vpop.f32.mrf.mxu0
    %v506 = vadd.f32 0.0, %v505
    %v507 = vpop.f32.mrf.mxu0
    %508 = vdwg.mxu0
    %v509 = vunpack.c.h.b16 %v231
    %v510 = vunpack.c.h.b16 %v233
    %v511 = vunpack.c.h.b16 %v235
    %v512 = vunpack.c.h.b16 %v237
    %v513 = vunpack.c.h.b16 %v239
    %v514 = vunpack.c.h.b16 %v241
    %v515 = vunpack.c.h.b16 %v243
    %v516 = vunpack.c.h.b16 %v245
    %v517 = vunpack.c.h.b16 %v247
    %v518 = vunpack.c.h.b16 %v249
    %v519 = vunpack.c.h.b16 %v251
    %v520 = vunpack.c.h.b16 %v253
    %v521 = vunpack.c.h.b16 %v255
    %v522 = vunpack.c.h.b16 %v257
    %v523 = vunpack.c.h.b16 %v259
    %v524 = vunpack.c.h.b16 %v261
    %v525 = vpack.c.b16 %v510, %v509
    %v526 = vpack.c.b16 %v512, %v511
    %v527 = vpack.c.b16 %v514, %v513
    %v528 = vpack.c.b16 %v516, %v515
    %v529 = vpack.c.b16 %v518, %v517
    %v530 = vpack.c.b16 %v520, %v519
    %v531 = vpack.c.b16 %v522, %v521
    %v532 = vpack.c.b16 %v524, %v523
    %541 = vmatprep.subr.bf16.mxu0 0
    %542 = vmatpush1.bf16.msra.mxu0 %v532
    %543 = vmatprep.subr.bf16.mxu0 0
    %544 = vmatpush1.bf16.msra.mxu0 %v531
    %545 = vmatprep.subr.bf16.mxu0 0
    %546 = vmatpush1.bf16.msra.mxu0 %v530
    %547 = vmatprep.subr.bf16.mxu0 0
    %548 = vmatpush1.bf16.msra.mxu0 %v529
    %549 = vmatprep.subr.bf16.mxu0 0
    %550 = vmatpush1.bf16.msra.mxu0 %v528
    %551 = vmatprep.subr.bf16.mxu0 0
    %552 = vmatpush1.bf16.msra.mxu0 %v527
    %553 = vmatprep.subr.bf16.mxu0 0
    %554 = vmatpush1.bf16.msra.mxu0 %v526
    %555 = vmatprep.subr.bf16.mxu0 0
    %556 = vmatpush1.bf16.msra.mxu0 %v525
    %557 = vmatprep.subr.bf16.mxu0 0
    %558 = vmatpush2.bf16.msra.mxu0 0
    %559 = vmatprep.subr.bf16.mxu0 0
    %560 = vmatpush2.bf16.msra.mxu0 0
    %561 = vmatprep.subr.bf16.mxu0 0
    %562 = vmatpush2.bf16.msra.mxu0 0
    %563 = vmatprep.subr.bf16.mxu0 0
    %564 = vmatpush2.bf16.msra.mxu0 0
    %565 = vmatprep.subr.bf16.mxu0 0
    %566 = vmatpush2.bf16.msra.mxu0 0
    %567 = vmatprep.subr.bf16.mxu0 0
    %568 = vmatpush2.bf16.msra.mxu0 0
    %569 = vmatprep.subr.bf16.mxu0 0
    %570 = vmatpush2.bf16.msra.mxu0 0
    %571 = vmatprep.subr.bf16.mxu0 0
    %572 = vmatpush2.bf16.msra.mxu0 0
    %573 = vmatprep.mubr.bf16.mxu0 0
    %574 = vmatmul.mubr.bf16.gmra.mxu0 %v419
    %v575 = vpop.f32.mrf.mxu0
    %v576 = vadd.f32 0.0, %v575
    %v577 = vpop.f32.mrf.mxu0
    %v578 = vpop.f32.mrf.mxu0
    %v579 = vadd.f32 0.0, %v578
    %v580 = vpop.f32.mrf.mxu0
    %581 = vdwg.mxu0
    %v598 = vunpack.c.l.b16 %v232
    %v599 = vunpack.c.l.b16 %v234
    %v600 = vunpack.c.l.b16 %v236
    %v601 = vunpack.c.l.b16 %v238
    %v602 = vunpack.c.l.b16 %v240
    %v603 = vunpack.c.l.b16 %v242
    %v604 = vunpack.c.l.b16 %v244
    %v605 = vunpack.c.l.b16 %v246
    %v606 = vunpack.c.l.b16 %v248
    %v607 = vunpack.c.l.b16 %v250
    %v608 = vunpack.c.l.b16 %v252
    %v609 = vunpack.c.l.b16 %v254
    %v610 = vunpack.c.l.b16 %v256
    %v611 = vunpack.c.l.b16 %v258
    %v612 = vunpack.c.l.b16 %v260
    %v613 = vunpack.c.l.b16 %v262
    %v614 = vpack.c.b16 %v599, %v598
    %v615 = vpack.c.b16 %v601, %v600
    %v616 = vpack.c.b16 %v603, %v602
    %v617 = vpack.c.b16 %v605, %v604
    %v618 = vpack.c.b16 %v607, %v606
    %v619 = vpack.c.b16 %v609, %v608
    %v620 = vpack.c.b16 %v611, %v610
    %v621 = vpack.c.b16 %v613, %v612
    %630 = vmatprep.subr.bf16.mxu0 0
    %631 = vmatpush1.bf16.msra.mxu0 %v621
    %632 = vmatprep.subr.bf16.mxu0 0
    %633 = vmatpush1.bf16.msra.mxu0 %v620
    %634 = vmatprep.subr.bf16.mxu0 0
    %635 = vmatpush1.bf16.msra.mxu0 %v619
    %636 = vmatprep.subr.bf16.mxu0 0
    %637 = vmatpush1.bf16.msra.mxu0 %v618
    %638 = vmatprep.subr.bf16.mxu0 0
    %639 = vmatpush1.bf16.msra.mxu0 %v617
    %640 = vmatprep.subr.bf16.mxu0 0
    %641 = vmatpush1.bf16.msra.mxu0 %v616
    %642 = vmatprep.subr.bf16.mxu0 0
    %643 = vmatpush1.bf16.msra.mxu0 %v615
    %644 = vmatprep.subr.bf16.mxu0 0
    %645 = vmatpush1.bf16.msra.mxu0 %v614
    %646 = vmatprep.subr.bf16.mxu0 0
    %647 = vmatpush2.bf16.msra.mxu0 0
    %648 = vmatprep.subr.bf16.mxu0 0
    %649 = vmatpush2.bf16.msra.mxu0 0
    %650 = vmatprep.subr.bf16.mxu0 0
    %651 = vmatpush2.bf16.msra.mxu0 0
    %652 = vmatprep.subr.bf16.mxu0 0
    %653 = vmatpush2.bf16.msra.mxu0 0
    %654 = vmatprep.subr.bf16.mxu0 0
    %655 = vmatpush2.bf16.msra.mxu0 0
    %656 = vmatprep.subr.bf16.mxu0 0
    %657 = vmatpush2.bf16.msra.mxu0 0
    %658 = vmatprep.subr.bf16.mxu0 0
    %659 = vmatpush2.bf16.msra.mxu0 0
    %660 = vmatprep.subr.bf16.mxu0 0
    %661 = vmatpush2.bf16.msra.mxu0 0
    %662 = vmatprep.mubr.bf16.mxu0 0
    %663 = vmatmul.mubr.bf16.gmra.mxu0 %v419
    %v664 = vpop.f32.mrf.mxu0
    %v665 = vadd.f32 0.0, %v664
    %v666 = vpop.f32.mrf.mxu0
    %v667 = vpop.f32.mrf.mxu0
    %v668 = vadd.f32 0.0, %v667
    %v669 = vpop.f32.mrf.mxu0
    %670 = vdwg.mxu0
    %v671 = vpack.c.bf16 %v506, %v503
    %v673 = vunpack.c.l.b16 %v671
    %v674 = vunpack.c.h.b16 %v671
    %v675 = vpack.c.b16 %v673, %v673
    %v676 = vpack.c.b16 %v674, %v674
    %v677 = vpack.c.bf16 %v579, %v576
    %v679 = vunpack.c.l.b16 %v677
    %v680 = vunpack.c.h.b16 %v677
    %v681 = vpack.c.b16 %v679, %v679
    %v682 = vpack.c.b16 %v680, %v680
    %v683 = vpack.c.bf16 %v668, %v665
    %v685 = vunpack.c.l.b16 %v683
    %v686 = vunpack.c.h.b16 %v683
    %v687 = vpack.c.b16 %v685, %v685
    %v688 = vpack.c.b16 %v686, %v686
    %vm689 = vcmask 261120
    %v691 = vsel %vm689, %v675, 0
    %v694 = vsel %vm689, %v681, 0
    %696 = vmatprep.subr.bf16.mxu0 0
    %697 = vmatpush1.bf16.xpose.msra.mxu0 0
    %698 = vmatprep.subr.bf16.mxu0 0
    %699 = vmatpush1.bf16.xpose.msra.mxu0 0
    %700 = vmatprep.subr.bf16.mxu0 0
    %701 = vmatpush1.bf16.xpose.msra.mxu0 0
    %702 = vmatprep.subr.bf16.mxu0 0
    %703 = vmatpush1.bf16.xpose.msra.mxu0 0
    %704 = vmatprep.subr.bf16.mxu0 0
    %705 = vmatpush1.bf16.xpose.msra.mxu0 0
    %706 = vmatprep.subr.bf16.mxu0 0
    %707 = vmatpush1.bf16.xpose.msra.mxu0 0
    %708 = vmatprep.subr.bf16.mxu0 0
    %709 = vmatpush1.bf16.xpose.msra.mxu0 0
    %710 = vmatprep.subr.bf16.mxu0 0
    %711 = vmatpush1.bf16.xpose.msra.mxu0 %v694
    %712 = vmatprep.subr.bf16.mxu0 0
    %713 = vmatpush2.bf16.xpose.msra.mxu0 0
    %714 = vmatprep.subr.bf16.mxu0 0
    %715 = vmatpush2.bf16.xpose.msra.mxu0 0
    %716 = vmatprep.subr.bf16.mxu0 0
    %717 = vmatpush2.bf16.xpose.msra.mxu0 0
    %718 = vmatprep.subr.bf16.mxu0 0
    %719 = vmatpush2.bf16.xpose.msra.mxu0 0
    %720 = vmatprep.subr.bf16.mxu0 0
    %721 = vmatpush2.bf16.xpose.msra.mxu0 0
    %722 = vmatprep.subr.bf16.mxu0 0
    %723 = vmatpush2.bf16.xpose.msra.mxu0 0
    %724 = vmatprep.subr.bf16.mxu0 0
    %725 = vmatpush2.bf16.xpose.msra.mxu0 0
    %726 = vmatprep.subr.bf16.mxu0 0
    %727 = vmatpush2.bf16.xpose.msra.mxu0 0
    %728 = vmatprep.mubr.bf16.mxu0 0
    %729 = vmatmul.mubr.bf16.gmra.mxu0 %v691
    %v730 = vpop.f32.mrf.mxu0
    %v731 = vadd.f32 0.0, %v730
    %v732 = vpop.f32.mrf.mxu0
    %v733 = vpop.f32.mrf.mxu0
    %v734 = vpop.f32.mrf.mxu0
    %735 = vdwg.mxu0
    %v737 = vsel %vm689, %v676, 0
    %v740 = vsel %vm689, %v682, 0
    %742 = vmatprep.subr.bf16.mxu0 0
    %743 = vmatpush1.bf16.xpose.msra.mxu0 0
    %744 = vmatprep.subr.bf16.mxu0 0
    %745 = vmatpush1.bf16.xpose.msra.mxu0 0
    %746 = vmatprep.subr.bf16.mxu0 0
    %747 = vmatpush1.bf16.xpose.msra.mxu0 0
    %748 = vmatprep.subr.bf16.mxu0 0
    %749 = vmatpush1.bf16.xpose.msra.mxu0 0
    %750 = vmatprep.subr.bf16.mxu0 0
    %751 = vmatpush1.bf16.xpose.msra.mxu0 0
    %752 = vmatprep.subr.bf16.mxu0 0
    %753 = vmatpush1.bf16.xpose.msra.mxu0 0
    %754 = vmatprep.subr.bf16.mxu0 0
    %755 = vmatpush1.bf16.xpose.msra.mxu0 0
    %756 = vmatprep.subr.bf16.mxu0 0
    %757 = vmatpush1.bf16.xpose.msra.mxu0 %v740
    %758 = vmatprep.subr.bf16.mxu0 0
    %759 = vmatpush2.bf16.xpose.msra.mxu0 0
    %760 = vmatprep.subr.bf16.mxu0 0
    %761 = vmatpush2.bf16.xpose.msra.mxu0 0
    %762 = vmatprep.subr.bf16.mxu0 0
    %763 = vmatpush2.bf16.xpose.msra.mxu0 0
    %764 = vmatprep.subr.bf16.mxu0 0
    %765 = vmatpush2.bf16.xpose.msra.mxu0 0
    %766 = vmatprep.subr.bf16.mxu0 0
    %767 = vmatpush2.bf16.xpose.msra.mxu0 0
    %768 = vmatprep.subr.bf16.mxu0 0
    %769 = vmatpush2.bf16.xpose.msra.mxu0 0
    %770 = vmatprep.subr.bf16.mxu0 0
    %771 = vmatpush2.bf16.xpose.msra.mxu0 0
    %772 = vmatprep.subr.bf16.mxu0 0
    %773 = vmatpush2.bf16.xpose.msra.mxu0 0
    %774 = vmatprep.mubr.bf16.mxu0 0
    %775 = vmatmul.mubr.bf16.gmra.mxu0 %v737
    %v776 = vpop.f32.mrf.mxu0
    %v777 = vadd.f32 0.0, %v776
    %v778 = vpop.f32.mrf.mxu0
    %v779 = vpop.f32.mrf.mxu0
    %v780 = vpop.f32.mrf.mxu0
    %781 = vdwg.mxu0
    %v782 = vmul.f32 %v731, 0.17677669
    %v783 = vmul.f32 %v777, 0.17677669
    %vm784 = vcmask 64512
    %v785 = vsel %vm784, %v782, -inf
    %786 = vmax.xlane.f32.xlu0 %v785
    %v787 = vpop.xlane.xlu0 %786
    %v788 = vsel %vm784, %v783, -inf
    %789 = vmax.xlane.f32.xlu0 %v788
    %v790 = vpop.xlane.xlu0 %789
    %v791 = vsub.f32 %v782, %v787
    %v792 = vsub.f32 %v783, %v790
    %v793 = vmul.f32 %v791, 1.442695
    %v794 = vpow.pop %v793
    %v795 = vmul.f32 %v792, 1.442695
    %v796 = vpow.pop %v795
    %v797 = vsel %vm784, %v794, 0.0
    %798 = vadd.xlane.f32.xlu0 %v797
    %v799 = vpop.xlane.xlu0 %798
    %v800 = vsel %vm784, %v796, 0.0
    %801 = vadd.xlane.f32.xlu0 %v800
    %v802 = vpop.xlane.xlu0 %801
    %v803 = vrcp.pop %v799
    %v804 = vrcp.pop %v802
    %v805 = vmul.f32 %v794, %v803
    %v806 = vmul.f32 %v796, %v804
    %v807 = vpack.c.bf16 %v805, %v805
    %v808 = vpack.c.bf16 %v806, %v806
    %v810 = vsel %vm784, %v807, 0
    %vm812 = vcmask 1043456
    %v814 = vsel %vm812, %v687, 0
    %816 = vmatprep.subr.bf16.mxu0 0
    %817 = vmatpush1.bf16.msra.mxu0 0
    %818 = vmatprep.subr.bf16.mxu0 0
    %819 = vmatpush1.bf16.msra.mxu0 0
    %820 = vmatprep.subr.bf16.mxu0 0
    %821 = vmatpush1.bf16.msra.mxu0 0
    %822 = vmatprep.subr.bf16.mxu0 0
    %823 = vmatpush1.bf16.msra.mxu0 0
    %824 = vmatprep.subr.bf16.mxu0 0
    %825 = vmatpush1.bf16.msra.mxu0 0
    %826 = vmatprep.subr.bf16.mxu0 0
    %827 = vmatpush1.bf16.msra.mxu0 0
    %828 = vmatprep.subr.bf16.mxu0 0
    %829 = vmatpush1.bf16.msra.mxu0 0
    %830 = vmatprep.subr.bf16.mxu0 0
    %831 = vmatpush1.bf16.msra.mxu0 %v814
    %832 = vmatprep.subr.bf16.mxu0 0
    %833 = vmatpush2.bf16.msra.mxu0 0
    %834 = vmatprep.subr.bf16.mxu0 0
    %835 = vmatpush2.bf16.msra.mxu0 0
    %836 = vmatprep.subr.bf16.mxu0 0
    %837 = vmatpush2.bf16.msra.mxu0 0
    %838 = vmatprep.subr.bf16.mxu0 0
    %839 = vmatpush2.bf16.msra.mxu0 0
    %840 = vmatprep.subr.bf16.mxu0 0
    %841 = vmatpush2.bf16.msra.mxu0 0
    %842 = vmatprep.subr.bf16.mxu0 0
    %843 = vmatpush2.bf16.msra.mxu0 0
    %844 = vmatprep.subr.bf16.mxu0 0
    %845 = vmatpush2.bf16.msra.mxu0 0
    %846 = vmatprep.subr.bf16.mxu0 0
    %847 = vmatpush2.bf16.msra.mxu0 0
    %848 = vmatprep.mubr.bf16.mxu0 0
    %849 = vmatmul.mubr.bf16.gmra.mxu0 %v810
    %v850 = vpop.f32.mrf.mxu0
    %v851 = vadd.f32 0.0, %v850
    %v852 = vpop.f32.mrf.mxu0
    %v853 = vpop.f32.mrf.mxu0
    %v854 = vpop.f32.mrf.mxu0
    %855 = vdwg.mxu0
    %v857 = vsel %vm784, %v808, 0
    %v860 = vsel %vm812, %v688, 0
    %862 = vmatprep.subr.bf16.mxu0 0
    %863 = vmatpush1.bf16.msra.mxu0 0
    %864 = vmatprep.subr.bf16.mxu0 0
    %865 = vmatpush1.bf16.msra.mxu0 0
    %866 = vmatprep.subr.bf16.mxu0 0
    %867 = vmatpush1.bf16.msra.mxu0 0
    %868 = vmatprep.subr.bf16.mxu0 0
    %869 = vmatpush1.bf16.msra.mxu0 0
    %870 = vmatprep.subr.bf16.mxu0 0
    %871 = vmatpush1.bf16.msra.mxu0 0
    %872 = vmatprep.subr.bf16.mxu0 0
    %873 = vmatpush1.bf16.msra.mxu0 0
    %874 = vmatprep.subr.bf16.mxu0 0
    %875 = vmatpush1.bf16.msra.mxu0 0
    %876 = vmatprep.subr.bf16.mxu0 0
    %877 = vmatpush1.bf16.msra.mxu0 %v860
    %878 = vmatprep.subr.bf16.mxu0 0
    %879 = vmatpush2.bf16.msra.mxu0 0
    %880 = vmatprep.subr.bf16.mxu0 0
    %881 = vmatpush2.bf16.msra.mxu0 0
    %882 = vmatprep.subr.bf16.mxu0 0
    %883 = vmatpush2.bf16.msra.mxu0 0
    %884 = vmatprep.subr.bf16.mxu0 0
    %885 = vmatpush2.bf16.msra.mxu0 0
    %886 = vmatprep.subr.bf16.mxu0 0
    %887 = vmatpush2.bf16.msra.mxu0 0
    %888 = vmatprep.subr.bf16.mxu0 0
    %889 = vmatpush2.bf16.msra.mxu0 0
    %890 = vmatprep.subr.bf16.mxu0 0
    %891 = vmatpush2.bf16.msra.mxu0 0
    %892 = vmatprep.subr.bf16.mxu0 0
    %893 = vmatpush2.bf16.msra.mxu0 0
    %894 = vmatprep.mubr.bf16.mxu0 0
    %895 = vmatmul.mubr.bf16.gmra.mxu0 %v857
    %v896 = vpop.f32.mrf.mxu0
    %v897 = vadd.f32 0.0, %v896
    %v898 = vpop.f32.mrf.mxu0
    %v899 = vpop.f32.mrf.mxu0
    %v900 = vpop.f32.mrf.mxu0
    %901 = vdwg.mxu0
    %v902 = vpack.c.bf16 %v897, %v851
    %903 = vrot.lane.b32.xlu0 %v675, 96
    %v904 = vpop.permute.xlu0 %903
    %905 = vrot.lane.b32.xlu0 %v681, 96
    %v906 = vpop.permute.xlu0 %905
    %v908 = vsel %vm689, %v904, 0
    %v911 = vsel %vm689, %v906, 0
    %913 = vmatprep.subr.bf16.mxu0 0
    %914 = vmatpush1.bf16.xpose.msra.mxu0 0
    %915 = vmatprep.subr.bf16.mxu0 0
    %916 = vmatpush1.bf16.xpose.msra.mxu0 0
    %917 = vmatprep.subr.bf16.mxu0 0
    %918 = vmatpush1.bf16.xpose.msra.mxu0 0
    %919 = vmatprep.subr.bf16.mxu0 0
    %920 = vmatpush1.bf16.xpose.msra.mxu0 0
    %921 = vmatprep.subr.bf16.mxu0 0
    %922 = vmatpush1.bf16.xpose.msra.mxu0 0
    %923 = vmatprep.subr.bf16.mxu0 0
    %924 = vmatpush1.bf16.xpose.msra.mxu0 0
    %925 = vmatprep.subr.bf16.mxu0 0
    %926 = vmatpush1.bf16.xpose.msra.mxu0 0
    %927 = vmatprep.subr.bf16.mxu0 0
    %928 = vmatpush1.bf16.xpose.msra.mxu0 %v911
    %929 = vmatprep.subr.bf16.mxu0 0
    %930 = vmatpush2.bf16.xpose.msra.mxu0 0
    %931 = vmatprep.subr.bf16.mxu0 0
    %932 = vmatpush2.bf16.xpose.msra.mxu0 0
    %933 = vmatprep.subr.bf16.mxu0 0
    %934 = vmatpush2.bf16.xpose.msra.mxu0 0
    %935 = vmatprep.subr.bf16.mxu0 0
    %936 = vmatpush2.bf16.xpose.msra.mxu0 0
    %937 = vmatprep.subr.bf16.mxu0 0
    %938 = vmatpush2.bf16.xpose.msra.mxu0 0
    %939 = vmatprep.subr.bf16.mxu0 0
    %940 = vmatpush2.bf16.xpose.msra.mxu0 0
    %941 = vmatprep.subr.bf16.mxu0 0
    %942 = vmatpush2.bf16.xpose.msra.mxu0 0
    %943 = vmatprep.subr.bf16.mxu0 0
    %944 = vmatpush2.bf16.xpose.msra.mxu0 0
    %945 = vmatprep.mubr.bf16.mxu0 0
    %946 = vmatmul.mubr.bf16.gmra.mxu0 %v908
    %v947 = vpop.f32.mrf.mxu0
    %v948 = vadd.f32 0.0, %v947
    %v949 = vpop.f32.mrf.mxu0
    %v950 = vpop.f32.mrf.mxu0
    %v951 = vpop.f32.mrf.mxu0
    %952 = vdwg.mxu0
    %953 = vrot.lane.b32.xlu0 %v676, 96
    %v954 = vpop.permute.xlu0 %953
    %955 = vrot.lane.b32.xlu0 %v682, 96
    %v956 = vpop.permute.xlu0 %955
    %v958 = vsel %vm689, %v954, 0
    %v961 = vsel %vm689, %v956, 0
    %963 = vmatprep.subr.bf16.mxu0 0
    %964 = vmatpush1.bf16.xpose.msra.mxu0 0
    %965 = vmatprep.subr.bf16.mxu0 0
    %966 = vmatpush1.bf16.xpose.msra.mxu0 0
    %967 = vmatprep.subr.bf16.mxu0 0
    %968 = vmatpush1.bf16.xpose.msra.mxu0 0
    %969 = vmatprep.subr.bf16.mxu0 0
    %970 = vmatpush1.bf16.xpose.msra.mxu0 0
    %971 = vmatprep.subr.bf16.mxu0 0
    %972 = vmatpush1.bf16.xpose.msra.mxu0 0
    %973 = vmatprep.subr.bf16.mxu0 0
    %974 = vmatpush1.bf16.xpose.msra.mxu0 0
    %975 = vmatprep.subr.bf16.mxu0 0
    %976 = vmatpush1.bf16.xpose.msra.mxu0 0
    %977 = vmatprep.subr.bf16.mxu0 0
    %978 = vmatpush1.bf16.xpose.msra.mxu0 %v961
    %979 = vmatprep.subr.bf16.mxu0 0
    %980 = vmatpush2.bf16.xpose.msra.mxu0 0
    %981 = vmatprep.subr.bf16.mxu0 0
    %982 = vmatpush2.bf16.xpose.msra.mxu0 0
    %983 = vmatprep.subr.bf16.mxu0 0
    %984 = vmatpush2.bf16.xpose.msra.mxu0 0
    %985 = vmatprep.subr.bf16.mxu0 0
    %986 = vmatpush2.bf16.xpose.msra.mxu0 0
    %987 = vmatprep.subr.bf16.mxu0 0
    %988 = vmatpush2.bf16.xpose.msra.mxu0 0
    %989 = vmatprep.subr.bf16.mxu0 0
    %990 = vmatpush2.bf16.xpose.msra.mxu0 0
    %991 = vmatprep.subr.bf16.mxu0 0
    %992 = vmatpush2.bf16.xpose.msra.mxu0 0
    %993 = vmatprep.subr.bf16.mxu0 0
    %994 = vmatpush2.bf16.xpose.msra.mxu0 0
    %995 = vmatprep.mubr.bf16.mxu0 0
    %996 = vmatmul.mubr.bf16.gmra.mxu0 %v958
    %v997 = vpop.f32.mrf.mxu0
    %v998 = vadd.f32 0.0, %v997
    %v999 = vpop.f32.mrf.mxu0
    %v1000 = vpop.f32.mrf.mxu0
    %v1001 = vpop.f32.mrf.mxu0
    %1002 = vdwg.mxu0
    %v1003 = vmul.f32 %v948, 0.17677669
    %v1004 = vmul.f32 %v998, 0.17677669
    %v1005 = vsel %vm784, %v1003, -inf
    %1006 = vmax.xlane.f32.xlu0 %v1005
    %v1007 = vpop.xlane.xlu0 %1006
    %v1008 = vsel %vm784, %v1004, -inf
    %1009 = vmax.xlane.f32.xlu0 %v1008
    %v1010 = vpop.xlane.xlu0 %1009
    %v1011 = vsub.f32 %v1003, %v1007
    %v1012 = vsub.f32 %v1004, %v1010
    %v1013 = vmul.f32 %v1011, 1.442695
    %v1014 = vpow.pop %v1013
    %v1015 = vmul.f32 %v1012, 1.442695
    %v1016 = vpow.pop %v1015
    %v1017 = vsel %vm784, %v1014, 0.0
    %1018 = vadd.xlane.f32.xlu0 %v1017
    %v1019 = vpop.xlane.xlu0 %1018
    %v1020 = vsel %vm784, %v1016, 0.0
    %1021 = vadd.xlane.f32.xlu0 %v1020
    %v1022 = vpop.xlane.xlu0 %1021
    %v1023 = vrcp.pop %v1019
    %v1024 = vrcp.pop %v1022
    %v1025 = vmul.f32 %v1014, %v1023
    %v1026 = vmul.f32 %v1016, %v1024
    %v1027 = vpack.c.bf16 %v1025, %v1025
    %v1028 = vpack.c.bf16 %v1026, %v1026
    %1029 = vrot.lane.b32.xlu0 %v687, 96
    %v1030 = vpop.permute.xlu0 %1029
    %v1032 = vsel %vm784, %v1027, 0
    %v1035 = vsel %vm812, %v1030, 0
    %1037 = vmatprep.subr.bf16.mxu0 0
    %1038 = vmatpush1.bf16.msra.mxu0 0
    %1039 = vmatprep.subr.bf16.mxu0 0
    %1040 = vmatpush1.bf16.msra.mxu0 0
    %1041 = vmatprep.subr.bf16.mxu0 0
    %1042 = vmatpush1.bf16.msra.mxu0 0
    %1043 = vmatprep.subr.bf16.mxu0 0
    %1044 = vmatpush1.bf16.msra.mxu0 0
    %1045 = vmatprep.subr.bf16.mxu0 0
    %1046 = vmatpush1.bf16.msra.mxu0 0
    %1047 = vmatprep.subr.bf16.mxu0 0
    %1048 = vmatpush1.bf16.msra.mxu0 0
    %1049 = vmatprep.subr.bf16.mxu0 0
    %1050 = vmatpush1.bf16.msra.mxu0 0
    %1051 = vmatprep.subr.bf16.mxu0 0
    %1052 = vmatpush1.bf16.msra.mxu0 %v1035
    %1053 = vmatprep.subr.bf16.mxu0 0
    %1054 = vmatpush2.bf16.msra.mxu0 0
    %1055 = vmatprep.subr.bf16.mxu0 0
    %1056 = vmatpush2.bf16.msra.mxu0 0
    %1057 = vmatprep.subr.bf16.mxu0 0
    %1058 = vmatpush2.bf16.msra.mxu0 0
    %1059 = vmatprep.subr.bf16.mxu0 0
    %1060 = vmatpush2.bf16.msra.mxu0 0
    %1061 = vmatprep.subr.bf16.mxu0 0
    %1062 = vmatpush2.bf16.msra.mxu0 0
    %1063 = vmatprep.subr.bf16.mxu0 0
    %1064 = vmatpush2.bf16.msra.mxu0 0
    %1065 = vmatprep.subr.bf16.mxu0 0
    %1066 = vmatpush2.bf16.msra.mxu0 0
    %1067 = vmatprep.subr.bf16.mxu0 0
    %1068 = vmatpush2.bf16.msra.mxu0 0
    %1069 = vmatprep.mubr.bf16.mxu0 0
    %1070 = vmatmul.mubr.bf16.gmra.mxu0 %v1032
    %v1071 = vpop.f32.mrf.mxu0
    %v1072 = vadd.f32 0.0, %v1071
    %v1073 = vpop.f32.mrf.mxu0
    %v1074 = vpop.f32.mrf.mxu0
    %v1075 = vpop.f32.mrf.mxu0
    %1076 = vdwg.mxu0
    %1077 = vrot.lane.b32.xlu0 %v688, 96
    %v1078 = vpop.permute.xlu0 %1077
    %v1080 = vsel %vm784, %v1028, 0
    %v1083 = vsel %vm812, %v1078, 0
    %1085 = vmatprep.subr.bf16.mxu0 0
    %1086 = vmatpush1.bf16.msra.mxu0 0
    %1087 = vmatprep.subr.bf16.mxu0 0
    %1088 = vmatpush1.bf16.msra.mxu0 0
    %1089 = vmatprep.subr.bf16.mxu0 0
    %1090 = vmatpush1.bf16.msra.mxu0 0
    %1091 = vmatprep.subr.bf16.mxu0 0
    %1092 = vmatpush1.bf16.msra.mxu0 0
    %1093 = vmatprep.subr.bf16.mxu0 0
    %1094 = vmatpush1.bf16.msra.mxu0 0
    %1095 = vmatprep.subr.bf16.mxu0 0
    %1096 = vmatpush1.bf16.msra.mxu0 0
    %1097 = vmatprep.subr.bf16.mxu0 0
    %1098 = vmatpush1.bf16.msra.mxu0 0
    %1099 = vmatprep.subr.bf16.mxu0 0
    %1100 = vmatpush1.bf16.msra.mxu0 %v1083
    %1101 = vmatprep.subr.bf16.mxu0 0
    %1102 = vmatpush2.bf16.msra.mxu0 0
    %1103 = vmatprep.subr.bf16.mxu0 0
    %1104 = vmatpush2.bf16.msra.mxu0 0
    %1105 = vmatprep.subr.bf16.mxu0 0
    %1106 = vmatpush2.bf16.msra.mxu0 0
    %1107 = vmatprep.subr.bf16.mxu0 0
    %1108 = vmatpush2.bf16.msra.mxu0 0
    %1109 = vmatprep.subr.bf16.mxu0 0
    %1110 = vmatpush2.bf16.msra.mxu0 0
    %1111 = vmatprep.subr.bf16.mxu0 0
    %1112 = vmatpush2.bf16.msra.mxu0 0
    %1113 = vmatprep.subr.bf16.mxu0 0
    %1114 = vmatpush2.bf16.msra.mxu0 0
    %1115 = vmatprep.subr.bf16.mxu0 0
    %1116 = vmatpush2.bf16.msra.mxu0 0
    %1117 = vmatprep.mubr.bf16.mxu0 0
    %1118 = vmatmul.mubr.bf16.gmra.mxu0 %v1080
    %v1119 = vpop.f32.mrf.mxu0
    %v1120 = vadd.f32 0.0, %v1119
    %v1121 = vpop.f32.mrf.mxu0
    %v1122 = vpop.f32.mrf.mxu0
    %v1123 = vpop.f32.mrf.mxu0
    %1124 = vdwg.mxu0
    %v1125 = vpack.c.bf16 %v1120, %v1072
    %v1130 = vunpack.c.l.b16 %v267
    %v1131 = vunpack.c.l.b16 %v268
    %v1132 = vunpack.c.l.b16 %v269
    %v1133 = vunpack.c.l.b16 %v270
    %v1134 = vpack.c.b16 %v1131, %v1130
    %v1135 = vpack.c.b16 %v1133, %v1132
    %v1139 = vsel %vm689, %v1125, 0
    %1141 = vmatprep.subr.bf16.mxu0 0
    %1142 = vmatpush1.bf16.msra.mxu0 0
    %1143 = vmatprep.subr.bf16.mxu0 0
    %1144 = vmatpush1.bf16.msra.mxu0 0
    %1145 = vmatprep.subr.bf16.mxu0 0
    %1146 = vmatpush1.bf16.msra.mxu0 0
    %1147 = vmatprep.subr.bf16.mxu0 0
    %1148 = vmatpush1.bf16.msra.mxu0 0
    %1149 = vmatprep.subr.bf16.mxu0 0
    %1150 = vmatpush1.bf16.msra.mxu0 0
    %1151 = vmatprep.subr.bf16.mxu0 0
    %1152 = vmatpush1.bf16.msra.mxu0 0
    %1153 = vmatprep.subr.bf16.mxu0 0
    %1154 = vmatpush1.bf16.msra.mxu0 %v1135
    %1155 = vmatprep.subr.bf16.mxu0 0
    %1156 = vmatpush1.bf16.msra.mxu0 %v1134
    %1157 = vmatprep.subr.bf16.mxu0 0
    %1158 = vmatpush2.bf16.msra.mxu0 0
    %1159 = vmatprep.subr.bf16.mxu0 0
    %1160 = vmatpush2.bf16.msra.mxu0 0
    %1161 = vmatprep.subr.bf16.mxu0 0
    %1162 = vmatpush2.bf16.msra.mxu0 0
    %1163 = vmatprep.subr.bf16.mxu0 0
    %1164 = vmatpush2.bf16.msra.mxu0 0
    %1165 = vmatprep.subr.bf16.mxu0 0
    %1166 = vmatpush2.bf16.msra.mxu0 0
    %1167 = vmatprep.subr.bf16.mxu0 0
    %1168 = vmatpush2.bf16.msra.mxu0 0
    %1169 = vmatprep.subr.bf16.mxu0 0
    %1170 = vmatpush2.bf16.msra.mxu0 0
    %1171 = vmatprep.subr.bf16.mxu0 0
    %1172 = vmatpush2.bf16.msra.mxu0 0
    %1173 = vmatprep.mubr.bf16.mxu0 0
    %1174 = vmatmul.mubr.bf16.gmra.mxu0 %v1139
    %v1175 = vpop.f32.mrf.mxu0
    %v1176 = vadd.f32 0.0, %v1175
    %v1177 = vpop.f32.mrf.mxu0
    %v1178 = vpop.f32.mrf.mxu0
    %v1179 = vadd.f32 0.0, %v1178
    %v1180 = vpop.f32.mrf.mxu0
    %1181 = vdwg.mxu0
    %v1186 = vunpack.c.l.b16 %v263
    %v1187 = vunpack.c.l.b16 %v264
    %v1188 = vunpack.c.l.b16 %v265
    %v1189 = vunpack.c.l.b16 %v266
    %v1190 = vpack.c.b16 %v1187, %v1186
    %v1191 = vpack.c.b16 %v1189, %v1188
    %v1195 = vsel %vm689, %v902, 0
    %1197 = vmatprep.subr.bf16.mxu0 0
    %1198 = vmatpush1.bf16.msra.mxu0 0
    %1199 = vmatprep.subr.bf16.mxu0 0
    %1200 = vmatpush1.bf16.msra.mxu0 0
    %1201 = vmatprep.subr.bf16.mxu0 0
    %1202 = vmatpush1.bf16.msra.mxu0 0
    %1203 = vmatprep.subr.bf16.mxu0 0
    %1204 = vmatpush1.bf16.msra.mxu0 0
    %1205 = vmatprep.subr.bf16.mxu0 0
    %1206 = vmatpush1.bf16.msra.mxu0 0
    %1207 = vmatprep.subr.bf16.mxu0 0
    %1208 = vmatpush1.bf16.msra.mxu0 0
    %1209 = vmatprep.subr.bf16.mxu0 0
    %1210 = vmatpush1.bf16.msra.mxu0 %v1191
    %1211 = vmatprep.subr.bf16.mxu0 0
    %1212 = vmatpush1.bf16.msra.mxu0 %v1190
    %1213 = vmatprep.subr.bf16.mxu0 0
    %1214 = vmatpush2.bf16.msra.mxu0 0
    %1215 = vmatprep.subr.bf16.mxu0 0
    %1216 = vmatpush2.bf16.msra.mxu0 0
    %1217 = vmatprep.subr.bf16.mxu0 0
    %1218 = vmatpush2.bf16.msra.mxu0 0
    %1219 = vmatprep.subr.bf16.mxu0 0
    %1220 = vmatpush2.bf16.msra.mxu0 0
    %1221 = vmatprep.subr.bf16.mxu0 0
    %1222 = vmatpush2.bf16.msra.mxu0 0
    %1223 = vmatprep.subr.bf16.mxu0 0
    %1224 = vmatpush2.bf16.msra.mxu0 0
    %1225 = vmatprep.subr.bf16.mxu0 0
    %1226 = vmatpush2.bf16.msra.mxu0 0
    %1227 = vmatprep.subr.bf16.mxu0 0
    %1228 = vmatpush2.bf16.msra.mxu0 0
    %1229 = vmatprep.mubr.bf16.mxu0 0
    %1230 = vmatmul.mubr.bf16.gmra.mxu0 %v1195
    %v1231 = vpop.f32.mrf.mxu0
    %v1232 = vadd.f32 %v1176, %v1231
    %v1233 = vpop.f32.mrf.mxu0
    %v1234 = vpop.f32.mrf.mxu0
    %v1235 = vadd.f32 %v1179, %v1234
    %v1236 = vpop.f32.mrf.mxu0
    %1237 = vdwg.mxu0
    %1238 = vrot.lane.b32.xlu0 %v675, 64
    %v1239 = vpop.permute.xlu0 %1238
    %1240 = vrot.lane.b32.xlu0 %v681, 64
    %v1241 = vpop.permute.xlu0 %1240
    %v1243 = vsel %vm689, %v1239, 0
    %v1246 = vsel %vm689, %v1241, 0
    %1248 = vmatprep.subr.bf16.mxu0 0
    %1249 = vmatpush1.bf16.xpose.msra.mxu0 0
    %1250 = vmatprep.subr.bf16.mxu0 0
    %1251 = vmatpush1.bf16.xpose.msra.mxu0 0
    %1252 = vmatprep.subr.bf16.mxu0 0
    %1253 = vmatpush1.bf16.xpose.msra.mxu0 0
    %1254 = vmatprep.subr.bf16.mxu0 0
    %1255 = vmatpush1.bf16.xpose.msra.mxu0 0
    %1256 = vmatprep.subr.bf16.mxu0 0
    %1257 = vmatpush1.bf16.xpose.msra.mxu0 0
    %1258 = vmatprep.subr.bf16.mxu0 0
    %1259 = vmatpush1.bf16.xpose.msra.mxu0 0
    %1260 = vmatprep.subr.bf16.mxu0 0
    %1261 = vmatpush1.bf16.xpose.msra.mxu0 0
    %1262 = vmatprep.subr.bf16.mxu0 0
    %1263 = vmatpush1.bf16.xpose.msra.mxu0 %v1246
    %1264 = vmatprep.subr.bf16.mxu0 0
    %1265 = vmatpush2.bf16.xpose.msra.mxu0 0
    %1266 = vmatprep.subr.bf16.mxu0 0
    %1267 = vmatpush2.bf16.xpose.msra.mxu0 0
    %1268 = vmatprep.subr.bf16.mxu0 0
    %1269 = vmatpush2.bf16.xpose.msra.mxu0 0
    %1270 = vmatprep.subr.bf16.mxu0 0
    %1271 = vmatpush2.bf16.xpose.msra.mxu0 0
    %1272 = vmatprep.subr.bf16.mxu0 0
    %1273 = vmatpush2.bf16.xpose.msra.mxu0 0
    %1274 = vmatprep.subr.bf16.mxu0 0
    %1275 = vmatpush2.bf16.xpose.msra.mxu0 0
    %1276 = vmatprep.subr.bf16.mxu0 0
    %1277 = vmatpush2.bf16.xpose.msra.mxu0 0
    %1278 = vmatprep.subr.bf16.mxu0 0
    %1279 = vmatpush2.bf16.xpose.msra.mxu0 0
    %1280 = vmatprep.mubr.bf16.mxu0 0
    %1281 = vmatmul.mubr.bf16.gmra.mxu0 %v1243
    %v1282 = vpop.f32.mrf.mxu0
    %v1283 = vadd.f32 0.0, %v1282
    %v1284 = vpop.f32.mrf.mxu0
    %v1285 = vpop.f32.mrf.mxu0
    %v1286 = vpop.f32.mrf.mxu0
    %1287 = vdwg.mxu0
    %1288 = vrot.lane.b32.xlu0 %v676, 64
    %v1289 = vpop.permute.xlu0 %1288
    %1290 = vrot.lane.b32.xlu0 %v682, 64
    %v1291 = vpop.permute.xlu0 %1290
    %v1293 = vsel %vm689, %v1289, 0
    %v1296 = vsel %vm689, %v1291, 0
    %1298 = vmatprep.subr.bf16.mxu0 0
    %1299 = vmatpush1.bf16.xpose.msra.mxu0 0
    %1300 = vmatprep.subr.bf16.mxu0 0
    %1301 = vmatpush1.bf16.xpose.msra.mxu0 0
    %1302 = vmatprep.subr.bf16.mxu0 0
    %1303 = vmatpush1.bf16.xpose.msra.mxu0 0
    %1304 = vmatprep.subr.bf16.mxu0 0
    %1305 = vmatpush1.bf16.xpose.msra.mxu0 0
    %1306 = vmatprep.subr.bf16.mxu0 0
    %1307 = vmatpush1.bf16.xpose.msra.mxu0 0
    %1308 = vmatprep.subr.bf16.mxu0 0
    %1309 = vmatpush1.bf16.xpose.msra.mxu0 0
    %1310 = vmatprep.subr.bf16.mxu0 0
    %1311 = vmatpush1.bf16.xpose.msra.mxu0 0
    %1312 = vmatprep.subr.bf16.mxu0 0
    %1313 = vmatpush1.bf16.xpose.msra.mxu0 %v1296
    %1314 = vmatprep.subr.bf16.mxu0 0
    %1315 = vmatpush2.bf16.xpose.msra.mxu0 0
    %1316 = vmatprep.subr.bf16.mxu0 0
    %1317 = vmatpush2.bf16.xpose.msra.mxu0 0
    %1318 = vmatprep.subr.bf16.mxu0 0
    %1319 = vmatpush2.bf16.xpose.msra.mxu0 0
    %1320 = vmatprep.subr.bf16.mxu0 0
    %1321 = vmatpush2.bf16.xpose.msra.mxu0 0
    %1322 = vmatprep.subr.bf16.mxu0 0
    %1323 = vmatpush2.bf16.xpose.msra.mxu0 0
    %1324 = vmatprep.subr.bf16.mxu0 0
    %1325 = vmatpush2.bf16.xpose.msra.mxu0 0
    %1326 = vmatprep.subr.bf16.mxu0 0
    %1327 = vmatpush2.bf16.xpose.msra.mxu0 0
    %1328 = vmatprep.subr.bf16.mxu0 0
    %1329 = vmatpush2.bf16.xpose.msra.mxu0 0
    %1330 = vmatprep.mubr.bf16.mxu0 0
    %1331 = vmatmul.mubr.bf16.gmra.mxu0 %v1293
    %v1332 = vpop.f32.mrf.mxu0
    %v1333 = vadd.f32 0.0, %v1332
    %v1334 = vpop.f32.mrf.mxu0
    %v1335 = vpop.f32.mrf.mxu0
    %v1336 = vpop.f32.mrf.mxu0
    %1337 = vdwg.mxu0
    %v1338 = vmul.f32 %v1283, 0.17677669
    %v1339 = vmul.f32 %v1333, 0.17677669
    %v1340 = vsel %vm784, %v1338, -inf
    %1341 = vmax.xlane.f32.xlu0 %v1340
    %v1342 = vpop.xlane.xlu0 %1341
    %v1343 = vsel %vm784, %v1339, -inf
    %1344 = vmax.xlane.f32.xlu0 %v1343
    %v1345 = vpop.xlane.xlu0 %1344
    %v1346 = vsub.f32 %v1338, %v1342
    %v1347 = vsub.f32 %v1339, %v1345
    %v1348 = vmul.f32 %v1346, 1.442695
    %v1349 = vpow.pop %v1348
    %v1350 = vmul.f32 %v1347, 1.442695
    %v1351 = vpow.pop %v1350
    %v1352 = vsel %vm784, %v1349, 0.0
    %1353 = vadd.xlane.f32.xlu0 %v1352
    %v1354 = vpop.xlane.xlu0 %1353
    %v1355 = vsel %vm784, %v1351, 0.0
    %1356 = vadd.xlane.f32.xlu0 %v1355
    %v1357 = vpop.xlane.xlu0 %1356
    %v1358 = vrcp.pop %v1354
    %v1359 = vrcp.pop %v1357
    %v1360 = vmul.f32 %v1349, %v1358
    %v1361 = vmul.f32 %v1351, %v1359
    %v1362 = vpack.c.bf16 %v1360, %v1360
    %v1363 = vpack.c.bf16 %v1361, %v1361
    %1364 = vrot.lane.b32.xlu0 %v687, 64
    %v1365 = vpop.permute.xlu0 %1364
    %v1367 = vsel %vm784, %v1362, 0
    %v1370 = vsel %vm812, %v1365, 0
    %1372 = vmatprep.subr.bf16.mxu0 0
    %1373 = vmatpush1.bf16.msra.mxu0 0
    %1374 = vmatprep.subr.bf16.mxu0 0
    %1375 = vmatpush1.bf16.msra.mxu0 0
    %1376 = vmatprep.subr.bf16.mxu0 0
    %1377 = vmatpush1.bf16.msra.mxu0 0
    %1378 = vmatprep.subr.bf16.mxu0 0
    %1379 = vmatpush1.bf16.msra.mxu0 0
    %1380 = vmatprep.subr.bf16.mxu0 0
    %1381 = vmatpush1.bf16.msra.mxu0 0
    %1382 = vmatprep.subr.bf16.mxu0 0
    %1383 = vmatpush1.bf16.msra.mxu0 0
    %1384 = vmatprep.subr.bf16.mxu0 0
    %1385 = vmatpush1.bf16.msra.mxu0 0
    %1386 = vmatprep.subr.bf16.mxu0 0
    %1387 = vmatpush1.bf16.msra.mxu0 %v1370
    %1388 = vmatprep.subr.bf16.mxu0 0
    %1389 = vmatpush2.bf16.msra.mxu0 0
    %1390 = vmatprep.subr.bf16.mxu0 0
    %1391 = vmatpush2.bf16.msra.mxu0 0
    %1392 = vmatprep.subr.bf16.mxu0 0
    %1393 = vmatpush2.bf16.msra.mxu0 0
    %1394 = vmatprep.subr.bf16.mxu0 0
    %1395 = vmatpush2.bf16.msra.mxu0 0
    %1396 = vmatprep.subr.bf16.mxu0 0
    %1397 = vmatpush2.bf16.msra.mxu0 0
    %1398 = vmatprep.subr.bf16.mxu0 0
    %1399 = vmatpush2.bf16.msra.mxu0 0
    %1400 = vmatprep.subr.bf16.mxu0 0
    %1401 = vmatpush2.bf16.msra.mxu0 0
    %1402 = vmatprep.subr.bf16.mxu0 0
    %1403 = vmatpush2.bf16.msra.mxu0 0
    %1404 = vmatprep.mubr.bf16.mxu0 0
    %1405 = vmatmul.mubr.bf16.gmra.mxu0 %v1367
    %v1406 = vpop.f32.mrf.mxu0
    %v1407 = vadd.f32 0.0, %v1406
    %v1408 = vpop.f32.mrf.mxu0
    %v1409 = vpop.f32.mrf.mxu0
    %v1410 = vpop.f32.mrf.mxu0
    %1411 = vdwg.mxu0
    %1412 = vrot.lane.b32.xlu0 %v688, 64
    %v1413 = vpop.permute.xlu0 %1412
    %v1415 = vsel %vm784, %v1363, 0
    %v1418 = vsel %vm812, %v1413, 0
    %1420 = vmatprep.subr.bf16.mxu0 0
    %1421 = vmatpush1.bf16.msra.mxu0 0
    %1422 = vmatprep.subr.bf16.mxu0 0
    %1423 = vmatpush1.bf16.msra.mxu0 0
    %1424 = vmatprep.subr.bf16.mxu0 0
    %1425 = vmatpush1.bf16.msra.mxu0 0
    %1426 = vmatprep.subr.bf16.mxu0 0
    %1427 = vmatpush1.bf16.msra.mxu0 0
    %1428 = vmatprep.subr.bf16.mxu0 0
    %1429 = vmatpush1.bf16.msra.mxu0 0
    %1430 = vmatprep.subr.bf16.mxu0 0
    %1431 = vmatpush1.bf16.msra.mxu0 0
    %1432 = vmatprep.subr.bf16.mxu0 0
    %1433 = vmatpush1.bf16.msra.mxu0 0
    %1434 = vmatprep.subr.bf16.mxu0 0
    %1435 = vmatpush1.bf16.msra.mxu0 %v1418
    %1436 = vmatprep.subr.bf16.mxu0 0
    %1437 = vmatpush2.bf16.msra.mxu0 0
    %1438 = vmatprep.subr.bf16.mxu0 0
    %1439 = vmatpush2.bf16.msra.mxu0 0
    %1440 = vmatprep.subr.bf16.mxu0 0
    %1441 = vmatpush2.bf16.msra.mxu0 0
    %1442 = vmatprep.subr.bf16.mxu0 0
    %1443 = vmatpush2.bf16.msra.mxu0 0
    %1444 = vmatprep.subr.bf16.mxu0 0
    %1445 = vmatpush2.bf16.msra.mxu0 0
    %1446 = vmatprep.subr.bf16.mxu0 0
    %1447 = vmatpush2.bf16.msra.mxu0 0
    %1448 = vmatprep.subr.bf16.mxu0 0
    %1449 = vmatpush2.bf16.msra.mxu0 0
    %1450 = vmatprep.subr.bf16.mxu0 0
    %1451 = vmatpush2.bf16.msra.mxu0 0
    %1452 = vmatprep.mubr.bf16.mxu0 0
    %1453 = vmatmul.mubr.bf16.gmra.mxu0 %v1415
    %v1454 = vpop.f32.mrf.mxu0
    %v1455 = vadd.f32 0.0, %v1454
    %v1456 = vpop.f32.mrf.mxu0
    %v1457 = vpop.f32.mrf.mxu0
    %v1458 = vpop.f32.mrf.mxu0
    %1459 = vdwg.mxu0
    %v1460 = vpack.c.bf16 %v1455, %v1407
    %v1465 = vunpack.c.l.b16 %v271
    %v1466 = vunpack.c.l.b16 %v272
    %v1467 = vunpack.c.l.b16 %v273
    %v1468 = vunpack.c.l.b16 %v274
    %v1469 = vpack.c.b16 %v1466, %v1465
    %v1470 = vpack.c.b16 %v1468, %v1467
    %v1474 = vsel %vm689, %v1460, 0
    %1476 = vmatprep.subr.bf16.mxu0 0
    %1477 = vmatpush1.bf16.msra.mxu0 0
    %1478 = vmatprep.subr.bf16.mxu0 0
    %1479 = vmatpush1.bf16.msra.mxu0 0
    %1480 = vmatprep.subr.bf16.mxu0 0
    %1481 = vmatpush1.bf16.msra.mxu0 0
    %1482 = vmatprep.subr.bf16.mxu0 0
    %1483 = vmatpush1.bf16.msra.mxu0 0
    %1484 = vmatprep.subr.bf16.mxu0 0
    %1485 = vmatpush1.bf16.msra.mxu0 0
    %1486 = vmatprep.subr.bf16.mxu0 0
    %1487 = vmatpush1.bf16.msra.mxu0 0
    %1488 = vmatprep.subr.bf16.mxu0 0
    %1489 = vmatpush1.bf16.msra.mxu0 %v1470
    %1490 = vmatprep.subr.bf16.mxu0 0
    %1491 = vmatpush1.bf16.msra.mxu0 %v1469
    %1492 = vmatprep.subr.bf16.mxu0 0
    %1493 = vmatpush2.bf16.msra.mxu0 0
    %1494 = vmatprep.subr.bf16.mxu0 0
    %1495 = vmatpush2.bf16.msra.mxu0 0
    %1496 = vmatprep.subr.bf16.mxu0 0
    %1497 = vmatpush2.bf16.msra.mxu0 0
    %1498 = vmatprep.subr.bf16.mxu0 0
    %1499 = vmatpush2.bf16.msra.mxu0 0
    %1500 = vmatprep.subr.bf16.mxu0 0
    %1501 = vmatpush2.bf16.msra.mxu0 0
    %1502 = vmatprep.subr.bf16.mxu0 0
    %1503 = vmatpush2.bf16.msra.mxu0 0
    %1504 = vmatprep.subr.bf16.mxu0 0
    %1505 = vmatpush2.bf16.msra.mxu0 0
    %1506 = vmatprep.subr.bf16.mxu0 0
    %1507 = vmatpush2.bf16.msra.mxu0 0
    %1508 = vmatprep.mubr.bf16.mxu0 0
    %1509 = vmatmul.mubr.bf16.gmra.mxu0 %v1474
    %v1510 = vpop.f32.mrf.mxu0
    %v1511 = vadd.f32 0.0, %v1510
    %v1512 = vpop.f32.mrf.mxu0
    %v1513 = vpop.f32.mrf.mxu0
    %v1514 = vadd.f32 0.0, %v1513
    %v1515 = vpop.f32.mrf.mxu0
    %1516 = vdwg.mxu0
    %v1517 = vadd.f32 %v1232, %v1511
    %v1518 = vadd.f32 %v1235, %v1514
    %1519 = vrot.lane.b32.xlu0 %v675, 32
    %v1520 = vpop.permute.xlu0 %1519
    %1521 = vrot.lane.b32.xlu0 %v681, 32
    %v1522 = vpop.permute.xlu0 %1521
    %v1524 = vsel %vm689, %v1520, 0
    %v1527 = vsel %vm689, %v1522, 0
    %1529 = vmatprep.subr.bf16.mxu0 0
    %1530 = vmatpush1.bf16.xpose.msra.mxu0 0
    %1531 = vmatprep.subr.bf16.mxu0 0
    %1532 = vmatpush1.bf16.xpose.msra.mxu0 0
    %1533 = vmatprep.subr.bf16.mxu0 0
    %1534 = vmatpush1.bf16.xpose.msra.mxu0 0
    %1535 = vmatprep.subr.bf16.mxu0 0
    %1536 = vmatpush1.bf16.xpose.msra.mxu0 0
    %1537 = vmatprep.subr.bf16.mxu0 0
    %1538 = vmatpush1.bf16.xpose.msra.mxu0 0
    %1539 = vmatprep.subr.bf16.mxu0 0
    %1540 = vmatpush1.bf16.xpose.msra.mxu0 0
    %1541 = vmatprep.subr.bf16.mxu0 0
    %1542 = vmatpush1.bf16.xpose.msra.mxu0 0
    %1543 = vmatprep.subr.bf16.mxu0 0
    %1544 = vmatpush1.bf16.xpose.msra.mxu0 %v1527
    %1545 = vmatprep.subr.bf16.mxu0 0
    %1546 = vmatpush2.bf16.xpose.msra.mxu0 0
    %1547 = vmatprep.subr.bf16.mxu0 0
    %1548 = vmatpush2.bf16.xpose.msra.mxu0 0
    %1549 = vmatprep.subr.bf16.mxu0 0
    %1550 = vmatpush2.bf16.xpose.msra.mxu0 0
    %1551 = vmatprep.subr.bf16.mxu0 0
    %1552 = vmatpush2.bf16.xpose.msra.mxu0 0
    %1553 = vmatprep.subr.bf16.mxu0 0
    %1554 = vmatpush2.bf16.xpose.msra.mxu0 0
    %1555 = vmatprep.subr.bf16.mxu0 0
    %1556 = vmatpush2.bf16.xpose.msra.mxu0 0
    %1557 = vmatprep.subr.bf16.mxu0 0
    %1558 = vmatpush2.bf16.xpose.msra.mxu0 0
    %1559 = vmatprep.subr.bf16.mxu0 0
    %1560 = vmatpush2.bf16.xpose.msra.mxu0 0
    %1561 = vmatprep.mubr.bf16.mxu0 0
    %1562 = vmatmul.mubr.bf16.gmra.mxu0 %v1524
    %v1563 = vpop.f32.mrf.mxu0
    %v1564 = vadd.f32 0.0, %v1563
    %v1565 = vpop.f32.mrf.mxu0
    %v1566 = vpop.f32.mrf.mxu0
    %v1567 = vpop.f32.mrf.mxu0
    %1568 = vdwg.mxu0
    %1569 = vrot.lane.b32.xlu0 %v676, 32
    %v1570 = vpop.permute.xlu0 %1569
    %1571 = vrot.lane.b32.xlu0 %v682, 32
    %v1572 = vpop.permute.xlu0 %1571
    %v1574 = vsel %vm689, %v1570, 0
    %v1577 = vsel %vm689, %v1572, 0
    %1579 = vmatprep.subr.bf16.mxu0 0
    %1580 = vmatpush1.bf16.xpose.msra.mxu0 0
    %1581 = vmatprep.subr.bf16.mxu0 0
    %1582 = vmatpush1.bf16.xpose.msra.mxu0 0
    %1583 = vmatprep.subr.bf16.mxu0 0
    %1584 = vmatpush1.bf16.xpose.msra.mxu0 0
    %1585 = vmatprep.subr.bf16.mxu0 0
    %1586 = vmatpush1.bf16.xpose.msra.mxu0 0
    %1587 = vmatprep.subr.bf16.mxu0 0
    %1588 = vmatpush1.bf16.xpose.msra.mxu0 0
    %1589 = vmatprep.subr.bf16.mxu0 0
    %1590 = vmatpush1.bf16.xpose.msra.mxu0 0
    %1591 = vmatprep.subr.bf16.mxu0 0
    %1592 = vmatpush1.bf16.xpose.msra.mxu0 0
    %1593 = vmatprep.subr.bf16.mxu0 0
    %1594 = vmatpush1.bf16.xpose.msra.mxu0 %v1577
    %1595 = vmatprep.subr.bf16.mxu0 0
    %1596 = vmatpush2.bf16.xpose.msra.mxu0 0
    %1597 = vmatprep.subr.bf16.mxu0 0
    %1598 = vmatpush2.bf16.xpose.msra.mxu0 0
    %1599 = vmatprep.subr.bf16.mxu0 0
    %1600 = vmatpush2.bf16.xpose.msra.mxu0 0
    %1601 = vmatprep.subr.bf16.mxu0 0
    %1602 = vmatpush2.bf16.xpose.msra.mxu0 0
    %1603 = vmatprep.subr.bf16.mxu0 0
    %1604 = vmatpush2.bf16.xpose.msra.mxu0 0
    %1605 = vmatprep.subr.bf16.mxu0 0
    %1606 = vmatpush2.bf16.xpose.msra.mxu0 0
    %1607 = vmatprep.subr.bf16.mxu0 0
    %1608 = vmatpush2.bf16.xpose.msra.mxu0 0
    %1609 = vmatprep.subr.bf16.mxu0 0
    %1610 = vmatpush2.bf16.xpose.msra.mxu0 0
    %1611 = vmatprep.mubr.bf16.mxu0 0
    %1612 = vmatmul.mubr.bf16.gmra.mxu0 %v1574
    %v1613 = vpop.f32.mrf.mxu0
    %v1614 = vadd.f32 0.0, %v1613
    %v1615 = vpop.f32.mrf.mxu0
    %v1616 = vpop.f32.mrf.mxu0
    %v1617 = vpop.f32.mrf.mxu0
    %1618 = vdwg.mxu0
    %v1619 = vmul.f32 %v1564, 0.17677669
    %v1620 = vmul.f32 %v1614, 0.17677669
    %v1621 = vsel %vm784, %v1619, -inf
    %1622 = vmax.xlane.f32.xlu0 %v1621
    %v1623 = vpop.xlane.xlu0 %1622
    %v1624 = vsel %vm784, %v1620, -inf
    %1625 = vmax.xlane.f32.xlu0 %v1624
    %v1626 = vpop.xlane.xlu0 %1625
    %v1627 = vsub.f32 %v1619, %v1623
    %v1628 = vsub.f32 %v1620, %v1626
    %v1629 = vmul.f32 %v1627, 1.442695
    %v1630 = vpow.pop %v1629
    %v1631 = vmul.f32 %v1628, 1.442695
    %v1632 = vpow.pop %v1631
    %v1633 = vsel %vm784, %v1630, 0.0
    %1634 = vadd.xlane.f32.xlu0 %v1633
    %v1635 = vpop.xlane.xlu0 %1634
    %v1636 = vsel %vm784, %v1632, 0.0
    %1637 = vadd.xlane.f32.xlu0 %v1636
    %v1638 = vpop.xlane.xlu0 %1637
    %v1639 = vrcp.pop %v1635
    %v1640 = vrcp.pop %v1638
    %v1641 = vmul.f32 %v1630, %v1639
    %v1642 = vmul.f32 %v1632, %v1640
    %v1643 = vpack.c.bf16 %v1641, %v1641
    %v1644 = vpack.c.bf16 %v1642, %v1642
    %1645 = vrot.lane.b32.xlu0 %v687, 32
    %v1646 = vpop.permute.xlu0 %1645
    %v1648 = vsel %vm784, %v1643, 0
    %v1651 = vsel %vm812, %v1646, 0
    %1653 = vmatprep.subr.bf16.mxu0 0
    %1654 = vmatpush1.bf16.msra.mxu0 0
    %1655 = vmatprep.subr.bf16.mxu0 0
    %1656 = vmatpush1.bf16.msra.mxu0 0
    %1657 = vmatprep.subr.bf16.mxu0 0
    %1658 = vmatpush1.bf16.msra.mxu0 0
    %1659 = vmatprep.subr.bf16.mxu0 0
    %1660 = vmatpush1.bf16.msra.mxu0 0
    %1661 = vmatprep.subr.bf16.mxu0 0
    %1662 = vmatpush1.bf16.msra.mxu0 0
    %1663 = vmatprep.subr.bf16.mxu0 0
    %1664 = vmatpush1.bf16.msra.mxu0 0
    %1665 = vmatprep.subr.bf16.mxu0 0
    %1666 = vmatpush1.bf16.msra.mxu0 0
    %1667 = vmatprep.subr.bf16.mxu0 0
    %1668 = vmatpush1.bf16.msra.mxu0 %v1651
    %1669 = vmatprep.subr.bf16.mxu0 0
    %1670 = vmatpush2.bf16.msra.mxu0 0
    %1671 = vmatprep.subr.bf16.mxu0 0
    %1672 = vmatpush2.bf16.msra.mxu0 0
    %1673 = vmatprep.subr.bf16.mxu0 0
    %1674 = vmatpush2.bf16.msra.mxu0 0
    %1675 = vmatprep.subr.bf16.mxu0 0
    %1676 = vmatpush2.bf16.msra.mxu0 0
    %1677 = vmatprep.subr.bf16.mxu0 0
    %1678 = vmatpush2.bf16.msra.mxu0 0
    %1679 = vmatprep.subr.bf16.mxu0 0
    %1680 = vmatpush2.bf16.msra.mxu0 0
    %1681 = vmatprep.subr.bf16.mxu0 0
    %1682 = vmatpush2.bf16.msra.mxu0 0
    %1683 = vmatprep.subr.bf16.mxu0 0
    %1684 = vmatpush2.bf16.msra.mxu0 0
    %1685 = vmatprep.mubr.bf16.mxu0 0
    %1686 = vmatmul.mubr.bf16.gmra.mxu0 %v1648
    %v1687 = vpop.f32.mrf.mxu0
    %v1688 = vadd.f32 0.0, %v1687
    %v1689 = vpop.f32.mrf.mxu0
    %v1690 = vpop.f32.mrf.mxu0
    %v1691 = vpop.f32.mrf.mxu0
    %1692 = vdwg.mxu0
    %1693 = vrot.lane.b32.xlu0 %v688, 32
    %v1694 = vpop.permute.xlu0 %1693
    %v1696 = vsel %vm784, %v1644, 0
    %v1699 = vsel %vm812, %v1694, 0
    %1701 = vmatprep.subr.bf16.mxu0 0
    %1702 = vmatpush1.bf16.msra.mxu0 0
    %1703 = vmatprep.subr.bf16.mxu0 0
    %1704 = vmatpush1.bf16.msra.mxu0 0
    %1705 = vmatprep.subr.bf16.mxu0 0
    %1706 = vmatpush1.bf16.msra.mxu0 0
    %1707 = vmatprep.subr.bf16.mxu0 0
    %1708 = vmatpush1.bf16.msra.mxu0 0
    %1709 = vmatprep.subr.bf16.mxu0 0
    %1710 = vmatpush1.bf16.msra.mxu0 0
    %1711 = vmatprep.subr.bf16.mxu0 0
    %1712 = vmatpush1.bf16.msra.mxu0 0
    %1713 = vmatprep.subr.bf16.mxu0 0
    %1714 = vmatpush1.bf16.msra.mxu0 0
    %1715 = vmatprep.subr.bf16.mxu0 0
    %1716 = vmatpush1.bf16.msra.mxu0 %v1699
    %1717 = vmatprep.subr.bf16.mxu0 0
    %1718 = vmatpush2.bf16.msra.mxu0 0
    %1719 = vmatprep.subr.bf16.mxu0 0
    %1720 = vmatpush2.bf16.msra.mxu0 0
    %1721 = vmatprep.subr.bf16.mxu0 0
    %1722 = vmatpush2.bf16.msra.mxu0 0
    %1723 = vmatprep.subr.bf16.mxu0 0
    %1724 = vmatpush2.bf16.msra.mxu0 0
    %1725 = vmatprep.subr.bf16.mxu0 0
    %1726 = vmatpush2.bf16.msra.mxu0 0
    %1727 = vmatprep.subr.bf16.mxu0 0
    %1728 = vmatpush2.bf16.msra.mxu0 0
    %1729 = vmatprep.subr.bf16.mxu0 0
    %1730 = vmatpush2.bf16.msra.mxu0 0
    %1731 = vmatprep.subr.bf16.mxu0 0
    %1732 = vmatpush2.bf16.msra.mxu0 0
    %1733 = vmatprep.mubr.bf16.mxu0 0
    %1734 = vmatmul.mubr.bf16.gmra.mxu0 %v1696
    %v1735 = vpop.f32.mrf.mxu0
    %v1736 = vadd.f32 0.0, %v1735
    %v1737 = vpop.f32.mrf.mxu0
    %v1738 = vpop.f32.mrf.mxu0
    %v1739 = vpop.f32.mrf.mxu0
    %1740 = vdwg.mxu0
    %v1741 = vpack.c.bf16 %v1736, %v1688
    %v1746 = vunpack.c.l.b16 %v275
    %v1747 = vunpack.c.l.b16 %v276
    %v1748 = vunpack.c.l.b16 %v277
    %v1749 = vunpack.c.l.b16 %v278
    %v1750 = vpack.c.b16 %v1747, %v1746
    %v1751 = vpack.c.b16 %v1749, %v1748
    %v1755 = vsel %vm689, %v1741, 0
    %1757 = vmatprep.subr.bf16.mxu0 0
    %1758 = vmatpush1.bf16.msra.mxu0 0
    %1759 = vmatprep.subr.bf16.mxu0 0
    %1760 = vmatpush1.bf16.msra.mxu0 0
    %1761 = vmatprep.subr.bf16.mxu0 0
    %1762 = vmatpush1.bf16.msra.mxu0 0
    %1763 = vmatprep.subr.bf16.mxu0 0
    %1764 = vmatpush1.bf16.msra.mxu0 0
    %1765 = vmatprep.subr.bf16.mxu0 0
    %1766 = vmatpush1.bf16.msra.mxu0 0
    %1767 = vmatprep.subr.bf16.mxu0 0
    %1768 = vmatpush1.bf16.msra.mxu0 0
    %1769 = vmatprep.subr.bf16.mxu0 0
    %1770 = vmatpush1.bf16.msra.mxu0 %v1751
    %1771 = vmatprep.subr.bf16.mxu0 0
    %1772 = vmatpush1.bf16.msra.mxu0 %v1750
    %1773 = vmatprep.subr.bf16.mxu0 0
    %1774 = vmatpush2.bf16.msra.mxu0 0
    %1775 = vmatprep.subr.bf16.mxu0 0
    %1776 = vmatpush2.bf16.msra.mxu0 0
    %1777 = vmatprep.subr.bf16.mxu0 0
    %1778 = vmatpush2.bf16.msra.mxu0 0
    %1779 = vmatprep.subr.bf16.mxu0 0
    %1780 = vmatpush2.bf16.msra.mxu0 0
    %1781 = vmatprep.subr.bf16.mxu0 0
    %1782 = vmatpush2.bf16.msra.mxu0 0
    %1783 = vmatprep.subr.bf16.mxu0 0
    %1784 = vmatpush2.bf16.msra.mxu0 0
    %1785 = vmatprep.subr.bf16.mxu0 0
    %1786 = vmatpush2.bf16.msra.mxu0 0
    %1787 = vmatprep.subr.bf16.mxu0 0
    %1788 = vmatpush2.bf16.msra.mxu0 0
    %1789 = vmatprep.mubr.bf16.mxu0 0
    %1790 = vmatmul.mubr.bf16.gmra.mxu0 %v1755
    %v1791 = vpop.f32.mrf.mxu0
    %v1792 = vadd.f32 0.0, %v1791
    %v1793 = vpop.f32.mrf.mxu0
    %v1794 = vpop.f32.mrf.mxu0
    %v1795 = vadd.f32 0.0, %v1794
    %v1796 = vpop.f32.mrf.mxu0
    %1797 = vdwg.mxu0
    %v1798 = vadd.f32 %v1517, %v1792
    %v1799 = vadd.f32 %v1518, %v1795
    %v1800 = vadd.f32 %v227, %v1798
    %v1801 = vadd.f32 %v228, %v1799
    %v1803 = vlaneseq
    %v1804 = vshrl.u32 %v1803, 7
    %v1805 = vsub.s32 0, %v1804
    %v1806 = vrot.slane %v279, %v1805
    %v1808 = vadd.f32 %v1800, %v1806
    %v1809 = vadd.f32 %v1801, %v1806
    %1810 = vadd.xlane.f32.xlu0 %v1808
    %v1811 = vpop.xlane.xlu0 %1810
    %1812 = vadd.xlane.f32.xlu0 %v1809
    %v1813 = vpop.xlane.xlu0 %1812
    %v1814 = vmul.f32 %v1811, %v384
    %v1815 = vmul.f32 %v1813, %v384
    %v1816 = vsub.f32 %v1808, %v1814
    %v1817 = vsub.f32 %v1809, %v1815
    %v1818 = vmul.f32 %v1816, %v1816
    %v1819 = vmul.f32 %v1817, %v1817
    %1820 = vadd.xlane.f32.xlu0 %v1818
    %v1821 = vpop.xlane.xlu0 %1820
    %1822 = vadd.xlane.f32.xlu0 %v1819
    %v1823 = vpop.xlane.xlu0 %1822
    %v1824 = vmul.f32 %v1821, %v384
    %v1825 = vmul.f32 %v1823, %v384
    %v1826 = vadd.f32 %v1824, 1e-05
    %v1827 = vadd.f32 %v1825, 1e-05
    %v1828 = vrsqrt.pop %v1826
    %v1829 = vrsqrt.pop %v1827
    %v1830 = vmul.f32 %v1816, %v1828
    %v1831 = vmul.f32 %v1817, %v1829
    %v1833 = vlaneseq
    %v1834 = vshrl.u32 %v1833, 7
    %v1835 = vsub.s32 0, %v1834
    %v1836 = vrot.slane %v280, %v1835
    %v1838 = vmul.f32 %v1830, %v1836
    %v1839 = vmul.f32 %v1831, %v1836
    %v1841 = vlaneseq
    %v1842 = vshrl.u32 %v1841, 7
    %v1843 = vsub.s32 0, %v1842
    %v1844 = vrot.slane %v281, %v1843
    %v1846 = vadd.f32 %v1838, %v1844
    %v1847 = vadd.f32 %v1839, %v1844
    %v1848 = vpack.c.bf16 %v1847, %v1846
    %v1850 = vlaneseq
    %v1851 = vshrl.u32 %v1850, 7
    %v1852 = vsub.s32 0, %v1851
    %v1853 = vrot.slane %v314, %v1852
    %v1854 = vlaneseq
    %v1855 = vshrl.u32 %v1854, 7
    %v1856 = vsub.s32 1, %v1855
    %v1857 = vrot.slane %v314, %v1856
    %v1858 = vlaneseq
    %v1859 = vshrl.u32 %v1858, 7
    %v1860 = vsub.s32 2, %v1859
    %v1861 = vrot.slane %v314, %v1860
    %v1862 = vlaneseq
    %v1863 = vshrl.u32 %v1862, 7
    %v1864 = vsub.s32 3, %v1863
    %v1865 = vrot.slane %v314, %v1864
    %v1902 = vunpack.c.l.b16 %v282
    %v1903 = vunpack.c.h.b16 %v282
    %v1904 = vunpack.c.l.b16 %v283
    %v1905 = vunpack.c.h.b16 %v283
    %v1906 = vunpack.c.l.b16 %v284
    %v1907 = vunpack.c.h.b16 %v284
    %v1908 = vunpack.c.l.b16 %v285
    %v1909 = vunpack.c.h.b16 %v285
    %v1910 = vunpack.c.l.b16 %v286
    %v1911 = vunpack.c.h.b16 %v286
    %v1912 = vunpack.c.l.b16 %v287
    %v1913 = vunpack.c.h.b16 %v287
    %v1914 = vunpack.c.l.b16 %v288
    %v1915 = vunpack.c.h.b16 %v288
    %v1916 = vunpack.c.l.b16 %v289
    %v1917 = vunpack.c.h.b16 %v289
    %v1918 = vunpack.c.l.b16 %v290
    %v1919 = vunpack.c.h.b16 %v290
    %v1920 = vunpack.c.l.b16 %v291
    %v1921 = vunpack.c.h.b16 %v291
    %v1922 = vunpack.c.l.b16 %v292
    %v1923 = vunpack.c.h.b16 %v292
    %v1924 = vunpack.c.l.b16 %v293
    %v1925 = vunpack.c.h.b16 %v293
    %v1926 = vunpack.c.l.b16 %v294
    %v1927 = vunpack.c.h.b16 %v294
    %v1928 = vunpack.c.l.b16 %v295
    %v1929 = vunpack.c.h.b16 %v295
    %v1930 = vunpack.c.l.b16 %v296
    %v1931 = vunpack.c.h.b16 %v296
    %v1932 = vunpack.c.l.b16 %v297
    %v1933 = vunpack.c.h.b16 %v297
    %v1934 = vunpack.c.l.b16 %v298
    %v1935 = vunpack.c.h.b16 %v298
    %v1936 = vunpack.c.l.b16 %v299
    %v1937 = vunpack.c.h.b16 %v299
    %v1938 = vunpack.c.l.b16 %v300
    %v1939 = vunpack.c.h.b16 %v300
    %v1940 = vunpack.c.l.b16 %v301
    %v1941 = vunpack.c.h.b16 %v301
    %v1942 = vunpack.c.l.b16 %v302
    %v1943 = vunpack.c.h.b16 %v302
    %v1944 = vunpack.c.l.b16 %v303
    %v1945 = vunpack.c.h.b16 %v303
    %v1946 = vunpack.c.l.b16 %v304
    %v1947 = vunpack.c.h.b16 %v304
    %v1948 = vunpack.c.l.b16 %v305
    %v1949 = vunpack.c.h.b16 %v305
    %v1950 = vunpack.c.l.b16 %v306
    %v1951 = vunpack.c.h.b16 %v306
    %v1952 = vunpack.c.l.b16 %v307
    %v1953 = vunpack.c.h.b16 %v307
    %v1954 = vunpack.c.l.b16 %v308
    %v1955 = vunpack.c.h.b16 %v308
    %v1956 = vunpack.c.l.b16 %v309
    %v1957 = vunpack.c.h.b16 %v309
    %v1958 = vunpack.c.l.b16 %v310
    %v1959 = vunpack.c.h.b16 %v310
    %v1960 = vunpack.c.l.b16 %v311
    %v1961 = vunpack.c.h.b16 %v311
    %v1962 = vunpack.c.l.b16 %v312
    %v1963 = vunpack.c.h.b16 %v312
    %v1964 = vunpack.c.l.b16 %v313
    %v1965 = vunpack.c.h.b16 %v313
    %v1966 = vpack.c.b16 %v1906, %v1902
    %v1967 = vpack.c.b16 %v1907, %v1903
    %v1968 = vpack.c.b16 %v1908, %v1904
    %v1969 = vpack.c.b16 %v1909, %v1905
    %v1970 = vpack.c.b16 %v1914, %v1910
    %v1971 = vpack.c.b16 %v1915, %v1911
    %v1972 = vpack.c.b16 %v1916, %v1912
    %v1973 = vpack.c.b16 %v1917, %v1913
    %v1974 = vpack.c.b16 %v1922, %v1918
    %v1975 = vpack.c.b16 %v1923, %v1919
    %v1976 = vpack.c.b16 %v1924, %v1920
    %v1977 = vpack.c.b16 %v1925, %v1921
    %v1978 = vpack.c.b16 %v1930, %v1926
    %v1979 = vpack.c.b16 %v1931, %v1927
    %v1980 = vpack.c.b16 %v1932, %v1928
    %v1981 = vpack.c.b16 %v1933, %v1929
    %v1982 = vpack.c.b16 %v1938, %v1934
    %v1983 = vpack.c.b16 %v1939, %v1935
    %v1984 = vpack.c.b16 %v1940, %v1936
    %v1985 = vpack.c.b16 %v1941, %v1937
    %v1986 = vpack.c.b16 %v1946, %v1942
    %v1987 = vpack.c.b16 %v1947, %v1943
    %v1988 = vpack.c.b16 %v1948, %v1944
    %v1989 = vpack.c.b16 %v1949, %v1945
    %v1990 = vpack.c.b16 %v1954, %v1950
    %v1991 = vpack.c.b16 %v1955, %v1951
    %v1992 = vpack.c.b16 %v1956, %v1952
    %v1993 = vpack.c.b16 %v1957, %v1953
    %v1994 = vpack.c.b16 %v1962, %v1958
    %v1995 = vpack.c.b16 %v1963, %v1959
    %v1996 = vpack.c.b16 %v1964, %v1960
    %v1997 = vpack.c.b16 %v1965, %v1961
    %2030 = vmatprep.subr.bf16.mxu0 %v1995
    %2031 = vmatpush1.bf16.msra.mxu0 %v1994
    %2032 = vmatprep.subr.bf16.mxu0 %v1991
    %2033 = vmatpush1.bf16.msra.mxu0 %v1990
    %2034 = vmatprep.subr.bf16.mxu0 %v1987
    %2035 = vmatpush1.bf16.msra.mxu0 %v1986
    %2036 = vmatprep.subr.bf16.mxu0 %v1983
    %2037 = vmatpush1.bf16.msra.mxu0 %v1982
    %2038 = vmatprep.subr.bf16.mxu0 %v1979
    %2039 = vmatpush1.bf16.msra.mxu0 %v1978
    %2040 = vmatprep.subr.bf16.mxu0 %v1975
    %2041 = vmatpush1.bf16.msra.mxu0 %v1974
    %2042 = vmatprep.subr.bf16.mxu0 %v1971
    %2043 = vmatpush1.bf16.msra.mxu0 %v1970
    %2044 = vmatprep.subr.bf16.mxu0 %v1967
    %2045 = vmatpush1.bf16.msra.mxu0 %v1966
    %2046 = vmatprep.subr.bf16.mxu0 0
    %2047 = vmatpush2.bf16.msra.mxu0 0
    %2048 = vmatprep.subr.bf16.mxu0 0
    %2049 = vmatpush2.bf16.msra.mxu0 0
    %2050 = vmatprep.subr.bf16.mxu0 0
    %2051 = vmatpush2.bf16.msra.mxu0 0
    %2052 = vmatprep.subr.bf16.mxu0 0
    %2053 = vmatpush2.bf16.msra.mxu0 0
    %2054 = vmatprep.subr.bf16.mxu0 0
    %2055 = vmatpush2.bf16.msra.mxu0 0
    %2056 = vmatprep.subr.bf16.mxu0 0
    %2057 = vmatpush2.bf16.msra.mxu0 0
    %2058 = vmatprep.subr.bf16.mxu0 0
    %2059 = vmatpush2.bf16.msra.mxu0 0
    %2060 = vmatprep.subr.bf16.mxu0 0
    %2061 = vmatpush2.bf16.msra.mxu0 0
    %2062 = vmatprep.mubr.bf16.mxu0 0
    %2063 = vmatmul.mubr.bf16.gmra.mxu0 %v1848
    %v2064 = vpop.f32.mrf.mxu0
    %v2065 = vadd.f32 %v1853, %v2064
    %v2066 = vpop.f32.mrf.mxu0
    %v2067 = vadd.f32 %v1857, %v2066
    %v2068 = vpop.f32.mrf.mxu0
    %v2069 = vadd.f32 %v1853, %v2068
    %v2070 = vpop.f32.mrf.mxu0
    %v2071 = vadd.f32 %v1857, %v2070
    %2072 = vdwg.mxu0
    %2073 = vmatprep.subr.bf16.mxu0 %v1997
    %2074 = vmatpush1.bf16.msra.mxu0 %v1996
    %2075 = vmatprep.subr.bf16.mxu0 %v1993
    %2076 = vmatpush1.bf16.msra.mxu0 %v1992
    %2077 = vmatprep.subr.bf16.mxu0 %v1989
    %2078 = vmatpush1.bf16.msra.mxu0 %v1988
    %2079 = vmatprep.subr.bf16.mxu0 %v1985
    %2080 = vmatpush1.bf16.msra.mxu0 %v1984
    %2081 = vmatprep.subr.bf16.mxu0 %v1981
    %2082 = vmatpush1.bf16.msra.mxu0 %v1980
    %2083 = vmatprep.subr.bf16.mxu0 %v1977
    %2084 = vmatpush1.bf16.msra.mxu0 %v1976
    %2085 = vmatprep.subr.bf16.mxu0 %v1973
    %2086 = vmatpush1.bf16.msra.mxu0 %v1972
    %2087 = vmatprep.subr.bf16.mxu0 %v1969
    %2088 = vmatpush1.bf16.msra.mxu0 %v1968
    %2089 = vmatprep.subr.bf16.mxu0 0
    %2090 = vmatpush2.bf16.msra.mxu0 0
    %2091 = vmatprep.subr.bf16.mxu0 0
    %2092 = vmatpush2.bf16.msra.mxu0 0
    %2093 = vmatprep.subr.bf16.mxu0 0
    %2094 = vmatpush2.bf16.msra.mxu0 0
    %2095 = vmatprep.subr.bf16.mxu0 0
    %2096 = vmatpush2.bf16.msra.mxu0 0
    %2097 = vmatprep.subr.bf16.mxu0 0
    %2098 = vmatpush2.bf16.msra.mxu0 0
    %2099 = vmatprep.subr.bf16.mxu0 0
    %2100 = vmatpush2.bf16.msra.mxu0 0
    %2101 = vmatprep.subr.bf16.mxu0 0
    %2102 = vmatpush2.bf16.msra.mxu0 0
    %2103 = vmatprep.subr.bf16.mxu0 0
    %2104 = vmatpush2.bf16.msra.mxu0 0
    %2105 = vmatprep.mubr.bf16.mxu0 0
    %2106 = vmatmul.mubr.bf16.gmra.mxu0 %v1848
    %v2107 = vpop.f32.mrf.mxu0
    %v2108 = vadd.f32 %v1861, %v2107
    %v2109 = vpop.f32.mrf.mxu0
    %v2110 = vadd.f32 %v1865, %v2109
    %v2111 = vpop.f32.mrf.mxu0
    %v2112 = vadd.f32 %v1861, %v2111
    %v2113 = vpop.f32.mrf.mxu0
    %v2114 = vadd.f32 %v1865, %v2113
    %2115 = vdwg.mxu0
    %v2116 = vmul.f32 %v2065, 0.5
    %v2117 = vmul.f32 %v2067, 0.5
    %v2118 = vmul.f32 %v2108, 0.5
    %v2119 = vmul.f32 %v2110, 0.5
    %v2120 = vmul.f32 %v2069, 0.5
    %v2121 = vmul.f32 %v2071, 0.5
    %v2122 = vmul.f32 %v2112, 0.5
    %v2123 = vmul.f32 %v2114, 0.5
    %v2124 = vmul.f32 %v2065, 0.70710677
    %v2125 = vmul.f32 %v2067, 0.70710677
    %v2126 = vmul.f32 %v2108, 0.70710677
    %v2127 = vmul.f32 %v2110, 0.70710677
    %v2128 = vmul.f32 %v2069, 0.70710677
    %v2129 = vmul.f32 %v2071, 0.70710677
    %v2130 = vmul.f32 %v2112, 0.70710677
    %v2131 = vmul.f32 %v2114, 0.70710677
    %v2132 = vand.u32 2147483647, %v2124
    %v2133 = vand.u32 2147483647, %v2125
    %v2134 = vand.u32 2147483647, %v2126
    %v2135 = vand.u32 2147483647, %v2127
    %v2136 = vand.u32 2147483647, %v2128
    %v2137 = vand.u32 2147483647, %v2129
    %v2138 = vand.u32 2147483647, %v2130
    %v2139 = vand.u32 2147483647, %v2131
    %v2140 = vmul.f32 %v2132, 0.3275911
    %v2141 = vmul.f32 %v2133, 0.3275911
    %v2142 = vmul.f32 %v2134, 0.3275911
    %v2143 = vmul.f32 %v2135, 0.3275911
    %v2144 = vmul.f32 %v2136, 0.3275911
    %v2145 = vmul.f32 %v2137, 0.3275911
    %v2146 = vmul.f32 %v2138, 0.3275911
    %v2147 = vmul.f32 %v2139, 0.3275911
    %v2148 = vadd.f32 %v2140, 1.0
    %v2149 = vadd.f32 %v2141, 1.0
    %v2150 = vadd.f32 %v2142, 1.0
    %v2151 = vadd.f32 %v2143, 1.0
    %v2152 = vadd.f32 %v2144, 1.0
    %v2153 = vadd.f32 %v2145, 1.0
    %v2154 = vadd.f32 %v2146, 1.0
    %v2155 = vadd.f32 %v2147, 1.0
    %v2156 = vrcp.pop %v2148
    %v2157 = vmul.f32 1.0, %v2156
    %v2158 = vrcp.pop %v2149
    %v2159 = vmul.f32 1.0, %v2158
    %v2160 = vrcp.pop %v2150
    %v2161 = vmul.f32 1.0, %v2160
    %v2162 = vrcp.pop %v2151
    %v2163 = vmul.f32 1.0, %v2162
    %v2164 = vrcp.pop %v2152
    %v2165 = vmul.f32 1.0, %v2164
    %v2166 = vrcp.pop %v2153
    %v2167 = vmul.f32 1.0, %v2166
    %v2168 = vrcp.pop %v2154
    %v2169 = vmul.f32 1.0, %v2168
    %v2170 = vrcp.pop %v2155
    %v2171 = vmul.f32 1.0, %v2170
    %v2172 = vmul.f32 %v2157, 1.0614054
    %v2173 = vmul.f32 %v2159, 1.0614054
    %v2174 = vmul.f32 %v2161, 1.0614054
    %v2175 = vmul.f32 %v2163, 1.0614054
    %v2176 = vmul.f32 %v2165, 1.0614054
    %v2177 = vmul.f32 %v2167, 1.0614054
    %v2178 = vmul.f32 %v2169, 1.0614054
    %v2179 = vmul.f32 %v2171, 1.0614054
    %v2180 = vadd.f32 %v2172, -1.4531521
    %v2181 = vadd.f32 %v2173, -1.4531521
    %v2182 = vadd.f32 %v2174, -1.4531521
    %v2183 = vadd.f32 %v2175, -1.4531521
    %v2184 = vadd.f32 %v2176, -1.4531521
    %v2185 = vadd.f32 %v2177, -1.4531521
    %v2186 = vadd.f32 %v2178, -1.4531521
    %v2187 = vadd.f32 %v2179, -1.4531521
    %v2188 = vmul.f32 %v2180, %v2157
    %v2189 = vmul.f32 %v2181, %v2159
    %v2190 = vmul.f32 %v2182, %v2161
    %v2191 = vmul.f32 %v2183, %v2163
    %v2192 = vmul.f32 %v2184, %v2165
    %v2193 = vmul.f32 %v2185, %v2167
    %v2194 = vmul.f32 %v2186, %v2169
    %v2195 = vmul.f32 %v2187, %v2171
    %v2196 = vadd.f32 %v2188, 1.4214138
    %v2197 = vadd.f32 %v2189, 1.4214138
    %v2198 = vadd.f32 %v2190, 1.4214138
    %v2199 = vadd.f32 %v2191, 1.4214138
    %v2200 = vadd.f32 %v2192, 1.4214138
    %v2201 = vadd.f32 %v2193, 1.4214138
    %v2202 = vadd.f32 %v2194, 1.4214138
    %v2203 = vadd.f32 %v2195, 1.4214138
    %v2204 = vmul.f32 %v2196, %v2157
    %v2205 = vmul.f32 %v2197, %v2159
    %v2206 = vmul.f32 %v2198, %v2161
    %v2207 = vmul.f32 %v2199, %v2163
    %v2208 = vmul.f32 %v2200, %v2165
    %v2209 = vmul.f32 %v2201, %v2167
    %v2210 = vmul.f32 %v2202, %v2169
    %v2211 = vmul.f32 %v2203, %v2171
    %v2212 = vadd.f32 %v2204, -0.28449672
    %v2213 = vadd.f32 %v2205, -0.28449672
    %v2214 = vadd.f32 %v2206, -0.28449672
    %v2215 = vadd.f32 %v2207, -0.28449672
    %v2216 = vadd.f32 %v2208, -0.28449672
    %v2217 = vadd.f32 %v2209, -0.28449672
    %v2218 = vadd.f32 %v2210, -0.28449672
    %v2219 = vadd.f32 %v2211, -0.28449672
    %v2220 = vmul.f32 %v2212, %v2157
    %v2221 = vmul.f32 %v2213, %v2159
    %v2222 = vmul.f32 %v2214, %v2161
    %v2223 = vmul.f32 %v2215, %v2163
    %v2224 = vmul.f32 %v2216, %v2165
    %v2225 = vmul.f32 %v2217, %v2167
    %v2226 = vmul.f32 %v2218, %v2169
    %v2227 = vmul.f32 %v2219, %v2171
    %v2228 = vadd.f32 %v2220, 0.2548296
    %v2229 = vadd.f32 %v2221, 0.2548296
    %v2230 = vadd.f32 %v2222, 0.2548296
    %v2231 = vadd.f32 %v2223, 0.2548296
    %v2232 = vadd.f32 %v2224, 0.2548296
    %v2233 = vadd.f32 %v2225, 0.2548296
    %v2234 = vadd.f32 %v2226, 0.2548296
    %v2235 = vadd.f32 %v2227, 0.2548296
    %v2236 = vmul.f32 %v2228, %v2157
    %v2237 = vmul.f32 %v2229, %v2159
    %v2238 = vmul.f32 %v2230, %v2161
    %v2239 = vmul.f32 %v2231, %v2163
    %v2240 = vmul.f32 %v2232, %v2165
    %v2241 = vmul.f32 %v2233, %v2167
    %v2242 = vmul.f32 %v2234, %v2169
    %v2243 = vmul.f32 %v2235, %v2171
    %v2244 = vsub.f32 0.0, %v2132
    %v2245 = vsub.f32 0.0, %v2133
    %v2246 = vsub.f32 0.0, %v2134
    %v2247 = vsub.f32 0.0, %v2135
    %v2248 = vsub.f32 0.0, %v2136
    %v2249 = vsub.f32 0.0, %v2137
    %v2250 = vsub.f32 0.0, %v2138
    %v2251 = vsub.f32 0.0, %v2139
    %v2252 = vmul.f32 %v2244, %v2132
    %v2253 = vmul.f32 %v2245, %v2133
    %v2254 = vmul.f32 %v2246, %v2134
    %v2255 = vmul.f32 %v2247, %v2135
    %v2256 = vmul.f32 %v2248, %v2136
    %v2257 = vmul.f32 %v2249, %v2137
    %v2258 = vmul.f32 %v2250, %v2138
    %v2259 = vmul.f32 %v2251, %v2139
    %v2260 = vmul.f32 %v2252, 1.442695
    %v2261 = vpow.pop %v2260
    %v2262 = vmul.f32 %v2253, 1.442695
    %v2263 = vpow.pop %v2262
    %v2264 = vmul.f32 %v2254, 1.442695
    %v2265 = vpow.pop %v2264
    %v2266 = vmul.f32 %v2255, 1.442695
    %v2267 = vpow.pop %v2266
    %v2268 = vmul.f32 %v2256, 1.442695
    %v2269 = vpow.pop %v2268
    %v2270 = vmul.f32 %v2257, 1.442695
    %v2271 = vpow.pop %v2270
    %v2272 = vmul.f32 %v2258, 1.442695
    %v2273 = vpow.pop %v2272
    %v2274 = vmul.f32 %v2259, 1.442695
    %v2275 = vpow.pop %v2274
    %v2276 = vmul.f32 %v2236, %v2261
    %v2277 = vmul.f32 %v2237, %v2263
    %v2278 = vmul.f32 %v2238, %v2265
    %v2279 = vmul.f32 %v2239, %v2267
    %v2280 = vmul.f32 %v2240, %v2269
    %v2281 = vmul.f32 %v2241, %v2271
    %v2282 = vmul.f32 %v2242, %v2273
    %v2283 = vmul.f32 %v2243, %v2275
    %v2284 = vsub.f32 1.0, %v2276
    %v2285 = vsub.f32 1.0, %v2277
    %v2286 = vsub.f32 1.0, %v2278
    %v2287 = vsub.f32 1.0, %v2279
    %v2288 = vsub.f32 1.0, %v2280
    %v2289 = vsub.f32 1.0, %v2281
    %v2290 = vsub.f32 1.0, %v2282
    %v2291 = vsub.f32 1.0, %v2283
    %vm2292 = vcmp.ge.f32.partialorder %v2124, 0.0
    %vm2293 = vcmp.ge.f32.partialorder %v2125, 0.0
    %vm2294 = vcmp.ge.f32.partialorder %v2126, 0.0
    %vm2295 = vcmp.ge.f32.partialorder %v2127, 0.0
    %vm2296 = vcmp.ge.f32.partialorder %v2128, 0.0
    %vm2297 = vcmp.ge.f32.partialorder %v2129, 0.0
    %vm2298 = vcmp.ge.f32.partialorder %v2130, 0.0
    %vm2299 = vcmp.ge.f32.partialorder %v2131, 0.0
    %v2300 = vsub.f32 0.0, %v2284
    %v2301 = vsub.f32 0.0, %v2285
    %v2302 = vsub.f32 0.0, %v2286
    %v2303 = vsub.f32 0.0, %v2287
    %v2304 = vsub.f32 0.0, %v2288
    %v2305 = vsub.f32 0.0, %v2289
    %v2306 = vsub.f32 0.0, %v2290
    %v2307 = vsub.f32 0.0, %v2291
    %v2308 = vsel %vm2292, %v2284, %v2300
    %v2309 = vsel %vm2293, %v2285, %v2301
    %v2310 = vsel %vm2294, %v2286, %v2302
    %v2311 = vsel %vm2295, %v2287, %v2303
    %v2312 = vsel %vm2296, %v2288, %v2304
    %v2313 = vsel %vm2297, %v2289, %v2305
    %v2314 = vsel %vm2298, %v2290, %v2306
    %v2315 = vsel %vm2299, %v2291, %v2307
    %v2316 = vadd.f32 %v2308, 1.0
    %v2317 = vadd.f32 %v2309, 1.0
    %v2318 = vadd.f32 %v2310, 1.0
    %v2319 = vadd.f32 %v2311, 1.0
    %v2320 = vadd.f32 %v2312, 1.0
    %v2321 = vadd.f32 %v2313, 1.0
    %v2322 = vadd.f32 %v2314, 1.0
    %v2323 = vadd.f32 %v2315, 1.0
    %v2324 = vmul.f32 %v2116, %v2316
    %v2325 = vmul.f32 %v2117, %v2317
    %v2326 = vmul.f32 %v2118, %v2318
    %v2327 = vmul.f32 %v2119, %v2319
    %v2328 = vmul.f32 %v2120, %v2320
    %v2329 = vmul.f32 %v2121, %v2321
    %v2330 = vmul.f32 %v2122, %v2322
    %v2331 = vmul.f32 %v2123, %v2323
    %v2332 = vpack.c.bf16 %v2328, %v2324
    %v2333 = vpack.c.bf16 %v2329, %v2325
    %v2334 = vpack.c.bf16 %v2330, %v2326
    %v2335 = vpack.c.bf16 %v2331, %v2327
    %v2337 = vlaneseq
    %v2338 = vshrl.u32 %v2337, 7
    %v2339 = vsub.s32 0, %v2338
    %v2340 = vrot.slane %v379, %v2339
    %v2406 = vunpack.c.l.b16 %v315
    %v2407 = vunpack.c.l.b16 %v316
    %v2408 = vunpack.c.l.b16 %v317
    %v2409 = vunpack.c.l.b16 %v318
    %v2410 = vunpack.c.l.b16 %v319
    %v2411 = vunpack.c.l.b16 %v320
    %v2412 = vunpack.c.l.b16 %v321
    %v2413 = vunpack.c.l.b16 %v322
    %v2414 = vunpack.c.l.b16 %v323
    %v2415 = vunpack.c.l.b16 %v324
    %v2416 = vunpack.c.l.b16 %v325
    %v2417 = vunpack.c.l.b16 %v326
    %v2418 = vunpack.c.l.b16 %v327
    %v2419 = vunpack.c.l.b16 %v328
    %v2420 = vunpack.c.l.b16 %v329
    %v2421 = vunpack.c.l.b16 %v330
    %v2422 = vunpack.c.l.b16 %v331
    %v2423 = vunpack.c.l.b16 %v332
    %v2424 = vunpack.c.l.b16 %v333
    %v2425 = vunpack.c.l.b16 %v334
    %v2426 = vunpack.c.l.b16 %v335
    %v2427 = vunpack.c.l.b16 %v336
    %v2428 = vunpack.c.l.b16 %v337
    %v2429 = vunpack.c.l.b16 %v338
    %v2430 = vunpack.c.l.b16 %v339
    %v2431 = vunpack.c.l.b16 %v340
    %v2432 = vunpack.c.l.b16 %v341
    %v2433 = vunpack.c.l.b16 %v342
    %v2434 = vunpack.c.l.b16 %v343
    %v2435 = vunpack.c.l.b16 %v344
    %v2436 = vunpack.c.l.b16 %v345
    %v2437 = vunpack.c.l.b16 %v346
    %v2438 = vunpack.c.l.b16 %v347
    %v2439 = vunpack.c.l.b16 %v348
    %v2440 = vunpack.c.l.b16 %v349
    %v2441 = vunpack.c.l.b16 %v350
    %v2442 = vunpack.c.l.b16 %v351
    %v2443 = vunpack.c.l.b16 %v352
    %v2444 = vunpack.c.l.b16 %v353
    %v2445 = vunpack.c.l.b16 %v354
    %v2446 = vunpack.c.l.b16 %v355
    %v2447 = vunpack.c.l.b16 %v356
    %v2448 = vunpack.c.l.b16 %v357
    %v2449 = vunpack.c.l.b16 %v358
    %v2450 = vunpack.c.l.b16 %v359
    %v2451 = vunpack.c.l.b16 %v360
    %v2452 = vunpack.c.l.b16 %v361
    %v2453 = vunpack.c.l.b16 %v362
    %v2454 = vunpack.c.l.b16 %v363
    %v2455 = vunpack.c.l.b16 %v364
    %v2456 = vunpack.c.l.b16 %v365
    %v2457 = vunpack.c.l.b16 %v366
    %v2458 = vunpack.c.l.b16 %v367
    %v2459 = vunpack.c.l.b16 %v368
    %v2460 = vunpack.c.l.b16 %v369
    %v2461 = vunpack.c.l.b16 %v370
    %v2462 = vunpack.c.l.b16 %v371
    %v2463 = vunpack.c.l.b16 %v372
    %v2464 = vunpack.c.l.b16 %v373
    %v2465 = vunpack.c.l.b16 %v374
    %v2466 = vunpack.c.l.b16 %v375
    %v2467 = vunpack.c.l.b16 %v376
    %v2468 = vunpack.c.l.b16 %v377
    %v2469 = vunpack.c.l.b16 %v378
    %v2470 = vpack.c.b16 %v2407, %v2406
    %v2471 = vpack.c.b16 %v2409, %v2408
    %v2472 = vpack.c.b16 %v2411, %v2410
    %v2473 = vpack.c.b16 %v2413, %v2412
    %v2474 = vpack.c.b16 %v2415, %v2414
    %v2475 = vpack.c.b16 %v2417, %v2416
    %v2476 = vpack.c.b16 %v2419, %v2418
    %v2477 = vpack.c.b16 %v2421, %v2420
    %v2478 = vpack.c.b16 %v2423, %v2422
    %v2479 = vpack.c.b16 %v2425, %v2424
    %v2480 = vpack.c.b16 %v2427, %v2426
    %v2481 = vpack.c.b16 %v2429, %v2428
    %v2482 = vpack.c.b16 %v2431, %v2430
    %v2483 = vpack.c.b16 %v2433, %v2432
    %v2484 = vpack.c.b16 %v2435, %v2434
    %v2485 = vpack.c.b16 %v2437, %v2436
    %v2486 = vpack.c.b16 %v2439, %v2438
    %v2487 = vpack.c.b16 %v2441, %v2440
    %v2488 = vpack.c.b16 %v2443, %v2442
    %v2489 = vpack.c.b16 %v2445, %v2444
    %v2490 = vpack.c.b16 %v2447, %v2446
    %v2491 = vpack.c.b16 %v2449, %v2448
    %v2492 = vpack.c.b16 %v2451, %v2450
    %v2493 = vpack.c.b16 %v2453, %v2452
    %v2494 = vpack.c.b16 %v2455, %v2454
    %v2495 = vpack.c.b16 %v2457, %v2456
    %v2496 = vpack.c.b16 %v2459, %v2458
    %v2497 = vpack.c.b16 %v2461, %v2460
    %v2498 = vpack.c.b16 %v2463, %v2462
    %v2499 = vpack.c.b16 %v2465, %v2464
    %v2500 = vpack.c.b16 %v2467, %v2466
    %v2501 = vpack.c.b16 %v2469, %v2468
    %2534 = vmatprep.subr.bf16.mxu0 0
    %2535 = vmatpush1.bf16.msra.mxu0 %v2477
    %2536 = vmatprep.subr.bf16.mxu0 0
    %2537 = vmatpush1.bf16.msra.mxu0 %v2476
    %2538 = vmatprep.subr.bf16.mxu0 0
    %2539 = vmatpush1.bf16.msra.mxu0 %v2475
    %2540 = vmatprep.subr.bf16.mxu0 0
    %2541 = vmatpush1.bf16.msra.mxu0 %v2474
    %2542 = vmatprep.subr.bf16.mxu0 0
    %2543 = vmatpush1.bf16.msra.mxu0 %v2473
    %2544 = vmatprep.subr.bf16.mxu0 0
    %2545 = vmatpush1.bf16.msra.mxu0 %v2472
    %2546 = vmatprep.subr.bf16.mxu0 0
    %2547 = vmatpush1.bf16.msra.mxu0 %v2471
    %2548 = vmatprep.subr.bf16.mxu0 0
    %2549 = vmatpush1.bf16.msra.mxu0 %v2470
    %2550 = vmatprep.subr.bf16.mxu0 0
    %2551 = vmatpush2.bf16.msra.mxu0 %v2485
    %2552 = vmatprep.subr.bf16.mxu0 0
    %2553 = vmatpush2.bf16.msra.mxu0 %v2484
    %2554 = vmatprep.subr.bf16.mxu0 0
    %2555 = vmatpush2.bf16.msra.mxu0 %v2483
    %2556 = vmatprep.subr.bf16.mxu0 0
    %2557 = vmatpush2.bf16.msra.mxu0 %v2482
    %2558 = vmatprep.subr.bf16.mxu0 0
    %2559 = vmatpush2.bf16.msra.mxu0 %v2481
    %2560 = vmatprep.subr.bf16.mxu0 0
    %2561 = vmatpush2.bf16.msra.mxu0 %v2480
    %2562 = vmatprep.subr.bf16.mxu0 0
    %2563 = vmatpush2.bf16.msra.mxu0 %v2479
    %2564 = vmatprep.subr.bf16.mxu0 0
    %2565 = vmatpush2.bf16.msra.mxu0 %v2478
    %2566 = vmatprep.mubr.bf16.mxu0 %v2333
    %2567 = vmatmul.mubr.bf16.gmra.mxu0 %v2332
    %v2568 = vpop.f32.mrf.mxu0
    %v2569 = vadd.f32 %v2340, %v2568
    %v2570 = vpop.f32.mrf.mxu0
    %v2571 = vpop.f32.mrf.mxu0
    %v2572 = vadd.f32 %v2340, %v2571
    %v2573 = vpop.f32.mrf.mxu0
    %2574 = vdwg.mxu0
    %2575 = vmatprep.subr.bf16.mxu0 0
    %2576 = vmatpush1.bf16.msra.mxu0 %v2493
    %2577 = vmatprep.subr.bf16.mxu0 0
    %2578 = vmatpush1.bf16.msra.mxu0 %v2492
    %2579 = vmatprep.subr.bf16.mxu0 0
    %2580 = vmatpush1.bf16.msra.mxu0 %v2491
    %2581 = vmatprep.subr.bf16.mxu0 0
    %2582 = vmatpush1.bf16.msra.mxu0 %v2490
    %2583 = vmatprep.subr.bf16.mxu0 0
    %2584 = vmatpush1.bf16.msra.mxu0 %v2489
    %2585 = vmatprep.subr.bf16.mxu0 0
    %2586 = vmatpush1.bf16.msra.mxu0 %v2488
    %2587 = vmatprep.subr.bf16.mxu0 0
    %2588 = vmatpush1.bf16.msra.mxu0 %v2487
    %2589 = vmatprep.subr.bf16.mxu0 0
    %2590 = vmatpush1.bf16.msra.mxu0 %v2486
    %2591 = vmatprep.subr.bf16.mxu0 0
    %2592 = vmatpush2.bf16.msra.mxu0 %v2501
    %2593 = vmatprep.subr.bf16.mxu0 0
    %2594 = vmatpush2.bf16.msra.mxu0 %v2500
    %2595 = vmatprep.subr.bf16.mxu0 0
    %2596 = vmatpush2.bf16.msra.mxu0 %v2499
    %2597 = vmatprep.subr.bf16.mxu0 0
    %2598 = vmatpush2.bf16.msra.mxu0 %v2498
    %2599 = vmatprep.subr.bf16.mxu0 0
    %2600 = vmatpush2.bf16.msra.mxu0 %v2497
    %2601 = vmatprep.subr.bf16.mxu0 0
    %2602 = vmatpush2.bf16.msra.mxu0 %v2496
    %2603 = vmatprep.subr.bf16.mxu0 0
    %2604 = vmatpush2.bf16.msra.mxu0 %v2495
    %2605 = vmatprep.subr.bf16.mxu0 0
    %2606 = vmatpush2.bf16.msra.mxu0 %v2494
    %2607 = vmatprep.mubr.bf16.mxu0 %v2335
    %2608 = vmatmul.mubr.bf16.gmra.mxu0 %v2334
    %v2609 = vpop.f32.mrf.mxu0
    %v2610 = vadd.f32 %v2569, %v2609
    %v2611 = vpop.f32.mrf.mxu0
    %v2612 = vpop.f32.mrf.mxu0
    %v2613 = vadd.f32 %v2572, %v2612
    %v2614 = vpop.f32.mrf.mxu0
    %2615 = vdwg.mxu0
    %v2616 = vadd.f32 %v1808, %v2610
    %v2617 = vadd.f32 %v1809, %v2613
    %v2618 = vld [vmem:[%s12] sm:$0x1]
    %v2619 = vld [vmem:[%s13] sm:$0x1]
    %v2620 = vld [vmem:[#allocation14] sm:$0xff]
    %v2621 = vld [vmem:[#allocation14 + $0x8] sm:$0xf]
    %v2622 = vld [vmem:[#allocation14 + $0xc] sm:$0xff]
    %v2623 = vld [vmem:[#allocation14 + $0x14] sm:$0xf]
    %v2624 = vld [vmem:[#allocation14 + $0x18] sm:$0xff]
    %v2625 = vld [vmem:[#allocation14 + $0x20] sm:$0xf]
    %v2626 = vld [vmem:[#allocation14 + $0x24] sm:$0xff]
    %v2627 = vld [vmem:[#allocation14 + $0x2c] sm:$0xf]
    %v2628 = vld [vmem:[#allocation14 + $0x30] sm:$0xff]
    %v2629 = vld [vmem:[#allocation14 + $0x38] sm:$0xf]
    %v2630 = vld [vmem:[#allocation14 + $0x3c] sm:$0xff]
    %v2631 = vld [vmem:[#allocation14 + $0x44] sm:$0xf]
    %v2632 = vld [vmem:[#allocation14 + $0x48] sm:$0xff]
    %v2633 = vld [vmem:[#allocation14 + $0x50] sm:$0xf]
    %v2634 = vld [vmem:[#allocation14 + $0x54] sm:$0xff]
    %v2635 = vld [vmem:[#allocation14 + $0x5c] sm:$0xf]
    %v2636 = vld [vmem:[#allocation14 + $0x60] sm:$0xff]
    %v2637 = vld [vmem:[#allocation14 + $0x68] sm:$0xf]
    %v2638 = vld [vmem:[#allocation14 + $0x6c] sm:$0xff]
    %v2639 = vld [vmem:[#allocation14 + $0x74] sm:$0xf]
    %v2640 = vld [vmem:[#allocation14 + $0x78] sm:$0xff]
    %v2641 = vld [vmem:[#allocation14 + $0x80] sm:$0xf]
    %v2642 = vld [vmem:[#allocation14 + $0x84] sm:$0xff]
    %v2643 = vld [vmem:[#allocation14 + $0x8c] sm:$0xf]
    %v2644 = vld [vmem:[#allocation14 + $0x90] sm:$0xff]
    %v2645 = vld [vmem:[#allocation14 + $0x98] sm:$0xf]
    %v2646 = vld [vmem:[#allocation14 + $0x9c] sm:$0xff]
    %v2647 = vld [vmem:[#allocation14 + $0xa4] sm:$0xf]
    %v2648 = vld [vmem:[#allocation14 + $0xa8] sm:$0xff]
    %v2649 = vld [vmem:[#allocation14 + $0xb0] sm:$0xf]
    %v2650 = vld [vmem:[#allocation14 + $0xb4] sm:$0xff]
    %v2651 = vld [vmem:[#allocation14 + $0xbc] sm:$0xf]
    %v2652 = vld [vmem:[#allocation16] sm:$0xf]
    %v2653 = vld [vmem:[#allocation16 + $0x4] sm:$0xf]
    %v2654 = vld [vmem:[#allocation16 + $0x8] sm:$0xf]
    %v2655 = vld [vmem:[#allocation16 + $0xc] sm:$0xf]
    %v2656 = vld [vmem:[#allocation16 + $0x10] sm:$0xf]
    %v2657 = vld [vmem:[#allocation16 + $0x14] sm:$0xf]
    %v2658 = vld [vmem:[#allocation16 + $0x18] sm:$0xf]
    %v2659 = vld [vmem:[#allocation16 + $0x1c] sm:$0xf]
    %v2660 = vld [vmem:[#allocation16 + $0x20] sm:$0xf]
    %v2661 = vld [vmem:[#allocation16 + $0x24] sm:$0xf]
    %v2662 = vld [vmem:[#allocation16 + $0x28] sm:$0xf]
    %v2663 = vld [vmem:[#allocation16 + $0x2c] sm:$0xf]
    %v2664 = vld [vmem:[#allocation16 + $0x30] sm:$0xf]
    %v2665 = vld [vmem:[#allocation16 + $0x34] sm:$0xf]
    %v2666 = vld [vmem:[#allocation16 + $0x38] sm:$0xf]
    %v2667 = vld [vmem:[#allocation16 + $0x3c] sm:$0xf]
    %v2668 = vld [vmem:[%s16] sm:$0x1]
    %v2669 = vld [vmem:[%s17] sm:$0x1]
    %v2670 = vld [vmem:[%s18] sm:$0x1]
    %v2671 = vld [vmem:[#allocation17] sm:$0xff]
    %v2672 = vld [vmem:[#allocation17 + $0x8] sm:$0xff]
    %v2673 = vld [vmem:[#allocation17 + $0x10] sm:$0xff]
    %v2674 = vld [vmem:[#allocation17 + $0x18] sm:$0xff]
    %v2675 = vld [vmem:[#allocation17 + $0x20] sm:$0xff]
    %v2676 = vld [vmem:[#allocation17 + $0x28] sm:$0xff]
    %v2677 = vld [vmem:[#allocation17 + $0x30] sm:$0xff]
    %v2678 = vld [vmem:[#allocation17 + $0x38] sm:$0xff]
    %v2679 = vld [vmem:[#allocation17 + $0x40] sm:$0xff]
    %v2680 = vld [vmem:[#allocation17 + $0x48] sm:$0xff]
    %v2681 = vld [vmem:[#allocation17 + $0x50] sm:$0xff]
    %v2682 = vld [vmem:[#allocation17 + $0x58] sm:$0xff]
    %v2683 = vld [vmem:[#allocation17 + $0x60] sm:$0xff]
    %v2684 = vld [vmem:[#allocation17 + $0x68] sm:$0xff]
    %v2685 = vld [vmem:[#allocation17 + $0x70] sm:$0xff]
    %v2686 = vld [vmem:[#allocation17 + $0x78] sm:$0xff]
    %v2687 = vld [vmem:[#allocation17 + $0x80] sm:$0xff]
    %v2688 = vld [vmem:[#allocation17 + $0x88] sm:$0xff]
    %v2689 = vld [vmem:[#allocation17 + $0x90] sm:$0xff]
    %v2690 = vld [vmem:[#allocation17 + $0x98] sm:$0xff]
    %v2691 = vld [vmem:[#allocation17 + $0xa0] sm:$0xff]
    %v2692 = vld [vmem:[#allocation17 + $0xa8] sm:$0xff]
    %v2693 = vld [vmem:[#allocation17 + $0xb0] sm:$0xff]
    %v2694 = vld [vmem:[#allocation17 + $0xb8] sm:$0xff]
    %v2695 = vld [vmem:[#allocation17 + $0xc0] sm:$0xff]
    %v2696 = vld [vmem:[#allocation17 + $0xc8] sm:$0xff]
    %v2697 = vld [vmem:[#allocation17 + $0xd0] sm:$0xff]
    %v2698 = vld [vmem:[#allocation17 + $0xd8] sm:$0xff]
    %v2699 = vld [vmem:[#allocation17 + $0xe0] sm:$0xff]
    %v2700 = vld [vmem:[#allocation17 + $0xe8] sm:$0xff]
    %v2701 = vld [vmem:[#allocation17 + $0xf0] sm:$0xff]
    %v2702 = vld [vmem:[#allocation17 + $0xf8] sm:$0xff]
    %v2703 = vld [vmem:[%s20] sm:$0xf]
    %v2704 = vld [vmem:[#allocation19] sm:$0xf]
    %v2705 = vld [vmem:[#allocation19 + $0x4] sm:$0xf]
    %v2706 = vld [vmem:[#allocation19 + $0x8] sm:$0xf]
    %v2707 = vld [vmem:[#allocation19 + $0xc] sm:$0xf]
    %v2708 = vld [vmem:[#allocation19 + $0x10] sm:$0xf]
    %v2709 = vld [vmem:[#allocation19 + $0x14] sm:$0xf]
    %v2710 = vld [vmem:[#allocation19 + $0x18] sm:$0xf]
    %v2711 = vld [vmem:[#allocation19 + $0x1c] sm:$0xf]
    %v2712 = vld [vmem:[#allocation19 + $0x20] sm:$0xf]
    %v2713 = vld [vmem:[#allocation19 + $0x24] sm:$0xf]
    %v2714 = vld [vmem:[#allocation19 + $0x28] sm:$0xf]
    %v2715 = vld [vmem:[#allocation19 + $0x2c] sm:$0xf]
    %v2716 = vld [vmem:[#allocation19 + $0x30] sm:$0xf]
    %v2717 = vld [vmem:[#allocation19 + $0x34] sm:$0xf]
    %v2718 = vld [vmem:[#allocation19 + $0x38] sm:$0xf]
    %v2719 = vld [vmem:[#allocation19 + $0x3c] sm:$0xf]
    %v2720 = vld [vmem:[#allocation19 + $0x40] sm:$0xf]
    %v2721 = vld [vmem:[#allocation19 + $0x44] sm:$0xf]
    %v2722 = vld [vmem:[#allocation19 + $0x48] sm:$0xf]
    %v2723 = vld [vmem:[#allocation19 + $0x4c] sm:$0xf]
    %v2724 = vld [vmem:[#allocation19 + $0x50] sm:$0xf]
    %v2725 = vld [vmem:[#allocation19 + $0x54] sm:$0xf]
    %v2726 = vld [vmem:[#allocation19 + $0x58] sm:$0xf]
    %v2727 = vld [vmem:[#allocation19 + $0x5c] sm:$0xf]
    %v2728 = vld [vmem:[#allocation19 + $0x60] sm:$0xf]
    %v2729 = vld [vmem:[#allocation19 + $0x64] sm:$0xf]
    %v2730 = vld [vmem:[#allocation19 + $0x68] sm:$0xf]
    %v2731 = vld [vmem:[#allocation19 + $0x6c] sm:$0xf]
    %v2732 = vld [vmem:[#allocation19 + $0x70] sm:$0xf]
    %v2733 = vld [vmem:[#allocation19 + $0x74] sm:$0xf]
    %v2734 = vld [vmem:[#allocation19 + $0x78] sm:$0xf]
    %v2735 = vld [vmem:[#allocation19 + $0x7c] sm:$0xf]
    %v2736 = vld [vmem:[#allocation19 + $0x80] sm:$0xf]
    %v2737 = vld [vmem:[#allocation19 + $0x84] sm:$0xf]
    %v2738 = vld [vmem:[#allocation19 + $0x88] sm:$0xf]
    %v2739 = vld [vmem:[#allocation19 + $0x8c] sm:$0xf]
    %v2740 = vld [vmem:[#allocation19 + $0x90] sm:$0xf]
    %v2741 = vld [vmem:[#allocation19 + $0x94] sm:$0xf]
    %v2742 = vld [vmem:[#allocation19 + $0x98] sm:$0xf]
    %v2743 = vld [vmem:[#allocation19 + $0x9c] sm:$0xf]
    %v2744 = vld [vmem:[#allocation19 + $0xa0] sm:$0xf]
    %v2745 = vld [vmem:[#allocation19 + $0xa4] sm:$0xf]
    %v2746 = vld [vmem:[#allocation19 + $0xa8] sm:$0xf]
    %v2747 = vld [vmem:[#allocation19 + $0xac] sm:$0xf]
    %v2748 = vld [vmem:[#allocation19 + $0xb0] sm:$0xf]
    %v2749 = vld [vmem:[#allocation19 + $0xb4] sm:$0xf]
    %v2750 = vld [vmem:[#allocation19 + $0xb8] sm:$0xf]
    %v2751 = vld [vmem:[#allocation19 + $0xbc] sm:$0xf]
    %v2752 = vld [vmem:[#allocation19 + $0xc0] sm:$0xf]
    %v2753 = vld [vmem:[#allocation19 + $0xc4] sm:$0xf]
    %v2754 = vld [vmem:[#allocation19 + $0xc8] sm:$0xf]
    %v2755 = vld [vmem:[#allocation19 + $0xcc] sm:$0xf]
    %v2756 = vld [vmem:[#allocation19 + $0xd0] sm:$0xf]
    %v2757 = vld [vmem:[#allocation19 + $0xd4] sm:$0xf]
    %v2758 = vld [vmem:[#allocation19 + $0xd8] sm:$0xf]
    %v2759 = vld [vmem:[#allocation19 + $0xdc] sm:$0xf]
    %v2760 = vld [vmem:[#allocation19 + $0xe0] sm:$0xf]
    %v2761 = vld [vmem:[#allocation19 + $0xe4] sm:$0xf]
    %v2762 = vld [vmem:[#allocation19 + $0xe8] sm:$0xf]
    %v2763 = vld [vmem:[#allocation19 + $0xec] sm:$0xf]
    %v2764 = vld [vmem:[#allocation19 + $0xf0] sm:$0xf]
    %v2765 = vld [vmem:[#allocation19 + $0xf4] sm:$0xf]
    %v2766 = vld [vmem:[#allocation19 + $0xf8] sm:$0xf]
    %v2767 = vld [vmem:[#allocation19 + $0xfc] sm:$0xf]
    %v2768 = vld [vmem:[%s22] sm:$0x1]
    %2769 = vadd.xlane.f32.xlu0 %v2616
    %v2770 = vpop.xlane.xlu0 %2769
    %2771 = vadd.xlane.f32.xlu0 %v2617
    %v2772 = vpop.xlane.xlu0 %2771
    %v2773 = vmul.f32 %v2770, %v384
    %v2774 = vmul.f32 %v2772, %v384
    %v2775 = vsub.f32 %v2616, %v2773
    %v2776 = vsub.f32 %v2617, %v2774
    %v2777 = vmul.f32 %v2775, %v2775
    %v2778 = vmul.f32 %v2776, %v2776
    %2779 = vadd.xlane.f32.xlu0 %v2777
    %v2780 = vpop.xlane.xlu0 %2779
    %2781 = vadd.xlane.f32.xlu0 %v2778
    %v2782 = vpop.xlane.xlu0 %2781
    %v2783 = vmul.f32 %v2780, %v384
    %v2784 = vmul.f32 %v2782, %v384
    %v2785 = vadd.f32 %v2783, 1e-05
    %v2786 = vadd.f32 %v2784, 1e-05
    %v2787 = vrsqrt.pop %v2785
    %v2788 = vrsqrt.pop %v2786
    %v2789 = vmul.f32 %v2775, %v2787
    %v2790 = vmul.f32 %v2776, %v2788
    %v2792 = vlaneseq
    %v2793 = vshrl.u32 %v2792, 7
    %v2794 = vsub.s32 0, %v2793
    %v2795 = vrot.slane %v2618, %v2794
    %v2797 = vmul.f32 %v2789, %v2795
    %v2798 = vmul.f32 %v2790, %v2795
    %v2800 = vlaneseq
    %v2801 = vshrl.u32 %v2800, 7
    %v2802 = vsub.s32 0, %v2801
    %v2803 = vrot.slane %v2619, %v2802
    %v2805 = vadd.f32 %v2797, %v2803
    %v2806 = vadd.f32 %v2798, %v2803
    %v2807 = vpack.c.bf16 %v2806, %v2805
    %v2824 = vunpack.c.l.b16 %v2620
    %v2825 = vunpack.c.l.b16 %v2622
    %v2826 = vunpack.c.l.b16 %v2624
    %v2827 = vunpack.c.l.b16 %v2626
    %v2828 = vunpack.c.l.b16 %v2628
    %v2829 = vunpack.c.l.b16 %v2630
    %v2830 = vunpack.c.l.b16 %v2632
    %v2831 = vunpack.c.l.b16 %v2634
    %v2832 = vunpack.c.l.b16 %v2636
    %v2833 = vunpack.c.l.b16 %v2638
    %v2834 = vunpack.c.l.b16 %v2640
    %v2835 = vunpack.c.l.b16 %v2642
    %v2836 = vunpack.c.l.b16 %v2644
    %v2837 = vunpack.c.l.b16 %v2646
    %v2838 = vunpack.c.l.b16 %v2648
    %v2839 = vunpack.c.l.b16 %v2650
    %v2840 = vpack.c.b16 %v2825, %v2824
    %v2841 = vpack.c.b16 %v2827, %v2826
    %v2842 = vpack.c.b16 %v2829, %v2828
    %v2843 = vpack.c.b16 %v2831, %v2830
    %v2844 = vpack.c.b16 %v2833, %v2832
    %v2845 = vpack.c.b16 %v2835, %v2834
    %v2846 = vpack.c.b16 %v2837, %v2836
    %v2847 = vpack.c.b16 %v2839, %v2838
    %2856 = vmatprep.subr.bf16.mxu0 0
    %2857 = vmatpush1.bf16.msra.mxu0 %v2847
    %2858 = vmatprep.subr.bf16.mxu0 0
    %2859 = vmatpush1.bf16.msra.mxu0 %v2846
    %2860 = vmatprep.subr.bf16.mxu0 0
    %2861 = vmatpush1.bf16.msra.mxu0 %v2845
    %2862 = vmatprep.subr.bf16.mxu0 0
    %2863 = vmatpush1.bf16.msra.mxu0 %v2844
    %2864 = vmatprep.subr.bf16.mxu0 0
    %2865 = vmatpush1.bf16.msra.mxu0 %v2843
    %2866 = vmatprep.subr.bf16.mxu0 0
    %2867 = vmatpush1.bf16.msra.mxu0 %v2842
    %2868 = vmatprep.subr.bf16.mxu0 0
    %2869 = vmatpush1.bf16.msra.mxu0 %v2841
    %2870 = vmatprep.subr.bf16.mxu0 0
    %2871 = vmatpush1.bf16.msra.mxu0 %v2840
    %2872 = vmatprep.subr.bf16.mxu0 0
    %2873 = vmatpush2.bf16.msra.mxu0 0
    %2874 = vmatprep.subr.bf16.mxu0 0
    %2875 = vmatpush2.bf16.msra.mxu0 0
    %2876 = vmatprep.subr.bf16.mxu0 0
    %2877 = vmatpush2.bf16.msra.mxu0 0
    %2878 = vmatprep.subr.bf16.mxu0 0
    %2879 = vmatpush2.bf16.msra.mxu0 0
    %2880 = vmatprep.subr.bf16.mxu0 0
    %2881 = vmatpush2.bf16.msra.mxu0 0
    %2882 = vmatprep.subr.bf16.mxu0 0
    %2883 = vmatpush2.bf16.msra.mxu0 0
    %2884 = vmatprep.subr.bf16.mxu0 0
    %2885 = vmatpush2.bf16.msra.mxu0 0
    %2886 = vmatprep.subr.bf16.mxu0 0
    %2887 = vmatpush2.bf16.msra.mxu0 0
    %2888 = vmatprep.mubr.bf16.mxu0 0
    %2889 = vmatmul.mubr.bf16.gmra.mxu0 %v2807
    %v2890 = vpop.f32.mrf.mxu0
    %v2891 = vadd.f32 0.0, %v2890
    %v2892 = vpop.f32.mrf.mxu0
    %v2893 = vpop.f32.mrf.mxu0
    %v2894 = vadd.f32 0.0, %v2893
    %v2895 = vpop.f32.mrf.mxu0
    %2896 = vdwg.mxu0
    %v2897 = vunpack.c.h.b16 %v2620
    %v2898 = vunpack.c.h.b16 %v2622
    %v2899 = vunpack.c.h.b16 %v2624
    %v2900 = vunpack.c.h.b16 %v2626
    %v2901 = vunpack.c.h.b16 %v2628
    %v2902 = vunpack.c.h.b16 %v2630
    %v2903 = vunpack.c.h.b16 %v2632
    %v2904 = vunpack.c.h.b16 %v2634
    %v2905 = vunpack.c.h.b16 %v2636
    %v2906 = vunpack.c.h.b16 %v2638
    %v2907 = vunpack.c.h.b16 %v2640
    %v2908 = vunpack.c.h.b16 %v2642
    %v2909 = vunpack.c.h.b16 %v2644
    %v2910 = vunpack.c.h.b16 %v2646
    %v2911 = vunpack.c.h.b16 %v2648
    %v2912 = vunpack.c.h.b16 %v2650
    %v2913 = vpack.c.b16 %v2898, %v2897
    %v2914 = vpack.c.b16 %v2900, %v2899
    %v2915 = vpack.c.b16 %v2902, %v2901
    %v2916 = vpack.c.b16 %v2904, %v2903
    %v2917 = vpack.c.b16 %v2906, %v2905
    %v2918 = vpack.c.b16 %v2908, %v2907
    %v2919 = vpack.c.b16 %v2910, %v2909
    %v2920 = vpack.c.b16 %v2912, %v2911
    %2929 = vmatprep.subr.bf16.mxu0 0
    %2930 = vmatpush1.bf16.msra.mxu0 %v2920
    %2931 = vmatprep.subr.bf16.mxu0 0
    %2932 = vmatpush1.bf16.msra.mxu0 %v2919
    %2933 = vmatprep.subr.bf16.mxu0 0
    %2934 = vmatpush1.bf16.msra.mxu0 %v2918
    %2935 = vmatprep.subr.bf16.mxu0 0
    %2936 = vmatpush1.bf16.msra.mxu0 %v2917
    %2937 = vmatprep.subr.bf16.mxu0 0
    %2938 = vmatpush1.bf16.msra.mxu0 %v2916
    %2939 = vmatprep.subr.bf16.mxu0 0
    %2940 = vmatpush1.bf16.msra.mxu0 %v2915
    %2941 = vmatprep.subr.bf16.mxu0 0
    %2942 = vmatpush1.bf16.msra.mxu0 %v2914
    %2943 = vmatprep.subr.bf16.mxu0 0
    %2944 = vmatpush1.bf16.msra.mxu0 %v2913
    %2945 = vmatprep.subr.bf16.mxu0 0
    %2946 = vmatpush2.bf16.msra.mxu0 0
    %2947 = vmatprep.subr.bf16.mxu0 0
    %2948 = vmatpush2.bf16.msra.mxu0 0
    %2949 = vmatprep.subr.bf16.mxu0 0
    %2950 = vmatpush2.bf16.msra.mxu0 0
    %2951 = vmatprep.subr.bf16.mxu0 0
    %2952 = vmatpush2.bf16.msra.mxu0 0
    %2953 = vmatprep.subr.bf16.mxu0 0
    %2954 = vmatpush2.bf16.msra.mxu0 0
    %2955 = vmatprep.subr.bf16.mxu0 0
    %2956 = vmatpush2.bf16.msra.mxu0 0
    %2957 = vmatprep.subr.bf16.mxu0 0
    %2958 = vmatpush2.bf16.msra.mxu0 0
    %2959 = vmatprep.subr.bf16.mxu0 0
    %2960 = vmatpush2.bf16.msra.mxu0 0
    %2961 = vmatprep.mubr.bf16.mxu0 0
    %2962 = vmatmul.mubr.bf16.gmra.mxu0 %v2807
    %v2963 = vpop.f32.mrf.mxu0
    %v2964 = vadd.f32 0.0, %v2963
    %v2965 = vpop.f32.mrf.mxu0
    %v2966 = vpop.f32.mrf.mxu0
    %v2967 = vadd.f32 0.0, %v2966
    %v2968 = vpop.f32.mrf.mxu0
    %2969 = vdwg.mxu0
    %v2986 = vunpack.c.l.b16 %v2621
    %v2987 = vunpack.c.l.b16 %v2623
    %v2988 = vunpack.c.l.b16 %v2625
    %v2989 = vunpack.c.l.b16 %v2627
    %v2990 = vunpack.c.l.b16 %v2629
    %v2991 = vunpack.c.l.b16 %v2631
    %v2992 = vunpack.c.l.b16 %v2633
    %v2993 = vunpack.c.l.b16 %v2635
    %v2994 = vunpack.c.l.b16 %v2637
    %v2995 = vunpack.c.l.b16 %v2639
    %v2996 = vunpack.c.l.b16 %v2641
    %v2997 = vunpack.c.l.b16 %v2643
    %v2998 = vunpack.c.l.b16 %v2645
    %v2999 = vunpack.c.l.b16 %v2647
    %v3000 = vunpack.c.l.b16 %v2649
    %v3001 = vunpack.c.l.b16 %v2651
    %v3002 = vpack.c.b16 %v2987, %v2986
    %v3003 = vpack.c.b16 %v2989, %v2988
    %v3004 = vpack.c.b16 %v2991, %v2990
    %v3005 = vpack.c.b16 %v2993, %v2992
    %v3006 = vpack.c.b16 %v2995, %v2994
    %v3007 = vpack.c.b16 %v2997, %v2996
    %v3008 = vpack.c.b16 %v2999, %v2998
    %v3009 = vpack.c.b16 %v3001, %v3000
    %3018 = vmatprep.subr.bf16.mxu0 0
    %3019 = vmatpush1.bf16.msra.mxu0 %v3009
    %3020 = vmatprep.subr.bf16.mxu0 0
    %3021 = vmatpush1.bf16.msra.mxu0 %v3008
    %3022 = vmatprep.subr.bf16.mxu0 0
    %3023 = vmatpush1.bf16.msra.mxu0 %v3007
    %3024 = vmatprep.subr.bf16.mxu0 0
    %3025 = vmatpush1.bf16.msra.mxu0 %v3006
    %3026 = vmatprep.subr.bf16.mxu0 0
    %3027 = vmatpush1.bf16.msra.mxu0 %v3005
    %3028 = vmatprep.subr.bf16.mxu0 0
    %3029 = vmatpush1.bf16.msra.mxu0 %v3004
    %3030 = vmatprep.subr.bf16.mxu0 0
    %3031 = vmatpush1.bf16.msra.mxu0 %v3003
    %3032 = vmatprep.subr.bf16.mxu0 0
    %3033 = vmatpush1.bf16.msra.mxu0 %v3002
    %3034 = vmatprep.subr.bf16.mxu0 0
    %3035 = vmatpush2.bf16.msra.mxu0 0
    %3036 = vmatprep.subr.bf16.mxu0 0
    %3037 = vmatpush2.bf16.msra.mxu0 0
    %3038 = vmatprep.subr.bf16.mxu0 0
    %3039 = vmatpush2.bf16.msra.mxu0 0
    %3040 = vmatprep.subr.bf16.mxu0 0
    %3041 = vmatpush2.bf16.msra.mxu0 0
    %3042 = vmatprep.subr.bf16.mxu0 0
    %3043 = vmatpush2.bf16.msra.mxu0 0
    %3044 = vmatprep.subr.bf16.mxu0 0
    %3045 = vmatpush2.bf16.msra.mxu0 0
    %3046 = vmatprep.subr.bf16.mxu0 0
    %3047 = vmatpush2.bf16.msra.mxu0 0
    %3048 = vmatprep.subr.bf16.mxu0 0
    %3049 = vmatpush2.bf16.msra.mxu0 0
    %3050 = vmatprep.mubr.bf16.mxu0 0
    %3051 = vmatmul.mubr.bf16.gmra.mxu0 %v2807
    %v3052 = vpop.f32.mrf.mxu0
    %v3053 = vadd.f32 0.0, %v3052
    %v3054 = vpop.f32.mrf.mxu0
    %v3055 = vpop.f32.mrf.mxu0
    %v3056 = vadd.f32 0.0, %v3055
    %v3057 = vpop.f32.mrf.mxu0
    %3058 = vdwg.mxu0
    %v3059 = vpack.c.bf16 %v2894, %v2891
    %v3061 = vunpack.c.l.b16 %v3059
    %v3062 = vunpack.c.h.b16 %v3059
    %v3063 = vpack.c.b16 %v3061, %v3061
    %v3064 = vpack.c.b16 %v3062, %v3062
    %v3065 = vpack.c.bf16 %v2967, %v2964
    %v3067 = vunpack.c.l.b16 %v3065
    %v3068 = vunpack.c.h.b16 %v3065
    %v3069 = vpack.c.b16 %v3067, %v3067
    %v3070 = vpack.c.b16 %v3068, %v3068
    %v3071 = vpack.c.bf16 %v3056, %v3053
    %v3073 = vunpack.c.l.b16 %v3071
    %v3074 = vunpack.c.h.b16 %v3071
    %v3075 = vpack.c.b16 %v3073, %v3073
    %v3076 = vpack.c.b16 %v3074, %v3074
    %v3078 = vsel %vm689, %v3063, 0
    %v3081 = vsel %vm689, %v3069, 0
    %3083 = vmatprep.subr.bf16.mxu0 0
    %3084 = vmatpush1.bf16.xpose.msra.mxu0 0
    %3085 = vmatprep.subr.bf16.mxu0 0
    %3086 = vmatpush1.bf16.xpose.msra.mxu0 0
    %3087 = vmatprep.subr.bf16.mxu0 0
    %3088 = vmatpush1.bf16.xpose.msra.mxu0 0
    %3089 = vmatprep.subr.bf16.mxu0 0
    %3090 = vmatpush1.bf16.xpose.msra.mxu0 0
    %3091 = vmatprep.subr.bf16.mxu0 0
    %3092 = vmatpush1.bf16.xpose.msra.mxu0 0
    %3093 = vmatprep.subr.bf16.mxu0 0
    %3094 = vmatpush1.bf16.xpose.msra.mxu0 0
    %3095 = vmatprep.subr.bf16.mxu0 0
    %3096 = vmatpush1.bf16.xpose.msra.mxu0 0
    %3097 = vmatprep.subr.bf16.mxu0 0
    %3098 = vmatpush1.bf16.xpose.msra.mxu0 %v3081
    %3099 = vmatprep.subr.bf16.mxu0 0
    %3100 = vmatpush2.bf16.xpose.msra.mxu0 0
    %3101 = vmatprep.subr.bf16.mxu0 0
    %3102 = vmatpush2.bf16.xpose.msra.mxu0 0
    %3103 = vmatprep.subr.bf16.mxu0 0
    %3104 = vmatpush2.bf16.xpose.msra.mxu0 0
    %3105 = vmatprep.subr.bf16.mxu0 0
    %3106 = vmatpush2.bf16.xpose.msra.mxu0 0
    %3107 = vmatprep.subr.bf16.mxu0 0
    %3108 = vmatpush2.bf16.xpose.msra.mxu0 0
    %3109 = vmatprep.subr.bf16.mxu0 0
    %3110 = vmatpush2.bf16.xpose.msra.mxu0 0
    %3111 = vmatprep.subr.bf16.mxu0 0
    %3112 = vmatpush2.bf16.xpose.msra.mxu0 0
    %3113 = vmatprep.subr.bf16.mxu0 0
    %3114 = vmatpush2.bf16.xpose.msra.mxu0 0
    %3115 = vmatprep.mubr.bf16.mxu0 0
    %3116 = vmatmul.mubr.bf16.gmra.mxu0 %v3078
    %v3117 = vpop.f32.mrf.mxu0
    %v3118 = vadd.f32 0.0, %v3117
    %v3119 = vpop.f32.mrf.mxu0
    %v3120 = vpop.f32.mrf.mxu0
    %v3121 = vpop.f32.mrf.mxu0
    %3122 = vdwg.mxu0
    %v3124 = vsel %vm689, %v3064, 0
    %v3127 = vsel %vm689, %v3070, 0
    %3129 = vmatprep.subr.bf16.mxu0 0
    %3130 = vmatpush1.bf16.xpose.msra.mxu0 0
    %3131 = vmatprep.subr.bf16.mxu0 0
    %3132 = vmatpush1.bf16.xpose.msra.mxu0 0
    %3133 = vmatprep.subr.bf16.mxu0 0
    %3134 = vmatpush1.bf16.xpose.msra.mxu0 0
    %3135 = vmatprep.subr.bf16.mxu0 0
    %3136 = vmatpush1.bf16.xpose.msra.mxu0 0
    %3137 = vmatprep.subr.bf16.mxu0 0
    %3138 = vmatpush1.bf16.xpose.msra.mxu0 0
    %3139 = vmatprep.subr.bf16.mxu0 0
    %3140 = vmatpush1.bf16.xpose.msra.mxu0 0
    %3141 = vmatprep.subr.bf16.mxu0 0
    %3142 = vmatpush1.bf16.xpose.msra.mxu0 0
    %3143 = vmatprep.subr.bf16.mxu0 0
    %3144 = vmatpush1.bf16.xpose.msra.mxu0 %v3127
    %3145 = vmatprep.subr.bf16.mxu0 0
    %3146 = vmatpush2.bf16.xpose.msra.mxu0 0
    %3147 = vmatprep.subr.bf16.mxu0 0
    %3148 = vmatpush2.bf16.xpose.msra.mxu0 0
    %3149 = vmatprep.subr.bf16.mxu0 0
    %3150 = vmatpush2.bf16.xpose.msra.mxu0 0
    %3151 = vmatprep.subr.bf16.mxu0 0
    %3152 = vmatpush2.bf16.xpose.msra.mxu0 0
    %3153 = vmatprep.subr.bf16.mxu0 0
    %3154 = vmatpush2.bf16.xpose.msra.mxu0 0
    %3155 = vmatprep.subr.bf16.mxu0 0
    %3156 = vmatpush2.bf16.xpose.msra.mxu0 0
    %3157 = vmatprep.subr.bf16.mxu0 0
    %3158 = vmatpush2.bf16.xpose.msra.mxu0 0
    %3159 = vmatprep.subr.bf16.mxu0 0
    %3160 = vmatpush2.bf16.xpose.msra.mxu0 0
    %3161 = vmatprep.mubr.bf16.mxu0 0
    %3162 = vmatmul.mubr.bf16.gmra.mxu0 %v3124
    %v3163 = vpop.f32.mrf.mxu0
    %v3164 = vadd.f32 0.0, %v3163
    %v3165 = vpop.f32.mrf.mxu0
    %v3166 = vpop.f32.mrf.mxu0
    %v3167 = vpop.f32.mrf.mxu0
    %3168 = vdwg.mxu0
    %v3169 = vmul.f32 %v3118, 0.17677669
    %v3170 = vmul.f32 %v3164, 0.17677669
    %v3171 = vsel %vm784, %v3169, -inf
    %3172 = vmax.xlane.f32.xlu0 %v3171
    %v3173 = vpop.xlane.xlu0 %3172
    %v3174 = vsel %vm784, %v3170, -inf
    %3175 = vmax.xlane.f32.xlu0 %v3174
    %v3176 = vpop.xlane.xlu0 %3175
    %v3177 = vsub.f32 %v3169, %v3173
    %v3178 = vsub.f32 %v3170, %v3176
    %v3179 = vmul.f32 %v3177, 1.442695
    %v3180 = vpow.pop %v3179
    %v3181 = vmul.f32 %v3178, 1.442695
    %v3182 = vpow.pop %v3181
    %v3183 = vsel %vm784, %v3180, 0.0
    %3184 = vadd.xlane.f32.xlu0 %v3183
    %v3185 = vpop.xlane.xlu0 %3184
    %v3186 = vsel %vm784, %v3182, 0.0
    %3187 = vadd.xlane.f32.xlu0 %v3186
    %v3188 = vpop.xlane.xlu0 %3187
    %v3189 = vrcp.pop %v3185
    %v3190 = vrcp.pop %v3188
    %v3191 = vmul.f32 %v3180, %v3189
    %v3192 = vmul.f32 %v3182, %v3190
    %v3193 = vpack.c.bf16 %v3191, %v3191
    %v3194 = vpack.c.bf16 %v3192, %v3192
    %v3196 = vsel %vm784, %v3193, 0
    %v3199 = vsel %vm812, %v3075, 0
    %3201 = vmatprep.subr.bf16.mxu0 0
    %3202 = vmatpush1.bf16.msra.mxu0 0
    %3203 = vmatprep.subr.bf16.mxu0 0
    %3204 = vmatpush1.bf16.msra.mxu0 0
    %3205 = vmatprep.subr.bf16.mxu0 0
    %3206 = vmatpush1.bf16.msra.mxu0 0
    %3207 = vmatprep.subr.bf16.mxu0 0
    %3208 = vmatpush1.bf16.msra.mxu0 0
    %3209 = vmatprep.subr.bf16.mxu0 0
    %3210 = vmatpush1.bf16.msra.mxu0 0
    %3211 = vmatprep.subr.bf16.mxu0 0
    %3212 = vmatpush1.bf16.msra.mxu0 0
    %3213 = vmatprep.subr.bf16.mxu0 0
    %3214 = vmatpush1.bf16.msra.mxu0 0
    %3215 = vmatprep.subr.bf16.mxu0 0
    %3216 = vmatpush1.bf16.msra.mxu0 %v3199
    %3217 = vmatprep.subr.bf16.mxu0 0
    %3218 = vmatpush2.bf16.msra.mxu0 0
    %3219 = vmatprep.subr.bf16.mxu0 0
    %3220 = vmatpush2.bf16.msra.mxu0 0
    %3221 = vmatprep.subr.bf16.mxu0 0
    %3222 = vmatpush2.bf16.msra.mxu0 0
    %3223 = vmatprep.subr.bf16.mxu0 0
    %3224 = vmatpush2.bf16.msra.mxu0 0
    %3225 = vmatprep.subr.bf16.mxu0 0
    %3226 = vmatpush2.bf16.msra.mxu0 0
    %3227 = vmatprep.subr.bf16.mxu0 0
    %3228 = vmatpush2.bf16.msra.mxu0 0
    %3229 = vmatprep.subr.bf16.mxu0 0
    %3230 = vmatpush2.bf16.msra.mxu0 0
    %3231 = vmatprep.subr.bf16.mxu0 0
    %3232 = vmatpush2.bf16.msra.mxu0 0
    %3233 = vmatprep.mubr.bf16.mxu0 0
    %3234 = vmatmul.mubr.bf16.gmra.mxu0 %v3196
    %v3235 = vpop.f32.mrf.mxu0
    %v3236 = vadd.f32 0.0, %v3235
    %v3237 = vpop.f32.mrf.mxu0
    %v3238 = vpop.f32.mrf.mxu0
    %v3239 = vpop.f32.mrf.mxu0
    %3240 = vdwg.mxu0
    %v3242 = vsel %vm784, %v3194, 0
    %v3245 = vsel %vm812, %v3076, 0
    %3247 = vmatprep.subr.bf16.mxu0 0
    %3248 = vmatpush1.bf16.msra.mxu0 0
    %3249 = vmatprep.subr.bf16.mxu0 0
    %3250 = vmatpush1.bf16.msra.mxu0 0
    %3251 = vmatprep.subr.bf16.mxu0 0
    %3252 = vmatpush1.bf16.msra.mxu0 0
    %3253 = vmatprep.subr.bf16.mxu0 0
    %3254 = vmatpush1.bf16.msra.mxu0 0
    %3255 = vmatprep.subr.bf16.mxu0 0
    %3256 = vmatpush1.bf16.msra.mxu0 0
    %3257 = vmatprep.subr.bf16.mxu0 0
    %3258 = vmatpush1.bf16.msra.mxu0 0
    %3259 = vmatprep.subr.bf16.mxu0 0
    %3260 = vmatpush1.bf16.msra.mxu0 0
    %3261 = vmatprep.subr.bf16.mxu0 0
    %3262 = vmatpush1.bf16.msra.mxu0 %v3245
    %3263 = vmatprep.subr.bf16.mxu0 0
    %3264 = vmatpush2.bf16.msra.mxu0 0
    %3265 = vmatprep.subr.bf16.mxu0 0
    %3266 = vmatpush2.bf16.msra.mxu0 0
    %3267 = vmatprep.subr.bf16.mxu0 0
    %3268 = vmatpush2.bf16.msra.mxu0 0
    %3269 = vmatprep.subr.bf16.mxu0 0
    %3270 = vmatpush2.bf16.msra.mxu0 0
    %3271 = vmatprep.subr.bf16.mxu0 0
    %3272 = vmatpush2.bf16.msra.mxu0 0
    %3273 = vmatprep.subr.bf16.mxu0 0
    %3274 = vmatpush2.bf16.msra.mxu0 0
    %3275 = vmatprep.subr.bf16.mxu0 0
    %3276 = vmatpush2.bf16.msra.mxu0 0
    %3277 = vmatprep.subr.bf16.mxu0 0
    %3278 = vmatpush2.bf16.msra.mxu0 0
    %3279 = vmatprep.mubr.bf16.mxu0 0
    %3280 = vmatmul.mubr.bf16.gmra.mxu0 %v3242
    %v3281 = vpop.f32.mrf.mxu0
    %v3282 = vadd.f32 0.0, %v3281
    %v3283 = vpop.f32.mrf.mxu0
    %v3284 = vpop.f32.mrf.mxu0
    %v3285 = vpop.f32.mrf.mxu0
    %3286 = vdwg.mxu0
    %v3287 = vpack.c.bf16 %v3282, %v3236
    %3288 = vrot.lane.b32.xlu0 %v3063, 96
    %v3289 = vpop.permute.xlu0 %3288
    %3290 = vrot.lane.b32.xlu0 %v3069, 96
    %v3291 = vpop.permute.xlu0 %3290
    %v3293 = vsel %vm689, %v3289, 0
    %v3296 = vsel %vm689, %v3291, 0
    %3298 = vmatprep.subr.bf16.mxu0 0
    %3299 = vmatpush1.bf16.xpose.msra.mxu0 0
    %3300 = vmatprep.subr.bf16.mxu0 0
    %3301 = vmatpush1.bf16.xpose.msra.mxu0 0
    %3302 = vmatprep.subr.bf16.mxu0 0
    %3303 = vmatpush1.bf16.xpose.msra.mxu0 0
    %3304 = vmatprep.subr.bf16.mxu0 0
    %3305 = vmatpush1.bf16.xpose.msra.mxu0 0
    %3306 = vmatprep.subr.bf16.mxu0 0
    %3307 = vmatpush1.bf16.xpose.msra.mxu0 0
    %3308 = vmatprep.subr.bf16.mxu0 0
    %3309 = vmatpush1.bf16.xpose.msra.mxu0 0
    %3310 = vmatprep.subr.bf16.mxu0 0
    %3311 = vmatpush1.bf16.xpose.msra.mxu0 0
    %3312 = vmatprep.subr.bf16.mxu0 0
    %3313 = vmatpush1.bf16.xpose.msra.mxu0 %v3296
    %3314 = vmatprep.subr.bf16.mxu0 0
    %3315 = vmatpush2.bf16.xpose.msra.mxu0 0
    %3316 = vmatprep.subr.bf16.mxu0 0
    %3317 = vmatpush2.bf16.xpose.msra.mxu0 0
    %3318 = vmatprep.subr.bf16.mxu0 0
    %3319 = vmatpush2.bf16.xpose.msra.mxu0 0
    %3320 = vmatprep.subr.bf16.mxu0 0
    %3321 = vmatpush2.bf16.xpose.msra.mxu0 0
    %3322 = vmatprep.subr.bf16.mxu0 0
    %3323 = vmatpush2.bf16.xpose.msra.mxu0 0
    %3324 = vmatprep.subr.bf16.mxu0 0
    %3325 = vmatpush2.bf16.xpose.msra.mxu0 0
    %3326 = vmatprep.subr.bf16.mxu0 0
    %3327 = vmatpush2.bf16.xpose.msra.mxu0 0
    %3328 = vmatprep.subr.bf16.mxu0 0
    %3329 = vmatpush2.bf16.xpose.msra.mxu0 0
    %3330 = vmatprep.mubr.bf16.mxu0 0
    %3331 = vmatmul.mubr.bf16.gmra.mxu0 %v3293
    %v3332 = vpop.f32.mrf.mxu0
    %v3333 = vadd.f32 0.0, %v3332
    %v3334 = vpop.f32.mrf.mxu0
    %v3335 = vpop.f32.mrf.mxu0
    %v3336 = vpop.f32.mrf.mxu0
    %3337 = vdwg.mxu0
    %3338 = vrot.lane.b32.xlu0 %v3064, 96
    %v3339 = vpop.permute.xlu0 %3338
    %3340 = vrot.lane.b32.xlu0 %v3070, 96
    %v3341 = vpop.permute.xlu0 %3340
    %v3343 = vsel %vm689, %v3339, 0
    %v3346 = vsel %vm689, %v3341, 0
    %3348 = vmatprep.subr.bf16.mxu0 0
    %3349 = vmatpush1.bf16.xpose.msra.mxu0 0
    %3350 = vmatprep.subr.bf16.mxu0 0
    %3351 = vmatpush1.bf16.xpose.msra.mxu0 0
    %3352 = vmatprep.subr.bf16.mxu0 0
    %3353 = vmatpush1.bf16.xpose.msra.mxu0 0
    %3354 = vmatprep.subr.bf16.mxu0 0
    %3355 = vmatpush1.bf16.xpose.msra.mxu0 0
    %3356 = vmatprep.subr.bf16.mxu0 0
    %3357 = vmatpush1.bf16.xpose.msra.mxu0 0
    %3358 = vmatprep.subr.bf16.mxu0 0
    %3359 = vmatpush1.bf16.xpose.msra.mxu0 0
    %3360 = vmatprep.subr.bf16.mxu0 0
    %3361 = vmatpush1.bf16.xpose.msra.mxu0 0
    %3362 = vmatprep.subr.bf16.mxu0 0
    %3363 = vmatpush1.bf16.xpose.msra.mxu0 %v3346
    %3364 = vmatprep.subr.bf16.mxu0 0
    %3365 = vmatpush2.bf16.xpose.msra.mxu0 0
    %3366 = vmatprep.subr.bf16.mxu0 0
    %3367 = vmatpush2.bf16.xpose.msra.mxu0 0
    %3368 = vmatprep.subr.bf16.mxu0 0
    %3369 = vmatpush2.bf16.xpose.msra.mxu0 0
    %3370 = vmatprep.subr.bf16.mxu0 0
    %3371 = vmatpush2.bf16.xpose.msra.mxu0 0
    %3372 = vmatprep.subr.bf16.mxu0 0
    %3373 = vmatpush2.bf16.xpose.msra.mxu0 0
    %3374 = vmatprep.subr.bf16.mxu0 0
    %3375 = vmatpush2.bf16.xpose.msra.mxu0 0
    %3376 = vmatprep.subr.bf16.mxu0 0
    %3377 = vmatpush2.bf16.xpose.msra.mxu0 0
    %3378 = vmatprep.subr.bf16.mxu0 0
    %3379 = vmatpush2.bf16.xpose.msra.mxu0 0
    %3380 = vmatprep.mubr.bf16.mxu0 0
    %3381 = vmatmul.mubr.bf16.gmra.mxu0 %v3343
    %v3382 = vpop.f32.mrf.mxu0
    %v3383 = vadd.f32 0.0, %v3382
    %v3384 = vpop.f32.mrf.mxu0
    %v3385 = vpop.f32.mrf.mxu0
    %v3386 = vpop.f32.mrf.mxu0
    %3387 = vdwg.mxu0
    %v3388 = vmul.f32 %v3333, 0.17677669
    %v3389 = vmul.f32 %v3383, 0.17677669
    %v3390 = vsel %vm784, %v3388, -inf
    %3391 = vmax.xlane.f32.xlu0 %v3390
    %v3392 = vpop.xlane.xlu0 %3391
    %v3393 = vsel %vm784, %v3389, -inf
    %3394 = vmax.xlane.f32.xlu0 %v3393
    %v3395 = vpop.xlane.xlu0 %3394
    %v3396 = vsub.f32 %v3388, %v3392
    %v3397 = vsub.f32 %v3389, %v3395
    %v3398 = vmul.f32 %v3396, 1.442695
    %v3399 = vpow.pop %v3398
    %v3400 = vmul.f32 %v3397, 1.442695
    %v3401 = vpow.pop %v3400
    %v3402 = vsel %vm784, %v3399, 0.0
    %3403 = vadd.xlane.f32.xlu0 %v3402
    %v3404 = vpop.xlane.xlu0 %3403
    %v3405 = vsel %vm784, %v3401, 0.0
    %3406 = vadd.xlane.f32.xlu0 %v3405
    %v3407 = vpop.xlane.xlu0 %3406
    %v3408 = vrcp.pop %v3404
    %v3409 = vrcp.pop %v3407
    %v3410 = vmul.f32 %v3399, %v3408
    %v3411 = vmul.f32 %v3401, %v3409
    %v3412 = vpack.c.bf16 %v3410, %v3410
    %v3413 = vpack.c.bf16 %v3411, %v3411
    %3414 = vrot.lane.b32.xlu0 %v3075, 96
    %v3415 = vpop.permute.xlu0 %3414
    %v3417 = vsel %vm784, %v3412, 0
    %v3420 = vsel %vm812, %v3415, 0
    %3422 = vmatprep.subr.bf16.mxu0 0
    %3423 = vmatpush1.bf16.msra.mxu0 0
    %3424 = vmatprep.subr.bf16.mxu0 0
    %3425 = vmatpush1.bf16.msra.mxu0 0
    %3426 = vmatprep.subr.bf16.mxu0 0
    %3427 = vmatpush1.bf16.msra.mxu0 0
    %3428 = vmatprep.subr.bf16.mxu0 0
    %3429 = vmatpush1.bf16.msra.mxu0 0
    %3430 = vmatprep.subr.bf16.mxu0 0
    %3431 = vmatpush1.bf16.msra.mxu0 0
    %3432 = vmatprep.subr.bf16.mxu0 0
    %3433 = vmatpush1.bf16.msra.mxu0 0
    %3434 = vmatprep.subr.bf16.mxu0 0
    %3435 = vmatpush1.bf16.msra.mxu0 0
    %3436 = vmatprep.subr.bf16.mxu0 0
    %3437 = vmatpush1.bf16.msra.mxu0 %v3420
    %3438 = vmatprep.subr.bf16.mxu0 0
    %3439 = vmatpush2.bf16.msra.mxu0 0
    %3440 = vmatprep.subr.bf16.mxu0 0
    %3441 = vmatpush2.bf16.msra.mxu0 0
    %3442 = vmatprep.subr.bf16.mxu0 0
    %3443 = vmatpush2.bf16.msra.mxu0 0
    %3444 = vmatprep.subr.bf16.mxu0 0
    %3445 = vmatpush2.bf16.msra.mxu0 0
    %3446 = vmatprep.subr.bf16.mxu0 0
    %3447 = vmatpush2.bf16.msra.mxu0 0
    %3448 = vmatprep.subr.bf16.mxu0 0
    %3449 = vmatpush2.bf16.msra.mxu0 0
    %3450 = vmatprep.subr.bf16.mxu0 0
    %3451 = vmatpush2.bf16.msra.mxu0 0
    %3452 = vmatprep.subr.bf16.mxu0 0
    %3453 = vmatpush2.bf16.msra.mxu0 0
    %3454 = vmatprep.mubr.bf16.mxu0 0
    %3455 = vmatmul.mubr.bf16.gmra.mxu0 %v3417
    %v3456 = vpop.f32.mrf.mxu0
    %v3457 = vadd.f32 0.0, %v3456
    %v3458 = vpop.f32.mrf.mxu0
    %v3459 = vpop.f32.mrf.mxu0
    %v3460 = vpop.f32.mrf.mxu0
    %3461 = vdwg.mxu0
    %3462 = vrot.lane.b32.xlu0 %v3076, 96
    %v3463 = vpop.permute.xlu0 %3462
    %v3465 = vsel %vm784, %v3413, 0
    %v3468 = vsel %vm812, %v3463, 0
    %3470 = vmatprep.subr.bf16.mxu0 0
    %3471 = vmatpush1.bf16.msra.mxu0 0
    %3472 = vmatprep.subr.bf16.mxu0 0
    %3473 = vmatpush1.bf16.msra.mxu0 0
    %3474 = vmatprep.subr.bf16.mxu0 0
    %3475 = vmatpush1.bf16.msra.mxu0 0
    %3476 = vmatprep.subr.bf16.mxu0 0
    %3477 = vmatpush1.bf16.msra.mxu0 0
    %3478 = vmatprep.subr.bf16.mxu0 0
    %3479 = vmatpush1.bf16.msra.mxu0 0
    %3480 = vmatprep.subr.bf16.mxu0 0
    %3481 = vmatpush1.bf16.msra.mxu0 0
    %3482 = vmatprep.subr.bf16.mxu0 0
    %3483 = vmatpush1.bf16.msra.mxu0 0
    %3484 = vmatprep.subr.bf16.mxu0 0
    %3485 = vmatpush1.bf16.msra.mxu0 %v3468
    %3486 = vmatprep.subr.bf16.mxu0 0
    %3487 = vmatpush2.bf16.msra.mxu0 0
    %3488 = vmatprep.subr.bf16.mxu0 0
    %3489 = vmatpush2.bf16.msra.mxu0 0
    %3490 = vmatprep.subr.bf16.mxu0 0
    %3491 = vmatpush2.bf16.msra.mxu0 0
    %3492 = vmatprep.subr.bf16.mxu0 0
    %3493 = vmatpush2.bf16.msra.mxu0 0
    %3494 = vmatprep.subr.bf16.mxu0 0
    %3495 = vmatpush2.bf16.msra.mxu0 0
    %3496 = vmatprep.subr.bf16.mxu0 0
    %3497 = vmatpush2.bf16.msra.mxu0 0
    %3498 = vmatprep.subr.bf16.mxu0 0
    %3499 = vmatpush2.bf16.msra.mxu0 0
    %3500 = vmatprep.subr.bf16.mxu0 0
    %3501 = vmatpush2.bf16.msra.mxu0 0
    %3502 = vmatprep.mubr.bf16.mxu0 0
    %3503 = vmatmul.mubr.bf16.gmra.mxu0 %v3465
    %v3504 = vpop.f32.mrf.mxu0
    %v3505 = vadd.f32 0.0, %v3504
    %v3506 = vpop.f32.mrf.mxu0
    %v3507 = vpop.f32.mrf.mxu0
    %v3508 = vpop.f32.mrf.mxu0
    %3509 = vdwg.mxu0
    %v3510 = vpack.c.bf16 %v3505, %v3457
    %v3515 = vunpack.c.l.b16 %v2656
    %v3516 = vunpack.c.l.b16 %v2657
    %v3517 = vunpack.c.l.b16 %v2658
    %v3518 = vunpack.c.l.b16 %v2659
    %v3519 = vpack.c.b16 %v3516, %v3515
    %v3520 = vpack.c.b16 %v3518, %v3517
    %v3524 = vsel %vm689, %v3510, 0
    %3526 = vmatprep.subr.bf16.mxu0 0
    %3527 = vmatpush1.bf16.msra.mxu0 0
    %3528 = vmatprep.subr.bf16.mxu0 0
    %3529 = vmatpush1.bf16.msra.mxu0 0
    %3530 = vmatprep.subr.bf16.mxu0 0
    %3531 = vmatpush1.bf16.msra.mxu0 0
    %3532 = vmatprep.subr.bf16.mxu0 0
    %3533 = vmatpush1.bf16.msra.mxu0 0
    %3534 = vmatprep.subr.bf16.mxu0 0
    %3535 = vmatpush1.bf16.msra.mxu0 0
    %3536 = vmatprep.subr.bf16.mxu0 0
    %3537 = vmatpush1.bf16.msra.mxu0 0
    %3538 = vmatprep.subr.bf16.mxu0 0
    %3539 = vmatpush1.bf16.msra.mxu0 %v3520
    %3540 = vmatprep.subr.bf16.mxu0 0
    %3541 = vmatpush1.bf16.msra.mxu0 %v3519
    %3542 = vmatprep.subr.bf16.mxu0 0
    %3543 = vmatpush2.bf16.msra.mxu0 0
    %3544 = vmatprep.subr.bf16.mxu0 0
    %3545 = vmatpush2.bf16.msra.mxu0 0
    %3546 = vmatprep.subr.bf16.mxu0 0
    %3547 = vmatpush2.bf16.msra.mxu0 0
    %3548 = vmatprep.subr.bf16.mxu0 0
    %3549 = vmatpush2.bf16.msra.mxu0 0
    %3550 = vmatprep.subr.bf16.mxu0 0
    %3551 = vmatpush2.bf16.msra.mxu0 0
    %3552 = vmatprep.subr.bf16.mxu0 0
    %3553 = vmatpush2.bf16.msra.mxu0 0
    %3554 = vmatprep.subr.bf16.mxu0 0
    %3555 = vmatpush2.bf16.msra.mxu0 0
    %3556 = vmatprep.subr.bf16.mxu0 0
    %3557 = vmatpush2.bf16.msra.mxu0 0
    %3558 = vmatprep.mubr.bf16.mxu0 0
    %3559 = vmatmul.mubr.bf16.gmra.mxu0 %v3524
    %v3560 = vpop.f32.mrf.mxu0
    %v3561 = vadd.f32 0.0, %v3560
    %v3562 = vpop.f32.mrf.mxu0
    %v3563 = vpop.f32.mrf.mxu0
    %v3564 = vadd.f32 0.0, %v3563
    %v3565 = vpop.f32.mrf.mxu0
    %3566 = vdwg.mxu0
    %v3571 = vunpack.c.l.b16 %v2652
    %v3572 = vunpack.c.l.b16 %v2653
    %v3573 = vunpack.c.l.b16 %v2654
    %v3574 = vunpack.c.l.b16 %v2655
    %v3575 = vpack.c.b16 %v3572, %v3571
    %v3576 = vpack.c.b16 %v3574, %v3573
    %v3580 = vsel %vm689, %v3287, 0
    %3582 = vmatprep.subr.bf16.mxu0 0
    %3583 = vmatpush1.bf16.msra.mxu0 0
    %3584 = vmatprep.subr.bf16.mxu0 0
    %3585 = vmatpush1.bf16.msra.mxu0 0
    %3586 = vmatprep.subr.bf16.mxu0 0
    %3587 = vmatpush1.bf16.msra.mxu0 0
    %3588 = vmatprep.subr.bf16.mxu0 0
    %3589 = vmatpush1.bf16.msra.mxu0 0
    %3590 = vmatprep.subr.bf16.mxu0 0
    %3591 = vmatpush1.bf16.msra.mxu0 0
    %3592 = vmatprep.subr.bf16.mxu0 0
    %3593 = vmatpush1.bf16.msra.mxu0 0
    %3594 = vmatprep.subr.bf16.mxu0 0
    %3595 = vmatpush1.bf16.msra.mxu0 %v3576
    %3596 = vmatprep.subr.bf16.mxu0 0
    %3597 = vmatpush1.bf16.msra.mxu0 %v3575
    %3598 = vmatprep.subr.bf16.mxu0 0
    %3599 = vmatpush2.bf16.msra.mxu0 0
    %3600 = vmatprep.subr.bf16.mxu0 0
    %3601 = vmatpush2.bf16.msra.mxu0 0
    %3602 = vmatprep.subr.bf16.mxu0 0
    %3603 = vmatpush2.bf16.msra.mxu0 0
    %3604 = vmatprep.subr.bf16.mxu0 0
    %3605 = vmatpush2.bf16.msra.mxu0 0
    %3606 = vmatprep.subr.bf16.mxu0 0
    %3607 = vmatpush2.bf16.msra.mxu0 0
    %3608 = vmatprep.subr.bf16.mxu0 0
    %3609 = vmatpush2.bf16.msra.mxu0 0
    %3610 = vmatprep.subr.bf16.mxu0 0
    %3611 = vmatpush2.bf16.msra.mxu0 0
    %3612 = vmatprep.subr.bf16.mxu0 0
    %3613 = vmatpush2.bf16.msra.mxu0 0
    %3614 = vmatprep.mubr.bf16.mxu0 0
    %3615 = vmatmul.mubr.bf16.gmra.mxu0 %v3580
    %v3616 = vpop.f32.mrf.mxu0
    %v3617 = vadd.f32 %v3561, %v3616
    %v3618 = vpop.f32.mrf.mxu0
    %v3619 = vpop.f32.mrf.mxu0
    %v3620 = vadd.f32 %v3564, %v3619
    %v3621 = vpop.f32.mrf.mxu0
    %3622 = vdwg.mxu0
    %3623 = vrot.lane.b32.xlu0 %v3063, 64
    %v3624 = vpop.permute.xlu0 %3623
    %3625 = vrot.lane.b32.xlu0 %v3069, 64
    %v3626 = vpop.permute.xlu0 %3625
    %v3628 = vsel %vm689, %v3624, 0
    %v3631 = vsel %vm689, %v3626, 0
    %3633 = vmatprep.subr.bf16.mxu0 0
    %3634 = vmatpush1.bf16.xpose.msra.mxu0 0
    %3635 = vmatprep.subr.bf16.mxu0 0
    %3636 = vmatpush1.bf16.xpose.msra.mxu0 0
    %3637 = vmatprep.subr.bf16.mxu0 0
    %3638 = vmatpush1.bf16.xpose.msra.mxu0 0
    %3639 = vmatprep.subr.bf16.mxu0 0
    %3640 = vmatpush1.bf16.xpose.msra.mxu0 0
    %3641 = vmatprep.subr.bf16.mxu0 0
    %3642 = vmatpush1.bf16.xpose.msra.mxu0 0
    %3643 = vmatprep.subr.bf16.mxu0 0
    %3644 = vmatpush1.bf16.xpose.msra.mxu0 0
    %3645 = vmatprep.subr.bf16.mxu0 0
    %3646 = vmatpush1.bf16.xpose.msra.mxu0 0
    %3647 = vmatprep.subr.bf16.mxu0 0
    %3648 = vmatpush1.bf16.xpose.msra.mxu0 %v3631
    %3649 = vmatprep.subr.bf16.mxu0 0
    %3650 = vmatpush2.bf16.xpose.msra.mxu0 0
    %3651 = vmatprep.subr.bf16.mxu0 0
    %3652 = vmatpush2.bf16.xpose.msra.mxu0 0
    %3653 = vmatprep.subr.bf16.mxu0 0
    %3654 = vmatpush2.bf16.xpose.msra.mxu0 0
    %3655 = vmatprep.subr.bf16.mxu0 0
    %3656 = vmatpush2.bf16.xpose.msra.mxu0 0
    %3657 = vmatprep.subr.bf16.mxu0 0
    %3658 = vmatpush2.bf16.xpose.msra.mxu0 0
    %3659 = vmatprep.subr.bf16.mxu0 0
    %3660 = vmatpush2.bf16.xpose.msra.mxu0 0
    %3661 = vmatprep.subr.bf16.mxu0 0
    %3662 = vmatpush2.bf16.xpose.msra.mxu0 0
    %3663 = vmatprep.subr.bf16.mxu0 0
    %3664 = vmatpush2.bf16.xpose.msra.mxu0 0
    %3665 = vmatprep.mubr.bf16.mxu0 0
    %3666 = vmatmul.mubr.bf16.gmra.mxu0 %v3628
    %v3667 = vpop.f32.mrf.mxu0
    %v3668 = vadd.f32 0.0, %v3667
    %v3669 = vpop.f32.mrf.mxu0
    %v3670 = vpop.f32.mrf.mxu0
    %v3671 = vpop.f32.mrf.mxu0
    %3672 = vdwg.mxu0
    %3673 = vrot.lane.b32.xlu0 %v3064, 64
    %v3674 = vpop.permute.xlu0 %3673
    %3675 = vrot.lane.b32.xlu0 %v3070, 64
    %v3676 = vpop.permute.xlu0 %3675
    %v3678 = vsel %vm689, %v3674, 0
    %v3681 = vsel %vm689, %v3676, 0
    %3683 = vmatprep.subr.bf16.mxu0 0
    %3684 = vmatpush1.bf16.xpose.msra.mxu0 0
    %3685 = vmatprep.subr.bf16.mxu0 0
    %3686 = vmatpush1.bf16.xpose.msra.mxu0 0
    %3687 = vmatprep.subr.bf16.mxu0 0
    %3688 = vmatpush1.bf16.xpose.msra.mxu0 0
    %3689 = vmatprep.subr.bf16.mxu0 0
    %3690 = vmatpush1.bf16.xpose.msra.mxu0 0
    %3691 = vmatprep.subr.bf16.mxu0 0
    %3692 = vmatpush1.bf16.xpose.msra.mxu0 0
    %3693 = vmatprep.subr.bf16.mxu0 0
    %3694 = vmatpush1.bf16.xpose.msra.mxu0 0
    %3695 = vmatprep.subr.bf16.mxu0 0
    %3696 = vmatpush1.bf16.xpose.msra.mxu0 0
    %3697 = vmatprep.subr.bf16.mxu0 0
    %3698 = vmatpush1.bf16.xpose.msra.mxu0 %v3681
    %3699 = vmatprep.subr.bf16.mxu0 0
    %3700 = vmatpush2.bf16.xpose.msra.mxu0 0
    %3701 = vmatprep.subr.bf16.mxu0 0
    %3702 = vmatpush2.bf16.xpose.msra.mxu0 0
    %3703 = vmatprep.subr.bf16.mxu0 0
    %3704 = vmatpush2.bf16.xpose.msra.mxu0 0
    %3705 = vmatprep.subr.bf16.mxu0 0
    %3706 = vmatpush2.bf16.xpose.msra.mxu0 0
    %3707 = vmatprep.subr.bf16.mxu0 0
    %3708 = vmatpush2.bf16.xpose.msra.mxu0 0
    %3709 = vmatprep.subr.bf16.mxu0 0
    %3710 = vmatpush2.bf16.xpose.msra.mxu0 0
    %3711 = vmatprep.subr.bf16.mxu0 0
    %3712 = vmatpush2.bf16.xpose.msra.mxu0 0
    %3713 = vmatprep.subr.bf16.mxu0 0
    %3714 = vmatpush2.bf16.xpose.msra.mxu0 0
    %3715 = vmatprep.mubr.bf16.mxu0 0
    %3716 = vmatmul.mubr.bf16.gmra.mxu0 %v3678
    %v3717 = vpop.f32.mrf.mxu0
    %v3718 = vadd.f32 0.0, %v3717
    %v3719 = vpop.f32.mrf.mxu0
    %v3720 = vpop.f32.mrf.mxu0
    %v3721 = vpop.f32.mrf.mxu0
    %3722 = vdwg.mxu0
    %v3723 = vmul.f32 %v3668, 0.17677669
    %v3724 = vmul.f32 %v3718, 0.17677669
    %v3725 = vsel %vm784, %v3723, -inf
    %3726 = vmax.xlane.f32.xlu0 %v3725
    %v3727 = vpop.xlane.xlu0 %3726
    %v3728 = vsel %vm784, %v3724, -inf
    %3729 = vmax.xlane.f32.xlu0 %v3728
    %v3730 = vpop.xlane.xlu0 %3729
    %v3731 = vsub.f32 %v3723, %v3727
    %v3732 = vsub.f32 %v3724, %v3730
    %v3733 = vmul.f32 %v3731, 1.442695
    %v3734 = vpow.pop %v3733
    %v3735 = vmul.f32 %v3732, 1.442695
    %v3736 = vpow.pop %v3735
    %v3737 = vsel %vm784, %v3734, 0.0
    %3738 = vadd.xlane.f32.xlu0 %v3737
    %v3739 = vpop.xlane.xlu0 %3738
    %v3740 = vsel %vm784, %v3736, 0.0
    %3741 = vadd.xlane.f32.xlu0 %v3740
    %v3742 = vpop.xlane.xlu0 %3741
    %v3743 = vrcp.pop %v3739
    %v3744 = vrcp.pop %v3742
    %v3745 = vmul.f32 %v3734, %v3743
    %v3746 = vmul.f32 %v3736, %v3744
    %v3747 = vpack.c.bf16 %v3745, %v3745
    %v3748 = vpack.c.bf16 %v3746, %v3746
    %3749 = vrot.lane.b32.xlu0 %v3075, 64
    %v3750 = vpop.permute.xlu0 %3749
    %v3752 = vsel %vm784, %v3747, 0
    %v3755 = vsel %vm812, %v3750, 0
    %3757 = vmatprep.subr.bf16.mxu0 0
    %3758 = vmatpush1.bf16.msra.mxu0 0
    %3759 = vmatprep.subr.bf16.mxu0 0
    %3760 = vmatpush1.bf16.msra.mxu0 0
    %3761 = vmatprep.subr.bf16.mxu0 0
    %3762 = vmatpush1.bf16.msra.mxu0 0
    %3763 = vmatprep.subr.bf16.mxu0 0
    %3764 = vmatpush1.bf16.msra.mxu0 0
    %3765 = vmatprep.subr.bf16.mxu0 0
    %3766 = vmatpush1.bf16.msra.mxu0 0
    %3767 = vmatprep.subr.bf16.mxu0 0
    %3768 = vmatpush1.bf16.msra.mxu0 0
    %3769 = vmatprep.subr.bf16.mxu0 0
    %3770 = vmatpush1.bf16.msra.mxu0 0
    %3771 = vmatprep.subr.bf16.mxu0 0
    %3772 = vmatpush1.bf16.msra.mxu0 %v3755
    %3773 = vmatprep.subr.bf16.mxu0 0
    %3774 = vmatpush2.bf16.msra.mxu0 0
    %3775 = vmatprep.subr.bf16.mxu0 0
    %3776 = vmatpush2.bf16.msra.mxu0 0
    %3777 = vmatprep.subr.bf16.mxu0 0
    %3778 = vmatpush2.bf16.msra.mxu0 0
    %3779 = vmatprep.subr.bf16.mxu0 0
    %3780 = vmatpush2.bf16.msra.mxu0 0
    %3781 = vmatprep.subr.bf16.mxu0 0
    %3782 = vmatpush2.bf16.msra.mxu0 0
    %3783 = vmatprep.subr.bf16.mxu0 0
    %3784 = vmatpush2.bf16.msra.mxu0 0
    %3785 = vmatprep.subr.bf16.mxu0 0
    %3786 = vmatpush2.bf16.msra.mxu0 0
    %3787 = vmatprep.subr.bf16.mxu0 0
    %3788 = vmatpush2.bf16.msra.mxu0 0
    %3789 = vmatprep.mubr.bf16.mxu0 0
    %3790 = vmatmul.mubr.bf16.gmra.mxu0 %v3752
    %v3791 = vpop.f32.mrf.mxu0
    %v3792 = vadd.f32 0.0, %v3791
    %v3793 = vpop.f32.mrf.mxu0
    %v3794 = vpop.f32.mrf.mxu0
    %v3795 = vpop.f32.mrf.mxu0
    %3796 = vdwg.mxu0
    %3797 = vrot.lane.b32.xlu0 %v3076, 64
    %v3798 = vpop.permute.xlu0 %3797
    %v3800 = vsel %vm784, %v3748, 0
    %v3803 = vsel %vm812, %v3798, 0
    %3805 = vmatprep.subr.bf16.mxu0 0
    %3806 = vmatpush1.bf16.msra.mxu0 0
    %3807 = vmatprep.subr.bf16.mxu0 0
    %3808 = vmatpush1.bf16.msra.mxu0 0
    %3809 = vmatprep.subr.bf16.mxu0 0
    %3810 = vmatpush1.bf16.msra.mxu0 0
    %3811 = vmatprep.subr.bf16.mxu0 0
    %3812 = vmatpush1.bf16.msra.mxu0 0
    %3813 = vmatprep.subr.bf16.mxu0 0
    %3814 = vmatpush1.bf16.msra.mxu0 0
    %3815 = vmatprep.subr.bf16.mxu0 0
    %3816 = vmatpush1.bf16.msra.mxu0 0
    %3817 = vmatprep.subr.bf16.mxu0 0
    %3818 = vmatpush1.bf16.msra.mxu0 0
    %3819 = vmatprep.subr.bf16.mxu0 0
    %3820 = vmatpush1.bf16.msra.mxu0 %v3803
    %3821 = vmatprep.subr.bf16.mxu0 0
    %3822 = vmatpush2.bf16.msra.mxu0 0
    %3823 = vmatprep.subr.bf16.mxu0 0
    %3824 = vmatpush2.bf16.msra.mxu0 0
    %3825 = vmatprep.subr.bf16.mxu0 0
    %3826 = vmatpush2.bf16.msra.mxu0 0
    %3827 = vmatprep.subr.bf16.mxu0 0
    %3828 = vmatpush2.bf16.msra.mxu0 0
    %3829 = vmatprep.subr.bf16.mxu0 0
    %3830 = vmatpush2.bf16.msra.mxu0 0
    %3831 = vmatprep.subr.bf16.mxu0 0
    %3832 = vmatpush2.bf16.msra.mxu0 0
    %3833 = vmatprep.subr.bf16.mxu0 0
    %3834 = vmatpush2.bf16.msra.mxu0 0
    %3835 = vmatprep.subr.bf16.mxu0 0
    %3836 = vmatpush2.bf16.msra.mxu0 0
    %3837 = vmatprep.mubr.bf16.mxu0 0
    %3838 = vmatmul.mubr.bf16.gmra.mxu0 %v3800
    %v3839 = vpop.f32.mrf.mxu0
    %v3840 = vadd.f32 0.0, %v3839
    %v3841 = vpop.f32.mrf.mxu0
    %v3842 = vpop.f32.mrf.mxu0
    %v3843 = vpop.f32.mrf.mxu0
    %3844 = vdwg.mxu0
    %v3845 = vpack.c.bf16 %v3840, %v3792
    %v3850 = vunpack.c.l.b16 %v2660
    %v3851 = vunpack.c.l.b16 %v2661
    %v3852 = vunpack.c.l.b16 %v2662
    %v3853 = vunpack.c.l.b16 %v2663
    %v3854 = vpack.c.b16 %v3851, %v3850
    %v3855 = vpack.c.b16 %v3853, %v3852
    %v3859 = vsel %vm689, %v3845, 0
    %3861 = vmatprep.subr.bf16.mxu0 0
    %3862 = vmatpush1.bf16.msra.mxu0 0
    %3863 = vmatprep.subr.bf16.mxu0 0
    %3864 = vmatpush1.bf16.msra.mxu0 0
    %3865 = vmatprep.subr.bf16.mxu0 0
    %3866 = vmatpush1.bf16.msra.mxu0 0
    %3867 = vmatprep.subr.bf16.mxu0 0
    %3868 = vmatpush1.bf16.msra.mxu0 0
    %3869 = vmatprep.subr.bf16.mxu0 0
    %3870 = vmatpush1.bf16.msra.mxu0 0
    %3871 = vmatprep.subr.bf16.mxu0 0
    %3872 = vmatpush1.bf16.msra.mxu0 0
    %3873 = vmatprep.subr.bf16.mxu0 0
    %3874 = vmatpush1.bf16.msra.mxu0 %v3855
    %3875 = vmatprep.subr.bf16.mxu0 0
    %3876 = vmatpush1.bf16.msra.mxu0 %v3854
    %3877 = vmatprep.subr.bf16.mxu0 0
    %3878 = vmatpush2.bf16.msra.mxu0 0
    %3879 = vmatprep.subr.bf16.mxu0 0
    %3880 = vmatpush2.bf16.msra.mxu0 0
    %3881 = vmatprep.subr.bf16.mxu0 0
    %3882 = vmatpush2.bf16.msra.mxu0 0
    %3883 = vmatprep.subr.bf16.mxu0 0
    %3884 = vmatpush2.bf16.msra.mxu0 0
    %3885 = vmatprep.subr.bf16.mxu0 0
    %3886 = vmatpush2.bf16.msra.mxu0 0
    %3887 = vmatprep.subr.bf16.mxu0 0
    %3888 = vmatpush2.bf16.msra.mxu0 0
    %3889 = vmatprep.subr.bf16.mxu0 0
    %3890 = vmatpush2.bf16.msra.mxu0 0
    %3891 = vmatprep.subr.bf16.mxu0 0
    %3892 = vmatpush2.bf16.msra.mxu0 0
    %3893 = vmatprep.mubr.bf16.mxu0 0
    %3894 = vmatmul.mubr.bf16.gmra.mxu0 %v3859
    %v3895 = vpop.f32.mrf.mxu0
    %v3896 = vadd.f32 0.0, %v3895
    %v3897 = vpop.f32.mrf.mxu0
    %v3898 = vpop.f32.mrf.mxu0
    %v3899 = vadd.f32 0.0, %v3898
    %v3900 = vpop.f32.mrf.mxu0
    %3901 = vdwg.mxu0
    %v3902 = vadd.f32 %v3617, %v3896
    %v3903 = vadd.f32 %v3620, %v3899
    %3904 = vrot.lane.b32.xlu0 %v3063, 32
    %v3905 = vpop.permute.xlu0 %3904
    %3906 = vrot.lane.b32.xlu0 %v3069, 32
    %v3907 = vpop.permute.xlu0 %3906
    %v3909 = vsel %vm689, %v3905, 0
    %v3912 = vsel %vm689, %v3907, 0
    %3914 = vmatprep.subr.bf16.mxu0 0
    %3915 = vmatpush1.bf16.xpose.msra.mxu0 0
    %3916 = vmatprep.subr.bf16.mxu0 0
    %3917 = vmatpush1.bf16.xpose.msra.mxu0 0
    %3918 = vmatprep.subr.bf16.mxu0 0
    %3919 = vmatpush1.bf16.xpose.msra.mxu0 0
    %3920 = vmatprep.subr.bf16.mxu0 0
    %3921 = vmatpush1.bf16.xpose.msra.mxu0 0
    %3922 = vmatprep.subr.bf16.mxu0 0
    %3923 = vmatpush1.bf16.xpose.msra.mxu0 0
    %3924 = vmatprep.subr.bf16.mxu0 0
    %3925 = vmatpush1.bf16.xpose.msra.mxu0 0
    %3926 = vmatprep.subr.bf16.mxu0 0
    %3927 = vmatpush1.bf16.xpose.msra.mxu0 0
    %3928 = vmatprep.subr.bf16.mxu0 0
    %3929 = vmatpush1.bf16.xpose.msra.mxu0 %v3912
    %3930 = vmatprep.subr.bf16.mxu0 0
    %3931 = vmatpush2.bf16.xpose.msra.mxu0 0
    %3932 = vmatprep.subr.bf16.mxu0 0
    %3933 = vmatpush2.bf16.xpose.msra.mxu0 0
    %3934 = vmatprep.subr.bf16.mxu0 0
    %3935 = vmatpush2.bf16.xpose.msra.mxu0 0
    %3936 = vmatprep.subr.bf16.mxu0 0
    %3937 = vmatpush2.bf16.xpose.msra.mxu0 0
    %3938 = vmatprep.subr.bf16.mxu0 0
    %3939 = vmatpush2.bf16.xpose.msra.mxu0 0
    %3940 = vmatprep.subr.bf16.mxu0 0
    %3941 = vmatpush2.bf16.xpose.msra.mxu0 0
    %3942 = vmatprep.subr.bf16.mxu0 0
    %3943 = vmatpush2.bf16.xpose.msra.mxu0 0
    %3944 = vmatprep.subr.bf16.mxu0 0
    %3945 = vmatpush2.bf16.xpose.msra.mxu0 0
    %3946 = vmatprep.mubr.bf16.mxu0 0
    %3947 = vmatmul.mubr.bf16.gmra.mxu0 %v3909
    %v3948 = vpop.f32.mrf.mxu0
    %v3949 = vadd.f32 0.0, %v3948
    %v3950 = vpop.f32.mrf.mxu0
    %v3951 = vpop.f32.mrf.mxu0
    %v3952 = vpop.f32.mrf.mxu0
    %3953 = vdwg.mxu0
    %3954 = vrot.lane.b32.xlu0 %v3064, 32
    %v3955 = vpop.permute.xlu0 %3954
    %3956 = vrot.lane.b32.xlu0 %v3070, 32
    %v3957 = vpop.permute.xlu0 %3956
    %v3959 = vsel %vm689, %v3955, 0
    %v3962 = vsel %vm689, %v3957, 0
    %3964 = vmatprep.subr.bf16.mxu0 0
    %3965 = vmatpush1.bf16.xpose.msra.mxu0 0
    %3966 = vmatprep.subr.bf16.mxu0 0
    %3967 = vmatpush1.bf16.xpose.msra.mxu0 0
    %3968 = vmatprep.subr.bf16.mxu0 0
    %3969 = vmatpush1.bf16.xpose.msra.mxu0 0
    %3970 = vmatprep.subr.bf16.mxu0 0
    %3971 = vmatpush1.bf16.xpose.msra.mxu0 0
    %3972 = vmatprep.subr.bf16.mxu0 0
    %3973 = vmatpush1.bf16.xpose.msra.mxu0 0
    %3974 = vmatprep.subr.bf16.mxu0 0
    %3975 = vmatpush1.bf16.xpose.msra.mxu0 0
    %3976 = vmatprep.subr.bf16.mxu0 0
    %3977 = vmatpush1.bf16.xpose.msra.mxu0 0
    %3978 = vmatprep.subr.bf16.mxu0 0
    %3979 = vmatpush1.bf16.xpose.msra.mxu0 %v3962
    %3980 = vmatprep.subr.bf16.mxu0 0
    %3981 = vmatpush2.bf16.xpose.msra.mxu0 0
    %3982 = vmatprep.subr.bf16.mxu0 0
    %3983 = vmatpush2.bf16.xpose.msra.mxu0 0
    %3984 = vmatprep.subr.bf16.mxu0 0
    %3985 = vmatpush2.bf16.xpose.msra.mxu0 0
    %3986 = vmatprep.subr.bf16.mxu0 0
    %3987 = vmatpush2.bf16.xpose.msra.mxu0 0
    %3988 = vmatprep.subr.bf16.mxu0 0
    %3989 = vmatpush2.bf16.xpose.msra.mxu0 0
    %3990 = vmatprep.subr.bf16.mxu0 0
    %3991 = vmatpush2.bf16.xpose.msra.mxu0 0
    %3992 = vmatprep.subr.bf16.mxu0 0
    %3993 = vmatpush2.bf16.xpose.msra.mxu0 0
    %3994 = vmatprep.subr.bf16.mxu0 0
    %3995 = vmatpush2.bf16.xpose.msra.mxu0 0
    %3996 = vmatprep.mubr.bf16.mxu0 0
    %3997 = vmatmul.mubr.bf16.gmra.mxu0 %v3959
    %v3998 = vpop.f32.mrf.mxu0
    %v3999 = vadd.f32 0.0, %v3998
    %v4000 = vpop.f32.mrf.mxu0
    %v4001 = vpop.f32.mrf.mxu0
    %v4002 = vpop.f32.mrf.mxu0
    %4003 = vdwg.mxu0
    %v4004 = vmul.f32 %v3949, 0.17677669
    %v4005 = vmul.f32 %v3999, 0.17677669
    %v4006 = vsel %vm784, %v4004, -inf
    %4007 = vmax.xlane.f32.xlu0 %v4006
    %v4008 = vpop.xlane.xlu0 %4007
    %v4009 = vsel %vm784, %v4005, -inf
    %4010 = vmax.xlane.f32.xlu0 %v4009
    %v4011 = vpop.xlane.xlu0 %4010
    %v4012 = vsub.f32 %v4004, %v4008
    %v4013 = vsub.f32 %v4005, %v4011
    %v4014 = vmul.f32 %v4012, 1.442695
    %v4015 = vpow.pop %v4014
    %v4016 = vmul.f32 %v4013, 1.442695
    %v4017 = vpow.pop %v4016
    %v4018 = vsel %vm784, %v4015, 0.0
    %4019 = vadd.xlane.f32.xlu0 %v4018
    %v4020 = vpop.xlane.xlu0 %4019
    %v4021 = vsel %vm784, %v4017, 0.0
    %4022 = vadd.xlane.f32.xlu0 %v4021
    %v4023 = vpop.xlane.xlu0 %4022
    %v4024 = vrcp.pop %v4020
    %v4025 = vrcp.pop %v4023
    %v4026 = vmul.f32 %v4015, %v4024
    %v4027 = vmul.f32 %v4017, %v4025
    %v4028 = vpack.c.bf16 %v4026, %v4026
    %v4029 = vpack.c.bf16 %v4027, %v4027
    %4030 = vrot.lane.b32.xlu0 %v3075, 32
    %v4031 = vpop.permute.xlu0 %4030
    %v4033 = vsel %vm784, %v4028, 0
    %v4036 = vsel %vm812, %v4031, 0
    %4038 = vmatprep.subr.bf16.mxu0 0
    %4039 = vmatpush1.bf16.msra.mxu0 0
    %4040 = vmatprep.subr.bf16.mxu0 0
    %4041 = vmatpush1.bf16.msra.mxu0 0
    %4042 = vmatprep.subr.bf16.mxu0 0
    %4043 = vmatpush1.bf16.msra.mxu0 0
    %4044 = vmatprep.subr.bf16.mxu0 0
    %4045 = vmatpush1.bf16.msra.mxu0 0
    %4046 = vmatprep.subr.bf16.mxu0 0
    %4047 = vmatpush1.bf16.msra.mxu0 0
    %4048 = vmatprep.subr.bf16.mxu0 0
    %4049 = vmatpush1.bf16.msra.mxu0 0
    %4050 = vmatprep.subr.bf16.mxu0 0
    %4051 = vmatpush1.bf16.msra.mxu0 0
    %4052 = vmatprep.subr.bf16.mxu0 0
    %4053 = vmatpush1.bf16.msra.mxu0 %v4036
    %4054 = vmatprep.subr.bf16.mxu0 0
    %4055 = vmatpush2.bf16.msra.mxu0 0
    %4056 = vmatprep.subr.bf16.mxu0 0
    %4057 = vmatpush2.bf16.msra.mxu0 0
    %4058 = vmatprep.subr.bf16.mxu0 0
    %4059 = vmatpush2.bf16.msra.mxu0 0
    %4060 = vmatprep.subr.bf16.mxu0 0
    %4061 = vmatpush2.bf16.msra.mxu0 0
    %4062 = vmatprep.subr.bf16.mxu0 0
    %4063 = vmatpush2.bf16.msra.mxu0 0
    %4064 = vmatprep.subr.bf16.mxu0 0
    %4065 = vmatpush2.bf16.msra.mxu0 0
    %4066 = vmatprep.subr.bf16.mxu0 0
    %4067 = vmatpush2.bf16.msra.mxu0 0
    %4068 = vmatprep.subr.bf16.mxu0 0
    %4069 = vmatpush2.bf16.msra.mxu0 0
    %4070 = vmatprep.mubr.bf16.mxu0 0
    %4071 = vmatmul.mubr.bf16.gmra.mxu0 %v4033
    %v4072 = vpop.f32.mrf.mxu0
    %v4073 = vadd.f32 0.0, %v4072
    %v4074 = vpop.f32.mrf.mxu0
    %v4075 = vpop.f32.mrf.mxu0
    %v4076 = vpop.f32.mrf.mxu0
    %4077 = vdwg.mxu0
    %4078 = vrot.lane.b32.xlu0 %v3076, 32
    %v4079 = vpop.permute.xlu0 %4078
    %v4081 = vsel %vm784, %v4029, 0
    %v4084 = vsel %vm812, %v4079, 0
    %4086 = vmatprep.subr.bf16.mxu0 0
    %4087 = vmatpush1.bf16.msra.mxu0 0
    %4088 = vmatprep.subr.bf16.mxu0 0
    %4089 = vmatpush1.bf16.msra.mxu0 0
    %4090 = vmatprep.subr.bf16.mxu0 0
    %4091 = vmatpush1.bf16.msra.mxu0 0
    %4092 = vmatprep.subr.bf16.mxu0 0
    %4093 = vmatpush1.bf16.msra.mxu0 0
    %4094 = vmatprep.subr.bf16.mxu0 0
    %4095 = vmatpush1.bf16.msra.mxu0 0
    %4096 = vmatprep.subr.bf16.mxu0 0
    %4097 = vmatpush1.bf16.msra.mxu0 0
    %4098 = vmatprep.subr.bf16.mxu0 0
    %4099 = vmatpush1.bf16.msra.mxu0 0
    %4100 = vmatprep.subr.bf16.mxu0 0
    %4101 = vmatpush1.bf16.msra.mxu0 %v4084
    %4102 = vmatprep.subr.bf16.mxu0 0
    %4103 = vmatpush2.bf16.msra.mxu0 0
    %4104 = vmatprep.subr.bf16.mxu0 0
    %4105 = vmatpush2.bf16.msra.mxu0 0
    %4106 = vmatprep.subr.bf16.mxu0 0
    %4107 = vmatpush2.bf16.msra.mxu0 0
    %4108 = vmatprep.subr.bf16.mxu0 0
    %4109 = vmatpush2.bf16.msra.mxu0 0
    %4110 = vmatprep.subr.bf16.mxu0 0
    %4111 = vmatpush2.bf16.msra.mxu0 0
    %4112 = vmatprep.subr.bf16.mxu0 0
    %4113 = vmatpush2.bf16.msra.mxu0 0
    %4114 = vmatprep.subr.bf16.mxu0 0
    %4115 = vmatpush2.bf16.msra.mxu0 0
    %4116 = vmatprep.subr.bf16.mxu0 0
    %4117 = vmatpush2.bf16.msra.mxu0 0
    %4118 = vmatprep.mubr.bf16.mxu0 0
    %4119 = vmatmul.mubr.bf16.gmra.mxu0 %v4081
    %v4120 = vpop.f32.mrf.mxu0
    %v4121 = vadd.f32 0.0, %v4120
    %v4122 = vpop.f32.mrf.mxu0
    %v4123 = vpop.f32.mrf.mxu0
    %v4124 = vpop.f32.mrf.mxu0
    %4125 = vdwg.mxu0
    %v4126 = vpack.c.bf16 %v4121, %v4073
    %v4131 = vunpack.c.l.b16 %v2664
    %v4132 = vunpack.c.l.b16 %v2665
    %v4133 = vunpack.c.l.b16 %v2666
    %v4134 = vunpack.c.l.b16 %v2667
    %v4135 = vpack.c.b16 %v4132, %v4131
    %v4136 = vpack.c.b16 %v4134, %v4133
    %v4140 = vsel %vm689, %v4126, 0
    %4142 = vmatprep.subr.bf16.mxu0 0
    %4143 = vmatpush1.bf16.msra.mxu0 0
    %4144 = vmatprep.subr.bf16.mxu0 0
    %4145 = vmatpush1.bf16.msra.mxu0 0
    %4146 = vmatprep.subr.bf16.mxu0 0
    %4147 = vmatpush1.bf16.msra.mxu0 0
    %4148 = vmatprep.subr.bf16.mxu0 0
    %4149 = vmatpush1.bf16.msra.mxu0 0
    %4150 = vmatprep.subr.bf16.mxu0 0
    %4151 = vmatpush1.bf16.msra.mxu0 0
    %4152 = vmatprep.subr.bf16.mxu0 0
    %4153 = vmatpush1.bf16.msra.mxu0 0
    %4154 = vmatprep.subr.bf16.mxu0 0
    %4155 = vmatpush1.bf16.msra.mxu0 %v4136
    %4156 = vmatprep.subr.bf16.mxu0 0
    %4157 = vmatpush1.bf16.msra.mxu0 %v4135
    %4158 = vmatprep.subr.bf16.mxu0 0
    %4159 = vmatpush2.bf16.msra.mxu0 0
    %4160 = vmatprep.subr.bf16.mxu0 0
    %4161 = vmatpush2.bf16.msra.mxu0 0
    %4162 = vmatprep.subr.bf16.mxu0 0
    %4163 = vmatpush2.bf16.msra.mxu0 0
    %4164 = vmatprep.subr.bf16.mxu0 0
    %4165 = vmatpush2.bf16.msra.mxu0 0
    %4166 = vmatprep.subr.bf16.mxu0 0
    %4167 = vmatpush2.bf16.msra.mxu0 0
    %4168 = vmatprep.subr.bf16.mxu0 0
    %4169 = vmatpush2.bf16.msra.mxu0 0
    %4170 = vmatprep.subr.bf16.mxu0 0
    %4171 = vmatpush2.bf16.msra.mxu0 0
    %4172 = vmatprep.subr.bf16.mxu0 0
    %4173 = vmatpush2.bf16.msra.mxu0 0
    %4174 = vmatprep.mubr.bf16.mxu0 0
    %4175 = vmatmul.mubr.bf16.gmra.mxu0 %v4140
    %v4176 = vpop.f32.mrf.mxu0
    %v4177 = vadd.f32 0.0, %v4176
    %v4178 = vpop.f32.mrf.mxu0
    %v4179 = vpop.f32.mrf.mxu0
    %v4180 = vadd.f32 0.0, %v4179
    %v4181 = vpop.f32.mrf.mxu0
    %4182 = vdwg.mxu0
    %v4183 = vadd.f32 %v3902, %v4177
    %v4184 = vadd.f32 %v3903, %v4180
    %v4185 = vadd.f32 %v2616, %v4183
    %v4186 = vadd.f32 %v2617, %v4184
    %v4188 = vlaneseq
    %v4189 = vshrl.u32 %v4188, 7
    %v4190 = vsub.s32 0, %v4189
    %v4191 = vrot.slane %v2668, %v4190
    %v4193 = vadd.f32 %v4185, %v4191
    %v4194 = vadd.f32 %v4186, %v4191
    %4195 = vadd.xlane.f32.xlu0 %v4193
    %v4196 = vpop.xlane.xlu0 %4195
    %4197 = vadd.xlane.f32.xlu0 %v4194
    %v4198 = vpop.xlane.xlu0 %4197
    %v4199 = vmul.f32 %v4196, %v384
    %v4200 = vmul.f32 %v4198, %v384
    %v4201 = vsub.f32 %v4193, %v4199
    %v4202 = vsub.f32 %v4194, %v4200
    %v4203 = vmul.f32 %v4201, %v4201
    %v4204 = vmul.f32 %v4202, %v4202
    %4205 = vadd.xlane.f32.xlu0 %v4203
    %v4206 = vpop.xlane.xlu0 %4205
    %4207 = vadd.xlane.f32.xlu0 %v4204
    %v4208 = vpop.xlane.xlu0 %4207
    %v4209 = vmul.f32 %v4206, %v384
    %v4210 = vmul.f32 %v4208, %v384
    %v4211 = vadd.f32 %v4209, 1e-05
    %v4212 = vadd.f32 %v4210, 1e-05
    %v4213 = vrsqrt.pop %v4211
    %v4214 = vrsqrt.pop %v4212
    %v4215 = vmul.f32 %v4201, %v4213
    %v4216 = vmul.f32 %v4202, %v4214
    %v4218 = vlaneseq
    %v4219 = vshrl.u32 %v4218, 7
    %v4220 = vsub.s32 0, %v4219
    %v4221 = vrot.slane %v2669, %v4220
    %v4223 = vmul.f32 %v4215, %v4221
    %v4224 = vmul.f32 %v4216, %v4221
    %v4226 = vlaneseq
    %v4227 = vshrl.u32 %v4226, 7
    %v4228 = vsub.s32 0, %v4227
    %v4229 = vrot.slane %v2670, %v4228
    %v4231 = vadd.f32 %v4223, %v4229
    %v4232 = vadd.f32 %v4224, %v4229
    %v4233 = vpack.c.bf16 %v4232, %v4231
    %v4235 = vlaneseq
    %v4236 = vshrl.u32 %v4235, 7
    %v4237 = vsub.s32 0, %v4236
    %v4238 = vrot.slane %v2703, %v4237
    %v4239 = vlaneseq
    %v4240 = vshrl.u32 %v4239, 7
    %v4241 = vsub.s32 1, %v4240
    %v4242 = vrot.slane %v2703, %v4241
    %v4243 = vlaneseq
    %v4244 = vshrl.u32 %v4243, 7
    %v4245 = vsub.s32 2, %v4244
    %v4246 = vrot.slane %v2703, %v4245
    %v4247 = vlaneseq
    %v4248 = vshrl.u32 %v4247, 7
    %v4249 = vsub.s32 3, %v4248
    %v4250 = vrot.slane %v2703, %v4249
    %v4287 = vunpack.c.l.b16 %v2671
    %v4288 = vunpack.c.h.b16 %v2671
    %v4289 = vunpack.c.l.b16 %v2672
    %v4290 = vunpack.c.h.b16 %v2672
    %v4291 = vunpack.c.l.b16 %v2673
    %v4292 = vunpack.c.h.b16 %v2673
    %v4293 = vunpack.c.l.b16 %v2674
    %v4294 = vunpack.c.h.b16 %v2674
    %v4295 = vunpack.c.l.b16 %v2675
    %v4296 = vunpack.c.h.b16 %v2675
    %v4297 = vunpack.c.l.b16 %v2676
    %v4298 = vunpack.c.h.b16 %v2676
    %v4299 = vunpack.c.l.b16 %v2677
    %v4300 = vunpack.c.h.b16 %v2677
    %v4301 = vunpack.c.l.b16 %v2678
    %v4302 = vunpack.c.h.b16 %v2678
    %v4303 = vunpack.c.l.b16 %v2679
    %v4304 = vunpack.c.h.b16 %v2679
    %v4305 = vunpack.c.l.b16 %v2680
    %v4306 = vunpack.c.h.b16 %v2680
    %v4307 = vunpack.c.l.b16 %v2681
    %v4308 = vunpack.c.h.b16 %v2681
    %v4309 = vunpack.c.l.b16 %v2682
    %v4310 = vunpack.c.h.b16 %v2682
    %v4311 = vunpack.c.l.b16 %v2683
    %v4312 = vunpack.c.h.b16 %v2683
    %v4313 = vunpack.c.l.b16 %v2684
    %v4314 = vunpack.c.h.b16 %v2684
    %v4315 = vunpack.c.l.b16 %v2685
    %v4316 = vunpack.c.h.b16 %v2685
    %v4317 = vunpack.c.l.b16 %v2686
    %v4318 = vunpack.c.h.b16 %v2686
    %v4319 = vunpack.c.l.b16 %v2687
    %v4320 = vunpack.c.h.b16 %v2687
    %v4321 = vunpack.c.l.b16 %v2688
    %v4322 = vunpack.c.h.b16 %v2688
    %v4323 = vunpack.c.l.b16 %v2689
    %v4324 = vunpack.c.h.b16 %v2689
    %v4325 = vunpack.c.l.b16 %v2690
    %v4326 = vunpack.c.h.b16 %v2690
    %v4327 = vunpack.c.l.b16 %v2691
    %v4328 = vunpack.c.h.b16 %v2691
    %v4329 = vunpack.c.l.b16 %v2692
    %v4330 = vunpack.c.h.b16 %v2692
    %v4331 = vunpack.c.l.b16 %v2693
    %v4332 = vunpack.c.h.b16 %v2693
    %v4333 = vunpack.c.l.b16 %v2694
    %v4334 = vunpack.c.h.b16 %v2694
    %v4335 = vunpack.c.l.b16 %v2695
    %v4336 = vunpack.c.h.b16 %v2695
    %v4337 = vunpack.c.l.b16 %v2696
    %v4338 = vunpack.c.h.b16 %v2696
    %v4339 = vunpack.c.l.b16 %v2697
    %v4340 = vunpack.c.h.b16 %v2697
    %v4341 = vunpack.c.l.b16 %v2698
    %v4342 = vunpack.c.h.b16 %v2698
    %v4343 = vunpack.c.l.b16 %v2699
    %v4344 = vunpack.c.h.b16 %v2699
    %v4345 = vunpack.c.l.b16 %v2700
    %v4346 = vunpack.c.h.b16 %v2700
    %v4347 = vunpack.c.l.b16 %v2701
    %v4348 = vunpack.c.h.b16 %v2701
    %v4349 = vunpack.c.l.b16 %v2702
    %v4350 = vunpack.c.h.b16 %v2702
    %v4351 = vpack.c.b16 %v4291, %v4287
    %v4352 = vpack.c.b16 %v4292, %v4288
    %v4353 = vpack.c.b16 %v4293, %v4289
    %v4354 = vpack.c.b16 %v4294, %v4290
    %v4355 = vpack.c.b16 %v4299, %v4295
    %v4356 = vpack.c.b16 %v4300, %v4296
    %v4357 = vpack.c.b16 %v4301, %v4297
    %v4358 = vpack.c.b16 %v4302, %v4298
    %v4359 = vpack.c.b16 %v4307, %v4303
    %v4360 = vpack.c.b16 %v4308, %v4304
    %v4361 = vpack.c.b16 %v4309, %v4305
    %v4362 = vpack.c.b16 %v4310, %v4306
    %v4363 = vpack.c.b16 %v4315, %v4311
    %v4364 = vpack.c.b16 %v4316, %v4312
    %v4365 = vpack.c.b16 %v4317, %v4313
    %v4366 = vpack.c.b16 %v4318, %v4314
    %v4367 = vpack.c.b16 %v4323, %v4319
    %v4368 = vpack.c.b16 %v4324, %v4320
    %v4369 = vpack.c.b16 %v4325, %v4321
    %v4370 = vpack.c.b16 %v4326, %v4322
    %v4371 = vpack.c.b16 %v4331, %v4327
    %v4372 = vpack.c.b16 %v4332, %v4328
    %v4373 = vpack.c.b16 %v4333, %v4329
    %v4374 = vpack.c.b16 %v4334, %v4330
    %v4375 = vpack.c.b16 %v4339, %v4335
    %v4376 = vpack.c.b16 %v4340, %v4336
    %v4377 = vpack.c.b16 %v4341, %v4337
    %v4378 = vpack.c.b16 %v4342, %v4338
    %v4379 = vpack.c.b16 %v4347, %v4343
    %v4380 = vpack.c.b16 %v4348, %v4344
    %v4381 = vpack.c.b16 %v4349, %v4345
    %v4382 = vpack.c.b16 %v4350, %v4346
    %4415 = vmatprep.subr.bf16.mxu0 %v4380
    %4416 = vmatpush1.bf16.msra.mxu0 %v4379
    %4417 = vmatprep.subr.bf16.mxu0 %v4376
    %4418 = vmatpush1.bf16.msra.mxu0 %v4375
    %4419 = vmatprep.subr.bf16.mxu0 %v4372
    %4420 = vmatpush1.bf16.msra.mxu0 %v4371
    %4421 = vmatprep.subr.bf16.mxu0 %v4368
    %4422 = vmatpush1.bf16.msra.mxu0 %v4367
    %4423 = vmatprep.subr.bf16.mxu0 %v4364
    %4424 = vmatpush1.bf16.msra.mxu0 %v4363
    %4425 = vmatprep.subr.bf16.mxu0 %v4360
    %4426 = vmatpush1.bf16.msra.mxu0 %v4359
    %4427 = vmatprep.subr.bf16.mxu0 %v4356
    %4428 = vmatpush1.bf16.msra.mxu0 %v4355
    %4429 = vmatprep.subr.bf16.mxu0 %v4352
    %4430 = vmatpush1.bf16.msra.mxu0 %v4351
    %4431 = vmatprep.subr.bf16.mxu0 0
    %4432 = vmatpush2.bf16.msra.mxu0 0
    %4433 = vmatprep.subr.bf16.mxu0 0
    %4434 = vmatpush2.bf16.msra.mxu0 0
    %4435 = vmatprep.subr.bf16.mxu0 0
    %4436 = vmatpush2.bf16.msra.mxu0 0
    %4437 = vmatprep.subr.bf16.mxu0 0
    %4438 = vmatpush2.bf16.msra.mxu0 0
    %4439 = vmatprep.subr.bf16.mxu0 0
    %4440 = vmatpush2.bf16.msra.mxu0 0
    %4441 = vmatprep.subr.bf16.mxu0 0
    %4442 = vmatpush2.bf16.msra.mxu0 0
    %4443 = vmatprep.subr.bf16.mxu0 0
    %4444 = vmatpush2.bf16.msra.mxu0 0
    %4445 = vmatprep.subr.bf16.mxu0 0
    %4446 = vmatpush2.bf16.msra.mxu0 0
    %4447 = vmatprep.mubr.bf16.mxu0 0
    %4448 = vmatmul.mubr.bf16.gmra.mxu0 %v4233
    %v4449 = vpop.f32.mrf.mxu0
    %v4450 = vadd.f32 %v4238, %v4449
    %v4451 = vpop.f32.mrf.mxu0
    %v4452 = vadd.f32 %v4242, %v4451
    %v4453 = vpop.f32.mrf.mxu0
    %v4454 = vadd.f32 %v4238, %v4453
    %v4455 = vpop.f32.mrf.mxu0
    %v4456 = vadd.f32 %v4242, %v4455
    %4457 = vdwg.mxu0
    %4458 = vmatprep.subr.bf16.mxu0 %v4382
    %4459 = vmatpush1.bf16.msra.mxu0 %v4381
    %4460 = vmatprep.subr.bf16.mxu0 %v4378
    %4461 = vmatpush1.bf16.msra.mxu0 %v4377
    %4462 = vmatprep.subr.bf16.mxu0 %v4374
    %4463 = vmatpush1.bf16.msra.mxu0 %v4373
    %4464 = vmatprep.subr.bf16.mxu0 %v4370
    %4465 = vmatpush1.bf16.msra.mxu0 %v4369
    %4466 = vmatprep.subr.bf16.mxu0 %v4366
    %4467 = vmatpush1.bf16.msra.mxu0 %v4365
    %4468 = vmatprep.subr.bf16.mxu0 %v4362
    %4469 = vmatpush1.bf16.msra.mxu0 %v4361
    %4470 = vmatprep.subr.bf16.mxu0 %v4358
    %4471 = vmatpush1.bf16.msra.mxu0 %v4357
    %4472 = vmatprep.subr.bf16.mxu0 %v4354
    %4473 = vmatpush1.bf16.msra.mxu0 %v4353
    %4474 = vmatprep.subr.bf16.mxu0 0
    %4475 = vmatpush2.bf16.msra.mxu0 0
    %4476 = vmatprep.subr.bf16.mxu0 0
    %4477 = vmatpush2.bf16.msra.mxu0 0
    %4478 = vmatprep.subr.bf16.mxu0 0
    %4479 = vmatpush2.bf16.msra.mxu0 0
    %4480 = vmatprep.subr.bf16.mxu0 0
    %4481 = vmatpush2.bf16.msra.mxu0 0
    %4482 = vmatprep.subr.bf16.mxu0 0
    %4483 = vmatpush2.bf16.msra.mxu0 0
    %4484 = vmatprep.subr.bf16.mxu0 0
    %4485 = vmatpush2.bf16.msra.mxu0 0
    %4486 = vmatprep.subr.bf16.mxu0 0
    %4487 = vmatpush2.bf16.msra.mxu0 0
    %4488 = vmatprep.subr.bf16.mxu0 0
    %4489 = vmatpush2.bf16.msra.mxu0 0
    %4490 = vmatprep.mubr.bf16.mxu0 0
    %4491 = vmatmul.mubr.bf16.gmra.mxu0 %v4233
    %v4492 = vpop.f32.mrf.mxu0
    %v4493 = vadd.f32 %v4246, %v4492
    %v4494 = vpop.f32.mrf.mxu0
    %v4495 = vadd.f32 %v4250, %v4494
    %v4496 = vpop.f32.mrf.mxu0
    %v4497 = vadd.f32 %v4246, %v4496
    %v4498 = vpop.f32.mrf.mxu0
    %v4499 = vadd.f32 %v4250, %v4498
    %4500 = vdwg.mxu0
    %v4501 = vmul.f32 %v4450, 0.5
    %v4502 = vmul.f32 %v4452, 0.5
    %v4503 = vmul.f32 %v4493, 0.5
    %v4504 = vmul.f32 %v4495, 0.5
    %v4505 = vmul.f32 %v4454, 0.5
    %v4506 = vmul.f32 %v4456, 0.5
    %v4507 = vmul.f32 %v4497, 0.5
    %v4508 = vmul.f32 %v4499, 0.5
    %v4509 = vmul.f32 %v4450, 0.70710677
    %v4510 = vmul.f32 %v4452, 0.70710677
    %v4511 = vmul.f32 %v4493, 0.70710677
    %v4512 = vmul.f32 %v4495, 0.70710677
    %v4513 = vmul.f32 %v4454, 0.70710677
    %v4514 = vmul.f32 %v4456, 0.70710677
    %v4515 = vmul.f32 %v4497, 0.70710677
    %v4516 = vmul.f32 %v4499, 0.70710677
    %v4517 = vand.u32 2147483647, %v4509
    %v4518 = vand.u32 2147483647, %v4510
    %v4519 = vand.u32 2147483647, %v4511
    %v4520 = vand.u32 2147483647, %v4512
    %v4521 = vand.u32 2147483647, %v4513
    %v4522 = vand.u32 2147483647, %v4514
    %v4523 = vand.u32 2147483647, %v4515
    %v4524 = vand.u32 2147483647, %v4516
    %v4525 = vmul.f32 %v4517, 0.3275911
    %v4526 = vmul.f32 %v4518, 0.3275911
    %v4527 = vmul.f32 %v4519, 0.3275911
    %v4528 = vmul.f32 %v4520, 0.3275911
    %v4529 = vmul.f32 %v4521, 0.3275911
    %v4530 = vmul.f32 %v4522, 0.3275911
    %v4531 = vmul.f32 %v4523, 0.3275911
    %v4532 = vmul.f32 %v4524, 0.3275911
    %v4533 = vadd.f32 %v4525, 1.0
    %v4534 = vadd.f32 %v4526, 1.0
    %v4535 = vadd.f32 %v4527, 1.0
    %v4536 = vadd.f32 %v4528, 1.0
    %v4537 = vadd.f32 %v4529, 1.0
    %v4538 = vadd.f32 %v4530, 1.0
    %v4539 = vadd.f32 %v4531, 1.0
    %v4540 = vadd.f32 %v4532, 1.0
    %v4541 = vrcp.pop %v4533
    %v4542 = vmul.f32 1.0, %v4541
    %v4543 = vrcp.pop %v4534
    %v4544 = vmul.f32 1.0, %v4543
    %v4545 = vrcp.pop %v4535
    %v4546 = vmul.f32 1.0, %v4545
    %v4547 = vrcp.pop %v4536
    %v4548 = vmul.f32 1.0, %v4547
    %v4549 = vrcp.pop %v4537
    %v4550 = vmul.f32 1.0, %v4549
    %v4551 = vrcp.pop %v4538
    %v4552 = vmul.f32 1.0, %v4551
    %v4553 = vrcp.pop %v4539
    %v4554 = vmul.f32 1.0, %v4553
    %v4555 = vrcp.pop %v4540
    %v4556 = vmul.f32 1.0, %v4555
    %v4557 = vmul.f32 %v4542, 1.0614054
    %v4558 = vmul.f32 %v4544, 1.0614054
    %v4559 = vmul.f32 %v4546, 1.0614054
    %v4560 = vmul.f32 %v4548, 1.0614054
    %v4561 = vmul.f32 %v4550, 1.0614054
    %v4562 = vmul.f32 %v4552, 1.0614054
    %v4563 = vmul.f32 %v4554, 1.0614054
    %v4564 = vmul.f32 %v4556, 1.0614054
    %v4565 = vadd.f32 %v4557, -1.4531521
    %v4566 = vadd.f32 %v4558, -1.4531521
    %v4567 = vadd.f32 %v4559, -1.4531521
    %v4568 = vadd.f32 %v4560, -1.4531521
    %v4569 = vadd.f32 %v4561, -1.4531521
    %v4570 = vadd.f32 %v4562, -1.4531521
    %v4571 = vadd.f32 %v4563, -1.4531521
    %v4572 = vadd.f32 %v4564, -1.4531521
    %v4573 = vmul.f32 %v4565, %v4542
    %v4574 = vmul.f32 %v4566, %v4544
    %v4575 = vmul.f32 %v4567, %v4546
    %v4576 = vmul.f32 %v4568, %v4548
    %v4577 = vmul.f32 %v4569, %v4550
    %v4578 = vmul.f32 %v4570, %v4552
    %v4579 = vmul.f32 %v4571, %v4554
    %v4580 = vmul.f32 %v4572, %v4556
    %v4581 = vadd.f32 %v4573, 1.4214138
    %v4582 = vadd.f32 %v4574, 1.4214138
    %v4583 = vadd.f32 %v4575, 1.4214138
    %v4584 = vadd.f32 %v4576, 1.4214138
    %v4585 = vadd.f32 %v4577, 1.4214138
    %v4586 = vadd.f32 %v4578, 1.4214138
    %v4587 = vadd.f32 %v4579, 1.4214138
    %v4588 = vadd.f32 %v4580, 1.4214138
    %v4589 = vmul.f32 %v4581, %v4542
    %v4590 = vmul.f32 %v4582, %v4544
    %v4591 = vmul.f32 %v4583, %v4546
    %v4592 = vmul.f32 %v4584, %v4548
    %v4593 = vmul.f32 %v4585, %v4550
    %v4594 = vmul.f32 %v4586, %v4552
    %v4595 = vmul.f32 %v4587, %v4554
    %v4596 = vmul.f32 %v4588, %v4556
    %v4597 = vadd.f32 %v4589, -0.28449672
    %v4598 = vadd.f32 %v4590, -0.28449672
    %v4599 = vadd.f32 %v4591, -0.28449672
    %v4600 = vadd.f32 %v4592, -0.28449672
    %v4601 = vadd.f32 %v4593, -0.28449672
    %v4602 = vadd.f32 %v4594, -0.28449672
    %v4603 = vadd.f32 %v4595, -0.28449672
    %v4604 = vadd.f32 %v4596, -0.28449672
    %v4605 = vmul.f32 %v4597, %v4542
    %v4606 = vmul.f32 %v4598, %v4544
    %v4607 = vmul.f32 %v4599, %v4546
    %v4608 = vmul.f32 %v4600, %v4548
    %v4609 = vmul.f32 %v4601, %v4550
    %v4610 = vmul.f32 %v4602, %v4552
    %v4611 = vmul.f32 %v4603, %v4554
    %v4612 = vmul.f32 %v4604, %v4556
    %v4613 = vadd.f32 %v4605, 0.2548296
    %v4614 = vadd.f32 %v4606, 0.2548296
    %v4615 = vadd.f32 %v4607, 0.2548296
    %v4616 = vadd.f32 %v4608, 0.2548296
    %v4617 = vadd.f32 %v4609, 0.2548296
    %v4618 = vadd.f32 %v4610, 0.2548296
    %v4619 = vadd.f32 %v4611, 0.2548296
    %v4620 = vadd.f32 %v4612, 0.2548296
    %v4621 = vmul.f32 %v4613, %v4542
    %v4622 = vmul.f32 %v4614, %v4544
    %v4623 = vmul.f32 %v4615, %v4546
    %v4624 = vmul.f32 %v4616, %v4548
    %v4625 = vmul.f32 %v4617, %v4550
    %v4626 = vmul.f32 %v4618, %v4552
    %v4627 = vmul.f32 %v4619, %v4554
    %v4628 = vmul.f32 %v4620, %v4556
    %v4629 = vsub.f32 0.0, %v4517
    %v4630 = vsub.f32 0.0, %v4518
    %v4631 = vsub.f32 0.0, %v4519
    %v4632 = vsub.f32 0.0, %v4520
    %v4633 = vsub.f32 0.0, %v4521
    %v4634 = vsub.f32 0.0, %v4522
    %v4635 = vsub.f32 0.0, %v4523
    %v4636 = vsub.f32 0.0, %v4524
    %v4637 = vmul.f32 %v4629, %v4517
    %v4638 = vmul.f32 %v4630, %v4518
    %v4639 = vmul.f32 %v4631, %v4519
    %v4640 = vmul.f32 %v4632, %v4520
    %v4641 = vmul.f32 %v4633, %v4521
    %v4642 = vmul.f32 %v4634, %v4522
    %v4643 = vmul.f32 %v4635, %v4523
    %v4644 = vmul.f32 %v4636, %v4524
    %v4645 = vmul.f32 %v4637, 1.442695
    %v4646 = vpow.pop %v4645
    %v4647 = vmul.f32 %v4638, 1.442695
    %v4648 = vpow.pop %v4647
    %v4649 = vmul.f32 %v4639, 1.442695
    %v4650 = vpow.pop %v4649
    %v4651 = vmul.f32 %v4640, 1.442695
    %v4652 = vpow.pop %v4651
    %v4653 = vmul.f32 %v4641, 1.442695
    %v4654 = vpow.pop %v4653
    %v4655 = vmul.f32 %v4642, 1.442695
    %v4656 = vpow.pop %v4655
    %v4657 = vmul.f32 %v4643, 1.442695
    %v4658 = vpow.pop %v4657
    %v4659 = vmul.f32 %v4644, 1.442695
    %v4660 = vpow.pop %v4659
    %v4661 = vmul.f32 %v4621, %v4646
    %v4662 = vmul.f32 %v4622, %v4648
    %v4663 = vmul.f32 %v4623, %v4650
    %v4664 = vmul.f32 %v4624, %v4652
    %v4665 = vmul.f32 %v4625, %v4654
    %v4666 = vmul.f32 %v4626, %v4656
    %v4667 = vmul.f32 %v4627, %v4658
    %v4668 = vmul.f32 %v4628, %v4660
    %v4669 = vsub.f32 1.0, %v4661
    %v4670 = vsub.f32 1.0, %v4662
    %v4671 = vsub.f32 1.0, %v4663
    %v4672 = vsub.f32 1.0, %v4664
    %v4673 = vsub.f32 1.0, %v4665
    %v4674 = vsub.f32 1.0, %v4666
    %v4675 = vsub.f32 1.0, %v4667
    %v4676 = vsub.f32 1.0, %v4668
    %vm4677 = vcmp.ge.f32.partialorder %v4509, 0.0
    %vm4678 = vcmp.ge.f32.partialorder %v4510, 0.0
    %vm4679 = vcmp.ge.f32.partialorder %v4511, 0.0
    %vm4680 = vcmp.ge.f32.partialorder %v4512, 0.0
    %vm4681 = vcmp.ge.f32.partialorder %v4513, 0.0
    %vm4682 = vcmp.ge.f32.partialorder %v4514, 0.0
    %vm4683 = vcmp.ge.f32.partialorder %v4515, 0.0
    %vm4684 = vcmp.ge.f32.partialorder %v4516, 0.0
    %v4685 = vsub.f32 0.0, %v4669
    %v4686 = vsub.f32 0.0, %v4670
    %v4687 = vsub.f32 0.0, %v4671
    %v4688 = vsub.f32 0.0, %v4672
    %v4689 = vsub.f32 0.0, %v4673
    %v4690 = vsub.f32 0.0, %v4674
    %v4691 = vsub.f32 0.0, %v4675
    %v4692 = vsub.f32 0.0, %v4676
    %v4693 = vsel %vm4677, %v4669, %v4685
    %v4694 = vsel %vm4678, %v4670, %v4686
    %v4695 = vsel %vm4679, %v4671, %v4687
    %v4696 = vsel %vm4680, %v4672, %v4688
    %v4697 = vsel %vm4681, %v4673, %v4689
    %v4698 = vsel %vm4682, %v4674, %v4690
    %v4699 = vsel %vm4683, %v4675, %v4691
    %v4700 = vsel %vm4684, %v4676, %v4692
    %v4701 = vadd.f32 %v4693, 1.0
    %v4702 = vadd.f32 %v4694, 1.0
    %v4703 = vadd.f32 %v4695, 1.0
    %v4704 = vadd.f32 %v4696, 1.0
    %v4705 = vadd.f32 %v4697, 1.0
    %v4706 = vadd.f32 %v4698, 1.0
    %v4707 = vadd.f32 %v4699, 1.0
    %v4708 = vadd.f32 %v4700, 1.0
    %v4709 = vmul.f32 %v4501, %v4701
    %v4710 = vmul.f32 %v4502, %v4702
    %v4711 = vmul.f32 %v4503, %v4703
    %v4712 = vmul.f32 %v4504, %v4704
    %v4713 = vmul.f32 %v4505, %v4705
    %v4714 = vmul.f32 %v4506, %v4706
    %v4715 = vmul.f32 %v4507, %v4707
    %v4716 = vmul.f32 %v4508, %v4708
    %v4717 = vpack.c.bf16 %v4713, %v4709
    %v4718 = vpack.c.bf16 %v4714, %v4710
    %v4719 = vpack.c.bf16 %v4715, %v4711
    %v4720 = vpack.c.bf16 %v4716, %v4712
    %v4722 = vlaneseq
    %v4723 = vshrl.u32 %v4722, 7
    %v4724 = vsub.s32 0, %v4723
    %v4725 = vrot.slane %v2768, %v4724
    %v4791 = vunpack.c.l.b16 %v2704
    %v4792 = vunpack.c.l.b16 %v2705
    %v4793 = vunpack.c.l.b16 %v2706
    %v4794 = vunpack.c.l.b16 %v2707
    %v4795 = vunpack.c.l.b16 %v2708
    %v4796 = vunpack.c.l.b16 %v2709
    %v4797 = vunpack.c.l.b16 %v2710
    %v4798 = vunpack.c.l.b16 %v2711
    %v4799 = vunpack.c.l.b16 %v2712
    %v4800 = vunpack.c.l.b16 %v2713
    %v4801 = vunpack.c.l.b16 %v2714
    %v4802 = vunpack.c.l.b16 %v2715
    %v4803 = vunpack.c.l.b16 %v2716
    %v4804 = vunpack.c.l.b16 %v2717
    %v4805 = vunpack.c.l.b16 %v2718
    %v4806 = vunpack.c.l.b16 %v2719
    %v4807 = vunpack.c.l.b16 %v2720
    %v4808 = vunpack.c.l.b16 %v2721
    %v4809 = vunpack.c.l.b16 %v2722
    %v4810 = vunpack.c.l.b16 %v2723
    %v4811 = vunpack.c.l.b16 %v2724
    %v4812 = vunpack.c.l.b16 %v2725
    %v4813 = vunpack.c.l.b16 %v2726
    %v4814 = vunpack.c.l.b16 %v2727
    %v4815 = vunpack.c.l.b16 %v2728
    %v4816 = vunpack.c.l.b16 %v2729
    %v4817 = vunpack.c.l.b16 %v2730
    %v4818 = vunpack.c.l.b16 %v2731
    %v4819 = vunpack.c.l.b16 %v2732
    %v4820 = vunpack.c.l.b16 %v2733
    %v4821 = vunpack.c.l.b16 %v2734
    %v4822 = vunpack.c.l.b16 %v2735
    %v4823 = vunpack.c.l.b16 %v2736
    %v4824 = vunpack.c.l.b16 %v2737
    %v4825 = vunpack.c.l.b16 %v2738
    %v4826 = vunpack.c.l.b16 %v2739
    %v4827 = vunpack.c.l.b16 %v2740
    %v4828 = vunpack.c.l.b16 %v2741
    %v4829 = vunpack.c.l.b16 %v2742
    %v4830 = vunpack.c.l.b16 %v2743
    %v4831 = vunpack.c.l.b16 %v2744
    %v4832 = vunpack.c.l.b16 %v2745
    %v4833 = vunpack.c.l.b16 %v2746
    %v4834 = vunpack.c.l.b16 %v2747
    %v4835 = vunpack.c.l.b16 %v2748
    %v4836 = vunpack.c.l.b16 %v2749
    %v4837 = vunpack.c.l.b16 %v2750
    %v4838 = vunpack.c.l.b16 %v2751
    %v4839 = vunpack.c.l.b16 %v2752
    %v4840 = vunpack.c.l.b16 %v2753
    %v4841 = vunpack.c.l.b16 %v2754
    %v4842 = vunpack.c.l.b16 %v2755
    %v4843 = vunpack.c.l.b16 %v2756
    %v4844 = vunpack.c.l.b16 %v2757
    %v4845 = vunpack.c.l.b16 %v2758
    %v4846 = vunpack.c.l.b16 %v2759
    %v4847 = vunpack.c.l.b16 %v2760
    %v4848 = vunpack.c.l.b16 %v2761
    %v4849 = vunpack.c.l.b16 %v2762
    %v4850 = vunpack.c.l.b16 %v2763
    %v4851 = vunpack.c.l.b16 %v2764
    %v4852 = vunpack.c.l.b16 %v2765
    %v4853 = vunpack.c.l.b16 %v2766
    %v4854 = vunpack.c.l.b16 %v2767
    %v4855 = vpack.c.b16 %v4792, %v4791
    %v4856 = vpack.c.b16 %v4794, %v4793
    %v4857 = vpack.c.b16 %v4796, %v4795
    %v4858 = vpack.c.b16 %v4798, %v4797
    %v4859 = vpack.c.b16 %v4800, %v4799
    %v4860 = vpack.c.b16 %v4802, %v4801
    %v4861 = vpack.c.b16 %v4804, %v4803
    %v4862 = vpack.c.b16 %v4806, %v4805
    %v4863 = vpack.c.b16 %v4808, %v4807
    %v4864 = vpack.c.b16 %v4810, %v4809
    %v4865 = vpack.c.b16 %v4812, %v4811
    %v4866 = vpack.c.b16 %v4814, %v4813
    %v4867 = vpack.c.b16 %v4816, %v4815
    %v4868 = vpack.c.b16 %v4818, %v4817
    %v4869 = vpack.c.b16 %v4820, %v4819
    %v4870 = vpack.c.b16 %v4822, %v4821
    %v4871 = vpack.c.b16 %v4824, %v4823
    %v4872 = vpack.c.b16 %v4826, %v4825
    %v4873 = vpack.c.b16 %v4828, %v4827
    %v4874 = vpack.c.b16 %v4830, %v4829
    %v4875 = vpack.c.b16 %v4832, %v4831
    %v4876 = vpack.c.b16 %v4834, %v4833
    %v4877 = vpack.c.b16 %v4836, %v4835
    %v4878 = vpack.c.b16 %v4838, %v4837
    %v4879 = vpack.c.b16 %v4840, %v4839
    %v4880 = vpack.c.b16 %v4842, %v4841
    %v4881 = vpack.c.b16 %v4844, %v4843
    %v4882 = vpack.c.b16 %v4846, %v4845
    %v4883 = vpack.c.b16 %v4848, %v4847
    %v4884 = vpack.c.b16 %v4850, %v4849
    %v4885 = vpack.c.b16 %v4852, %v4851
    %v4886 = vpack.c.b16 %v4854, %v4853
    %4919 = vmatprep.subr.bf16.mxu0 0
    %4920 = vmatpush1.bf16.msra.mxu0 %v4862
    %4921 = vmatprep.subr.bf16.mxu0 0
    %4922 = vmatpush1.bf16.msra.mxu0 %v4861
    %4923 = vmatprep.subr.bf16.mxu0 0
    %4924 = vmatpush1.bf16.msra.mxu0 %v4860
    %4925 = vmatprep.subr.bf16.mxu0 0
    %4926 = vmatpush1.bf16.msra.mxu0 %v4859
    %4927 = vmatprep.subr.bf16.mxu0 0
    %4928 = vmatpush1.bf16.msra.mxu0 %v4858
    %4929 = vmatprep.subr.bf16.mxu0 0
    %4930 = vmatpush1.bf16.msra.mxu0 %v4857
    %4931 = vmatprep.subr.bf16.mxu0 0
    %4932 = vmatpush1.bf16.msra.mxu0 %v4856
    %4933 = vmatprep.subr.bf16.mxu0 0
    %4934 = vmatpush1.bf16.msra.mxu0 %v4855
    %4935 = vmatprep.subr.bf16.mxu0 0
    %4936 = vmatpush2.bf16.msra.mxu0 %v4870
    %4937 = vmatprep.subr.bf16.mxu0 0
    %4938 = vmatpush2.bf16.msra.mxu0 %v4869
    %4939 = vmatprep.subr.bf16.mxu0 0
    %4940 = vmatpush2.bf16.msra.mxu0 %v4868
    %4941 = vmatprep.subr.bf16.mxu0 0
    %4942 = vmatpush2.bf16.msra.mxu0 %v4867
    %4943 = vmatprep.subr.bf16.mxu0 0
    %4944 = vmatpush2.bf16.msra.mxu0 %v4866
    %4945 = vmatprep.subr.bf16.mxu0 0
    %4946 = vmatpush2.bf16.msra.mxu0 %v4865
    %4947 = vmatprep.subr.bf16.mxu0 0
    %4948 = vmatpush2.bf16.msra.mxu0 %v4864
    %4949 = vmatprep.subr.bf16.mxu0 0
    %4950 = vmatpush2.bf16.msra.mxu0 %v4863
    %4951 = vmatprep.mubr.bf16.mxu0 %v4718
    %4952 = vmatmul.mubr.bf16.gmra.mxu0 %v4717
    %v4953 = vpop.f32.mrf.mxu0
    %v4954 = vadd.f32 %v4725, %v4953
    %v4955 = vpop.f32.mrf.mxu0
    %v4956 = vpop.f32.mrf.mxu0
    %v4957 = vadd.f32 %v4725, %v4956
    %v4958 = vpop.f32.mrf.mxu0
    %4959 = vdwg.mxu0
    %4960 = vmatprep.subr.bf16.mxu0 0
    %4961 = vmatpush1.bf16.msra.mxu0 %v4878
    %4962 = vmatprep.subr.bf16.mxu0 0
    %4963 = vmatpush1.bf16.msra.mxu0 %v4877
    %4964 = vmatprep.subr.bf16.mxu0 0
    %4965 = vmatpush1.bf16.msra.mxu0 %v4876
    %4966 = vmatprep.subr.bf16.mxu0 0
    %4967 = vmatpush1.bf16.msra.mxu0 %v4875
    %4968 = vmatprep.subr.bf16.mxu0 0
    %4969 = vmatpush1.bf16.msra.mxu0 %v4874
    %4970 = vmatprep.subr.bf16.mxu0 0
    %4971 = vmatpush1.bf16.msra.mxu0 %v4873
    %4972 = vmatprep.subr.bf16.mxu0 0
    %4973 = vmatpush1.bf16.msra.mxu0 %v4872
    %4974 = vmatprep.subr.bf16.mxu0 0
    %4975 = vmatpush1.bf16.msra.mxu0 %v4871
    %4976 = vmatprep.subr.bf16.mxu0 0
    %4977 = vmatpush2.bf16.msra.mxu0 %v4886
    %4978 = vmatprep.subr.bf16.mxu0 0
    %4979 = vmatpush2.bf16.msra.mxu0 %v4885
    %4980 = vmatprep.subr.bf16.mxu0 0
    %4981 = vmatpush2.bf16.msra.mxu0 %v4884
    %4982 = vmatprep.subr.bf16.mxu0 0
    %4983 = vmatpush2.bf16.msra.mxu0 %v4883
    %4984 = vmatprep.subr.bf16.mxu0 0
    %4985 = vmatpush2.bf16.msra.mxu0 %v4882
    %4986 = vmatprep.subr.bf16.mxu0 0
    %4987 = vmatpush2.bf16.msra.mxu0 %v4881
    %4988 = vmatprep.subr.bf16.mxu0 0
    %4989 = vmatpush2.bf16.msra.mxu0 %v4880
    %4990 = vmatprep.subr.bf16.mxu0 0
    %4991 = vmatpush2.bf16.msra.mxu0 %v4879
    %4992 = vmatprep.mubr.bf16.mxu0 %v4720
    %4993 = vmatmul.mubr.bf16.gmra.mxu0 %v4719
    %v4994 = vpop.f32.mrf.mxu0
    %v4995 = vadd.f32 %v4954, %v4994
    %v4996 = vpop.f32.mrf.mxu0
    %v4997 = vpop.f32.mrf.mxu0
    %v4998 = vadd.f32 %v4957, %v4997
    %v4999 = vpop.f32.mrf.mxu0
    %5000 = vdwg.mxu0
    %v5001 = vadd.f32 %v4193, %v4995
    %v5002 = vadd.f32 %v4194, %v4998
    %v5003 = vld [vmem:[%s23] sm:$0x1]
    %v5004 = vld [vmem:[%s24] sm:$0x1]
    %5005 = vadd.xlane.f32.xlu0 %v5001
    %v5006 = vpop.xlane.xlu0 %5005
    %5007 = vadd.xlane.f32.xlu0 %v5002
    %v5008 = vpop.xlane.xlu0 %5007
    %v5009 = vmul.f32 %v5006, %v384
    %v5010 = vmul.f32 %v5008, %v384
    %v5011 = vsub.f32 %v5001, %v5009
    %v5012 = vsub.f32 %v5002, %v5010
    %v5013 = vmul.f32 %v5011, %v5011
    %v5014 = vmul.f32 %v5012, %v5012
    %5015 = vadd.xlane.f32.xlu0 %v5013
    %v5016 = vpop.xlane.xlu0 %5015
    %5017 = vadd.xlane.f32.xlu0 %v5014
    %v5018 = vpop.xlane.xlu0 %5017
    %v5019 = vmul.f32 %v5016, %v384
    %v5020 = vmul.f32 %v5018, %v384
    %v5021 = vadd.f32 %v5019, 1e-05
    %v5022 = vadd.f32 %v5020, 1e-05
    %v5023 = vrsqrt.pop %v5021
    %v5024 = vrsqrt.pop %v5022
    %v5025 = vmul.f32 %v5011, %v5023
    %v5026 = vmul.f32 %v5012, %v5024
    %v5028 = vlaneseq
    %v5029 = vshrl.u32 %v5028, 7
    %v5030 = vsub.s32 0, %v5029
    %v5031 = vrot.slane %v5003, %v5030
    %v5033 = vmul.f32 %v5025, %v5031
    %v5034 = vmul.f32 %v5026, %v5031
    %v5036 = vlaneseq
    %v5037 = vshrl.u32 %v5036, 7
    %v5038 = vsub.s32 0, %v5037
    %v5039 = vrot.slane %v5004, %v5038
    %v5041 = vadd.f32 %v5033, %v5039
    %v5042 = vadd.f32 %v5034, %v5039
    %5043 = vst [vmem:[#allocation20] sm:$0xff] %v5041
    %5044 = vst [vmem:[#allocation20 + $0x8] sm:$0xff] %v5042
    // Predicated region
    $region146: #{_decoder_fused.1} parent=1 // pred_check
      _
    $region147: #{_decoder_fused.1} parent=1 // pred_check_branch
      %5046 = sbr.rel (0) target = $region149
    $region148: #{_decoder_fused.1} parent=1 // pred_region
      %s5048 = ssub.s32 256, 256
      %5049 = vsyncadd [#allocation4], %s5048
      %s5050 = sshll.u32 [#allocation20], 4
      %s5051 = int_to_ptr.vmem [resolvable:$true] %s5050
      %5056 = dma.vmem_to_hbm [thread:$0]  %s5051, 256, %s25, [#allocation4], 128, 128, 8
    $region149: #{_decoder_fused.1} parent=1 // pred_fallthru
      _
    // Predicated region
    $region150: #{_decoder_fused.1} parent=1 // pred_check
      _
    $region151: #{_decoder_fused.1} parent=1 // pred_check_branch
      %5058 = sbr.rel (0) target = $region153
    $region152: #{_decoder_fused.1} parent=1 // pred_region
      %5059 = dma.done [#allocation4], 256
    $region153: #{_decoder_fused.1} parent=1 // pred_fallthru
      _
    %5060 = vsyncpa [#allocation3], 1
    %5061 = vsyncpa [#allocation6], 1
    %5062 = vsyncpa [#allocation9], 1
    %5063 = vsyncpa [#allocation12], 1
    %5064 = vsyncpa [#allocation15], 1
    %5065 = vsyncpa [#allocation18], 1
    %5066 = vsyncpa [#allocation4], 1

</llo_original>
